<compile_context>
chip_gen: v7x
topology: tpu7x:2x2x1
jax: 0.10.0
libtpu: 0.0.40
codegen_flags: <defaults>
</compile_context>

<pallas_src>
import jax
import jax.numpy as jnp
from jax import lax
from jax.experimental import pallas as pl
from jax.experimental.pallas import tpu as pltpu

# Scaled-down config mirroring the PyTorch module (embedding_size=hidden_size,
# bidirectional=1, 5 output classes).
VOCAB = 50
EMBED = 128      # embedding_size
HIDDEN = 128     # hidden_size
NUM_CLASSES = 5
CLS_PAD = 128    # lane-dense padded classifier width


def _round_up(x, m):
    return ((x + m - 1) // m) * m


def _pick_tile_n(n, t):
    """Batch tile: 16-row minimum (bf16 sublane packing), 128 default,
    256 on big batches if the bf16 gin scratch stays v7x-VMEM-safe."""
    if n < 128:
        return _round_up(max(n, 1), 16)
    tile = 128
    if n >= 256:
        gin_bytes = 2 * t * 256 * 4 * HIDDEN * 2   # two bf16 (T, 256, 4H) scratches
        if gin_bytes <= 12 * (1 << 20):            # leave headroom under 32 MiB scoped
            tile = 256
    return tile


def rnn_kernel(len_ref, emb_ref,
               w_ih_ref, b_in_ref,
               whh_f_ref, whh_b_ref,
               wc_f_ref, wc_b_ref, bc_ref,
               out_ref, gin_f_ref, gin_b_ref):
    T, Nt, E = emb_ref.shape
    H = whh_f_ref.shape[0]
    G = 4 * H

    # ---- fused, hoisted input projection: one bf16 MXU matmul, f32 accumulate,
    #      results split per direction into bf16 VMEM scratch ----
    x_all = emb_ref[...].reshape(T * Nt, E)                    # bf16
    proj = (jnp.dot(x_all, w_ih_ref[...],
                    preferred_element_type=jnp.float32)
            + b_in_ref[...]).astype(jnp.bfloat16)              # (T*Nt, 8H)
    gin_f_ref[...] = proj[:, :G].reshape(T, Nt, G)
    gin_b_ref[...] = proj[:, G:].reshape(T, Nt, G)

    # ---- loop-invariant hoists ----
    lengths = len_ref[...]                                     # (Nt, 1) int32
    last_t = lengths - 1                                       # forward fetch index
    zeros = jnp.zeros((Nt, H), jnp.float32)

    def cell(gates, c):
        # PyTorch gate order: i, f, g, o   (f32 elementwise/EUP path)
        i = jax.nn.sigmoid(gates[:, 0 * H:1 * H])
        f = jax.nn.sigmoid(gates[:, 1 * H:2 * H])
        g = jnp.tanh(gates[:, 2 * H:3 * H])
        o = jax.nn.sigmoid(gates[:, 3 * H:4 * H])
        c_new = f * c + i * g
        return o * jnp.tanh(c_new), c_new

    def body(t, carry):
        h_f, c_f, h_b, c_b, fw_last = carry

        # ---- forward direction: only the bf16 recurrent matmul on the serial path ----
        g_f = gin_f_ref[t].astype(jnp.float32) + jnp.dot(
            h_f.astype(jnp.bfloat16), whh_f_ref[...],
            preferred_element_type=jnp.float32)
        h_f, c_f = cell(g_f, c_f)
        fw_last = jnp.where(last_t == t, h_f, fw_last)

        # ---- backward direction (packed semantics: update only valid timesteps) ----
        t_b = T - 1 - t
        g_b = gin_b_ref[t_b].astype(jnp.float32) + jnp.dot(
            h_b.astype(jnp.bfloat16), whh_b_ref[...],
            preferred_element_type=jnp.float32)
        h_b_new, c_b_new = cell(g_b, c_b)
        valid = t_b < lengths
        h_b = jnp.where(valid, h_b_new, h_b)
        c_b = jnp.where(valid, c_b_new, c_b)

        return h_f, c_f, h_b, c_b, fw_last

    unroll = True if T <= 16 else 2
    _, _, h_b, _, fw_last = lax.fori_loop(
        0, T, body, (zeros, zeros, zeros, zeros, zeros), unroll=unroll)

    # bi_fetch + classifier: two bf16 dots from existing buffers (no (Nt,2H) concat),
    # lane-dense padded (Nt, 128) f32 output.
    out_ref[...] = (jnp.dot(fw_last.astype(jnp.bfloat16), wc_f_ref[...],
                            preferred_element_type=jnp.float32)
                    + jnp.dot(h_b.astype(jnp.bfloat16), wc_b_ref[...],
                              preferred_element_type=jnp.float32)
                    + bc_ref[...])


def rnn_forward(tokens, lengths, params):
    """tokens: (N, T) int32, lengths: (N,) int32 -> logits (N, 5)."""
    N, T = tokens.shape

    tile_n = _pick_tile_n(N, T)
    n_pad = _round_up(N, tile_n)

    tok_p = jnp.zeros((n_pad, T), jnp.int32).at[:N].set(tokens)
    len_p = jnp.ones((n_pad,), jnp.int32).at[:N].set(lengths.astype(jnp.int32))

    # Embedding gather directly into time-major bf16 (no separate transpose pass).
    emb_tbl = params["embedding"].astype(jnp.bfloat16)
    emb = jnp.take(emb_tbl, tok_p.T, axis=0)                   # (T, n_pad, E) bf16

    # Fused input-projection weights [W_ih_f | W_ih_b] and biases, bf16 weights.
    w_ih = jnp.concatenate([params["w_ih_f"], params["w_ih_b"]],
                           axis=1).astype(jnp.bfloat16)        # (E, 8H)
    b_in = jnp.concatenate([params["b_f"], params["b_b"]], axis=1)  # (1, 8H) f32
    whh_f = params["w_hh_f"].astype(jnp.bfloat16)
    whh_b = params["w_hh_b"].astype(jnp.bfloat16)

    # Lane-dense classifier: pad to 128 output columns, split fw/bw halves, bf16.
    wc_pad = jnp.zeros((2 * HIDDEN, CLS_PAD), jnp.float32)
    wc_pad = wc_pad.at[:, :NUM_CLASSES].set(params["w_cls"])
    bc_pad = jnp.zeros((1, CLS_PAD), jnp.float32)
    bc_pad = bc_pad.at[:, :NUM_CLASSES].set(params["b_cls"])
    wc_f = wc_pad[:HIDDEN].astype(jnp.bfloat16)
    wc_b = wc_pad[HIDDEN:].astype(jnp.bfloat16)

    grid = (n_pad // tile_n,)

    def full(shape):
        return pl.BlockSpec(shape, lambda b: (0,) * len(shape))

    out = pl.pallas_call(
        rnn_kernel,
        out_shape=jax.ShapeDtypeStruct((n_pad, CLS_PAD), jnp.float32),
        grid=grid,
        in_specs=[
            pl.BlockSpec((tile_n, 1), lambda b: (b, 0)),            # lengths
            pl.BlockSpec((T, tile_n, EMBED), lambda b: (0, b, 0)),  # embedded input (bf16)
            full((EMBED, 8 * HIDDEN)),   # fused [W_ih_f | W_ih_b]  (bf16)
            full((1, 8 * HIDDEN)),       # fused [b_f | b_b]        (f32)
            full((HIDDEN, 4 * HIDDEN)),  # w_hh_f (bf16)
            full((HIDDEN, 4 * HIDDEN)),  # w_hh_b (bf16)
            full((HIDDEN, CLS_PAD)),     # w_cls forward half (bf16)
            full((HIDDEN, CLS_PAD)),     # w_cls backward half (bf16)
            full((1, CLS_PAD)),          # b_cls padded (f32)
        ],
        out_specs=pl.BlockSpec((tile_n, CLS_PAD), lambda b: (b, 0)),
        scratch_shapes=[
            pltpu.VMEM((T, tile_n, 4 * HIDDEN), jnp.bfloat16),  # hoisted fwd gates
            pltpu.VMEM((T, tile_n, 4 * HIDDEN), jnp.bfloat16),  # hoisted bwd gates
        ],
        compiler_params=pltpu.CompilerParams(
            dimension_semantics=("parallel",),
            vmem_limit_bytes=32 * 1024 * 1024),
    )(len_p.reshape(n_pad, 1), emb,
      w_ih, b_in, whh_f, whh_b, wc_f, wc_b, bc_pad)

    return out[:N, :NUM_CLASSES]


def init_params(key):
    ks = jax.random.split(key, 11)
    s = 1.0 / float(jnp.sqrt(jnp.float32(HIDDEN)))

    def u(k, shape):
        return jax.random.uniform(k, shape, jnp.float32, -s, s)

    return dict(
        embedding=jax.random.normal(ks[0], (VOCAB, EMBED), jnp.float32),
        # PyTorch weight_ih_l0 is (4H, E); we store its transpose (E, 4H), etc.
        w_ih_f=u(ks[1], (EMBED, 4 * HIDDEN)),
        w_hh_f=u(ks[2], (HIDDEN, 4 * HIDDEN)),
        b_f=u(ks[3], (1, 4 * HIDDEN)) + u(ks[4], (1, 4 * HIDDEN)),
        w_ih_b=u(ks[5], (EMBED, 4 * HIDDEN)),
        w_hh_b=u(ks[6], (HIDDEN, 4 * HIDDEN)),
        b_b=u(ks[7], (1, 4 * HIDDEN)) + u(ks[8], (1, 4 * HIDDEN)),
        w_cls=u(ks[9], (2 * HIDDEN, NUM_CLASSES)),
        b_cls=u(ks[10], (1, NUM_CLASSES)),
    )


if __name__ == "__main__":
    key = jax.random.PRNGKey(0)
    pkey, tkey = jax.random.split(key)
    params = init_params(pkey)

    N, T = 4, 8
    tokens = jax.random.randint(tkey, (N, T), 0, VOCAB, dtype=jnp.int32)
    lengths = jnp.array([8, 5, 3, 1], dtype=jnp.int32)   # valid lengths per seq

    logits = rnn_forward(tokens, lengths, params)
    jax.block_until_ready(logits)
    assert logits.shape == (N, NUM_CLASSES)
    print("KERNEL_OK")
</pallas_src>

<mosaic_0001>
module attributes {stable_mosaic.version = 11 : i64} {
  func.func @rnn_kernel(%arg0: i32, %arg1: memref<16x1xi32, #tpu.memory_space<vmem>>, %arg2: memref<8x16x128xbf16, #tpu.memory_space<vmem>>, %arg3: memref<128x1024xbf16, #tpu.memory_space<vmem>>, %arg4: memref<1x1024xf32, #tpu.memory_space<vmem>>, %arg5: memref<128x512xbf16, #tpu.memory_space<vmem>>, %arg6: memref<128x512xbf16, #tpu.memory_space<vmem>>, %arg7: memref<128x128xbf16, #tpu.memory_space<vmem>>, %arg8: memref<128x128xbf16, #tpu.memory_space<vmem>>, %arg9: memref<1x128xf32, #tpu.memory_space<vmem>>, %arg10: memref<16x128xf32, #tpu.memory_space<vmem>>, %arg11: memref<8x16x512xbf16, #tpu.memory_space<vmem>>, %arg12: memref<8x16x512xbf16, #tpu.memory_space<vmem>>) attributes {dimension_semantics = [#tpu.dimension_semantics<parallel>], iteration_bounds = array<i64: 1>, scalar_prefetch = 0 : i64, scratch_operands = 2 : i64, tpu.core_type = #tpu.core_type<tc>, window_params = [{transform_indices = @transform_0, window_bounds = array<i64: 16, 1>}, {transform_indices = @transform_1, window_bounds = array<i64: 8, 16, 128>}, {pipeline_mode = #tpu.pipeline_mode<synchronous>, transform_indices = @transform_2, window_bounds = array<i64: 128, 1024>}, {pipeline_mode = #tpu.pipeline_mode<synchronous>, transform_indices = @transform_3, window_bounds = array<i64: 1, 1024>}, {pipeline_mode = #tpu.pipeline_mode<synchronous>, transform_indices = @transform_4, window_bounds = array<i64: 128, 512>}, {pipeline_mode = #tpu.pipeline_mode<synchronous>, transform_indices = @transform_5, window_bounds = array<i64: 128, 512>}, {pipeline_mode = #tpu.pipeline_mode<synchronous>, transform_indices = @transform_6, window_bounds = array<i64: 128, 128>}, {pipeline_mode = #tpu.pipeline_mode<synchronous>, transform_indices = @transform_7, window_bounds = array<i64: 128, 128>}, {pipeline_mode = #tpu.pipeline_mode<synchronous>, transform_indices = @transform_8, window_bounds = array<i64: 1, 128>}, {transform_indices = @transform_9, window_bounds = array<i64: 16, 128>}]} {
    %c0 = arith.constant 0 : index
    %c0_0 = arith.constant 0 : index
    %c0_1 = arith.constant 0 : index
    %0 = vector.load %arg2[%c0, %c0_0, %c0_1] : memref<8x16x128xbf16, #tpu.memory_space<vmem>>, vector<8x16x128xbf16>
    %1 = vector.shape_cast %0 : vector<8x16x128xbf16> to vector<128x128xbf16>
    %c0_2 = arith.constant 0 : index
    %c0_3 = arith.constant 0 : index
    %2 = vector.load %arg3[%c0_2, %c0_3] : memref<128x1024xbf16, #tpu.memory_space<vmem>>, vector<128x1024xbf16>
    %cst = arith.constant dense<0.000000e+00> : vector<128x1024xf32>
    %3 = tpu.matmul %1, %2, %cst {dimension_numbers = #tpu.dot_dimension_numbers<[1], [0], [0], [1], [0, 0, 1, 1], [], []>} : vector<128x128xbf16>, vector<128x1024xbf16>, vector<128x1024xf32> -> vector<128x1024xf32>
    %c0_4 = arith.constant 0 : index
    %c0_5 = arith.constant 0 : index
    %4 = vector.load %arg4[%c0_4, %c0_5] : memref<1x1024xf32, #tpu.memory_space<vmem>>, vector<1x1024xf32>
    %5 = vector.broadcast %4 : vector<1x1024xf32> to vector<128x1024xf32>
    %6 = arith.addf %3, %5 : vector<128x1024xf32>
    %7 = arith.truncf %6 : vector<128x1024xf32> to vector<128x1024xbf16>
    %8 = vector.extract_strided_slice %7 {offsets = [0, 0], sizes = [128, 512], strides = [1, 1]} : vector<128x1024xbf16> to vector<128x512xbf16>
    %9 = vector.shape_cast %8 : vector<128x512xbf16> to vector<8x16x512xbf16>
    %c0_6 = arith.constant 0 : index
    %c0_7 = arith.constant 0 : index
    %c0_8 = arith.constant 0 : index
    %10 = vector.load %arg11[%c0_6, %c0_7, %c0_8] : memref<8x16x512xbf16, #tpu.memory_space<vmem>>, vector<8x16x512xbf16>
    tpu.vector_store %arg11[%c0_6, %c0_7, %c0_8], %9 {strides = array<i32>} : memref<8x16x512xbf16, #tpu.memory_space<vmem>>, vector<8x16x512xbf16>,
    %11 = vector.extract_strided_slice %7 {offsets = [0, 512], sizes = [128, 512], strides = [1, 1]} : vector<128x1024xbf16> to vector<128x512xbf16>
    %12 = vector.shape_cast %11 : vector<128x512xbf16> to vector<8x16x512xbf16>
    %c0_9 = arith.constant 0 : index
    %c0_10 = arith.constant 0 : index
    %c0_11 = arith.constant 0 : index
    %13 = vector.load %arg12[%c0_9, %c0_10, %c0_11] : memref<8x16x512xbf16, #tpu.memory_space<vmem>>, vector<8x16x512xbf16>
    tpu.vector_store %arg12[%c0_9, %c0_10, %c0_11], %12 {strides = array<i32>} : memref<8x16x512xbf16, #tpu.memory_space<vmem>>, vector<8x16x512xbf16>,
    %c0_12 = arith.constant 0 : index
    %c0_13 = arith.constant 0 : index
    %14 = vector.load %arg1[%c0_12, %c0_13] : memref<16x1xi32, #tpu.memory_space<vmem>>, vector<16x1xi32>
    %c1_i32 = arith.constant 1 : i32
    %15 = vector.broadcast %c1_i32 : i32 to vector<16x1xi32>
    %16 = arith.subi %14, %15 : vector<16x1xi32>
    %cst_14 = arith.constant 0.000000e+00 : f32
    %17 = vector.broadcast %cst_14 : f32 to vector<16x128xf32>
    %c0_i32 = arith.constant 0 : i32
    %18 = arith.index_cast %c0_i32 : i32 to index
    %c0_15 = arith.constant 0 : index
    %c0_16 = arith.constant 0 : index
    %19 = vector.load %arg11[%18, %c0_15, %c0_16] : memref<8x16x512xbf16, #tpu.memory_space<vmem>>, vector<1x16x512xbf16>
    %20 = vector.shape_cast %19 : vector<1x16x512xbf16> to vector<16x512xbf16>
    %21 = arith.extf %20 : vector<16x512xbf16> to vector<16x512xf32>
    %22 = arith.truncf %17 : vector<16x128xf32> to vector<16x128xbf16>
    %c0_17 = arith.constant 0 : index
    %c0_18 = arith.constant 0 : index
    %23 = vector.load %arg5[%c0_17, %c0_18] : memref<128x512xbf16, #tpu.memory_space<vmem>>, vector<128x512xbf16>
    %cst_19 = arith.constant dense<0.000000e+00> : vector<16x512xf32>
    %24 = tpu.matmul %22, %23, %cst_19 {dimension_numbers = #tpu.dot_dimension_numbers<[1], [0], [0], [1], [0, 0, 1, 1], [], []>} : vector<16x128xbf16>, vector<128x512xbf16>, vector<16x512xf32> -> vector<16x512xf32>
    %25 = arith.addf %21, %24 : vector<16x512xf32>
    %26 = vector.extract_strided_slice %25 {offsets = [0, 0], sizes = [16, 128], strides = [1, 1]} : vector<16x512xf32> to vector<16x128xf32>
    %27 = arith.negf %26 : vector<16x128xf32>
    %28 = math.exp %27 : vector<16x128xf32>
    %cst_20 = arith.constant 1.000000e+00 : f32
    %29 = vector.broadcast %cst_20 : f32 to vector<16x128xf32>
    %30 = arith.addf %29, %28 : vector<16x128xf32>
    %31 = arith.divf %29, %30 : vector<16x128xf32>
    %32 = vector.extract_strided_slice %25 {offsets = [0, 128], sizes = [16, 128], strides = [1, 1]} : vector<16x512xf32> to vector<16x128xf32>
    %33 = arith.negf %32 : vector<16x128xf32>
    %34 = math.exp %33 : vector<16x128xf32>
    %cst_21 = arith.constant 1.000000e+00 : f32
    %35 = vector.broadcast %cst_21 : f32 to vector<16x128xf32>
    %36 = arith.addf %35, %34 : vector<16x128xf32>
    %37 = arith.divf %35, %36 : vector<16x128xf32>
    %38 = vector.extract_strided_slice %25 {offsets = [0, 256], sizes = [16, 128], strides = [1, 1]} : vector<16x512xf32> to vector<16x128xf32>
    %39 = math.tanh %38 : vector<16x128xf32>
    %40 = vector.extract_strided_slice %25 {offsets = [0, 384], sizes = [16, 128], strides = [1, 1]} : vector<16x512xf32> to vector<16x128xf32>
    %41 = arith.negf %40 : vector<16x128xf32>
    %42 = math.exp %41 : vector<16x128xf32>
    %cst_22 = arith.constant 1.000000e+00 : f32
    %43 = vector.broadcast %cst_22 : f32 to vector<16x128xf32>
    %44 = arith.addf %43, %42 : vector<16x128xf32>
    %45 = arith.divf %43, %44 : vector<16x128xf32>
    %46 = arith.mulf %37, %17 : vector<16x128xf32>
    %47 = arith.mulf %31, %39 : vector<16x128xf32>
    %48 = arith.addf %46, %47 : vector<16x128xf32>
    %49 = math.tanh %48 : vector<16x128xf32>
    %50 = arith.mulf %45, %49 : vector<16x128xf32>
    %51 = vector.broadcast %c0_i32 : i32 to vector<16x1xi32>
    %52 = arith.cmpi eq, %16, %51 : vector<16x1xi32>
    %53 = vector.shape_cast %52 : vector<16x1xi1> to vector<16x1xi1>
    %54 = vector.broadcast %53 : vector<16x1xi1> to vector<16x128xi1>
    %55 = arith.select %54, %50, %17 : vector<16x128xi1>, vector<16x128xf32>
    %c7_i32 = arith.constant 7 : i32
    %56 = arith.subi %c7_i32, %c0_i32 : i32
    %57 = arith.index_cast %56 : i32 to index
    %c0_23 = arith.constant 0 : index
    %c0_24 = arith.constant 0 : index
    %58 = vector.load %arg12[%57, %c0_23, %c0_24] : memref<8x16x512xbf16, #tpu.memory_space<vmem>>, vector<1x16x512xbf16>
    %59 = vector.shape_cast %58 : vector<1x16x512xbf16> to vector<16x512xbf16>
    %60 = arith.extf %59 : vector<16x512xbf16> to vector<16x512xf32>
    %61 = arith.truncf %17 : vector<16x128xf32> to vector<16x128xbf16>
    %c0_25 = arith.constant 0 : index
    %c0_26 = arith.constant 0 : index
    %62 = vector.load %arg6[%c0_25, %c0_26] : memref<128x512xbf16, #tpu.memory_space<vmem>>, vector<128x512xbf16>
    %cst_27 = arith.constant dense<0.000000e+00> : vector<16x512xf32>
    %63 = tpu.matmul %61, %62, %cst_27 {dimension_numbers = #tpu.dot_dimension_numbers<[1], [0], [0], [1], [0, 0, 1, 1], [], []>} : vector<16x128xbf16>, vector<128x512xbf16>, vector<16x512xf32> -> vector<16x512xf32>
    %64 = arith.addf %60, %63 : vector<16x512xf32>
    %65 = vector.extract_strided_slice %64 {offsets = [0, 0], sizes = [16, 128], strides = [1, 1]} : vector<16x512xf32> to vector<16x128xf32>
    %66 = arith.negf %65 : vector<16x128xf32>
    %67 = math.exp %66 : vector<16x128xf32>
    %cst_28 = arith.constant 1.000000e+00 : f32
    %68 = vector.broadcast %cst_28 : f32 to vector<16x128xf32>
    %69 = arith.addf %68, %67 : vector<16x128xf32>
    %70 = arith.divf %68, %69 : vector<16x128xf32>
    %71 = vector.extract_strided_slice %64 {offsets = [0, 128], sizes = [16, 128], strides = [1, 1]} : vector<16x512xf32> to vector<16x128xf32>
    %72 = arith.negf %71 : vector<16x128xf32>
    %73 = math.exp %72 : vector<16x128xf32>
    %cst_29 = arith.constant 1.000000e+00 : f32
    %74 = vector.broadcast %cst_29 : f32 to vector<16x128xf32>
    %75 = arith.addf %74, %73 : vector<16x128xf32>
    %76 = arith.divf %74, %75 : vector<16x128xf32>
    %77 = vector.extract_strided_slice %64 {offsets = [0, 256], sizes = [16, 128], strides = [1, 1]} : vector<16x512xf32> to vector<16x128xf32>
    %78 = math.tanh %77 : vector<16x128xf32>
    %79 = vector.extract_strided_slice %64 {offsets = [0, 384], sizes = [16, 128], strides = [1, 1]} : vector<16x512xf32> to vector<16x128xf32>
    %80 = arith.negf %79 : vector<16x128xf32>
    %81 = math.exp %80 : vector<16x128xf32>
    %cst_30 = arith.constant 1.000000e+00 : f32
    %82 = vector.broadcast %cst_30 : f32 to vector<16x128xf32>
    %83 = arith.addf %82, %81 : vector<16x128xf32>
    %84 = arith.divf %82, %83 : vector<16x128xf32>
    %85 = arith.mulf %76, %17 : vector<16x128xf32>
    %86 = arith.mulf %70, %78 : vector<16x128xf32>
    %87 = arith.addf %85, %86 : vector<16x128xf32>
    %88 = math.tanh %87 : vector<16x128xf32>
    %89 = arith.mulf %84, %88 : vector<16x128xf32>
    %90 = vector.broadcast %56 : i32 to vector<16x1xi32>
    %91 = arith.cmpi slt, %90, %14 : vector<16x1xi32>
    %92 = vector.shape_cast %91 : vector<16x1xi1> to vector<16x1xi1>
    %93 = vector.broadcast %92 : vector<16x1xi1> to vector<16x128xi1>
    %94 = arith.select %93, %89, %17 : vector<16x128xi1>, vector<16x128xf32>
    %95 = vector.shape_cast %91 : vector<16x1xi1> to vector<16x1xi1>
    %96 = vector.broadcast %95 : vector<16x1xi1> to vector<16x128xi1>
    %97 = arith.select %96, %87, %17 : vector<16x128xi1>, vector<16x128xf32>
    %c1_i32_31 = arith.constant 1 : i32
    %98 = arith.index_cast %c1_i32_31 : i32 to index
    %c0_32 = arith.constant 0 : index
    %c0_33 = arith.constant 0 : index
    %99 = vector.load %arg11[%98, %c0_32, %c0_33] : memref<8x16x512xbf16, #tpu.memory_space<vmem>>, vector<1x16x512xbf16>
    %100 = vector.shape_cast %99 : vector<1x16x512xbf16> to vector<16x512xbf16>
    %101 = arith.extf %100 : vector<16x512xbf16> to vector<16x512xf32>
    %102 = arith.truncf %50 : vector<16x128xf32> to vector<16x128xbf16>
    %c0_34 = arith.constant 0 : index
    %c0_35 = arith.constant 0 : index
    %103 = vector.load %arg5[%c0_34, %c0_35] : memref<128x512xbf16, #tpu.memory_space<vmem>>, vector<128x512xbf16>
    %cst_36 = arith.constant dense<0.000000e+00> : vector<16x512xf32>
    %104 = tpu.matmul %102, %103, %cst_36 {dimension_numbers = #tpu.dot_dimension_numbers<[1], [0], [0], [1], [0, 0, 1, 1], [], []>} : vector<16x128xbf16>, vector<128x512xbf16>, vector<16x512xf32> -> vector<16x512xf32>
    %105 = arith.addf %101, %104 : vector<16x512xf32>
    %106 = vector.extract_strided_slice %105 {offsets = [0, 0], sizes = [16, 128], strides = [1, 1]} : vector<16x512xf32> to vector<16x128xf32>
    %107 = arith.negf %106 : vector<16x128xf32>
    %108 = math.exp %107 : vector<16x128xf32>
    %cst_37 = arith.constant 1.000000e+00 : f32
    %109 = vector.broadcast %cst_37 : f32 to vector<16x128xf32>
    %110 = arith.addf %109, %108 : vector<16x128xf32>
    %111 = arith.divf %109, %110 : vector<16x128xf32>
    %112 = vector.extract_strided_slice %105 {offsets = [0, 128], sizes = [16, 128], strides = [1, 1]} : vector<16x512xf32> to vector<16x128xf32>
    %113 = arith.negf %112 : vector<16x128xf32>
    %114 = math.exp %113 : vector<16x128xf32>
    %cst_38 = arith.constant 1.000000e+00 : f32
    %115 = vector.broadcast %cst_38 : f32 to vector<16x128xf32>
    %116 = arith.addf %115, %114 : vector<16x128xf32>
    %117 = arith.divf %115, %116 : vector<16x128xf32>
    %118 = vector.extract_strided_slice %105 {offsets = [0, 256], sizes = [16, 128], strides = [1, 1]} : vector<16x512xf32> to vector<16x128xf32>
    %119 = math.tanh %118 : vector<16x128xf32>
    %120 = vector.extract_strided_slice %105 {offsets = [0, 384], sizes = [16, 128], strides = [1, 1]} : vector<16x512xf32> to vector<16x128xf32>
    %121 = arith.negf %120 : vector<16x128xf32>
    %122 = math.exp %121 : vector<16x128xf32>
    %cst_39 = arith.constant 1.000000e+00 : f32
    %123 = vector.broadcast %cst_39 : f32 to vector<16x128xf32>
    %124 = arith.addf %123, %122 : vector<16x128xf32>
    %125 = arith.divf %123, %124 : vector<16x128xf32>
    %126 = arith.mulf %117, %48 : vector<16x128xf32>
    %127 = arith.mulf %111, %119 : vector<16x128xf32>
    %128 = arith.addf %126, %127 : vector<16x128xf32>
    %129 = math.tanh %128 : vector<16x128xf32>
    %130 = arith.mulf %125, %129 : vector<16x128xf32>
    %131 = vector.broadcast %c1_i32_31 : i32 to vector<16x1xi32>
    %132 = arith.cmpi eq, %16, %131 : vector<16x1xi32>
    %133 = vector.shape_cast %132 : vector<16x1xi1> to vector<16x1xi1>
    %134 = vector.broadcast %133 : vector<16x1xi1> to vector<16x128xi1>
    %135 = arith.select %134, %130, %55 : vector<16x128xi1>, vector<16x128xf32>
    %c7_i32_40 = arith.constant 7 : i32
    %136 = arith.subi %c7_i32_40, %c1_i32_31 : i32
    %137 = arith.index_cast %136 : i32 to index
    %c0_41 = arith.constant 0 : index
    %c0_42 = arith.constant 0 : index
    %138 = vector.load %arg12[%137, %c0_41, %c0_42] : memref<8x16x512xbf16, #tpu.memory_space<vmem>>, vector<1x16x512xbf16>
    %139 = vector.shape_cast %138 : vector<1x16x512xbf16> to vector<16x512xbf16>
    %140 = arith.extf %139 : vector<16x512xbf16> to vector<16x512xf32>
    %141 = arith.truncf %94 : vector<16x128xf32> to vector<16x128xbf16>
    %c0_43 = arith.constant 0 : index
    %c0_44 = arith.constant 0 : index
    %142 = vector.load %arg6[%c0_43, %c0_44] : memref<128x512xbf16, #tpu.memory_space<vmem>>, vector<128x512xbf16>
    %cst_45 = arith.constant dense<0.000000e+00> : vector<16x512xf32>
    %143 = tpu.matmul %141, %142, %cst_45 {dimension_numbers = #tpu.dot_dimension_numbers<[1], [0], [0], [1], [0, 0, 1, 1], [], []>} : vector<16x128xbf16>, vector<128x512xbf16>, vector<16x512xf32> -> vector<16x512xf32>
    %144 = arith.addf %140, %143 : vector<16x512xf32>
    %145 = vector.extract_strided_slice %144 {offsets = [0, 0], sizes = [16, 128], strides = [1, 1]} : vector<16x512xf32> to vector<16x128xf32>
    %146 = arith.negf %145 : vector<16x128xf32>
    %147 = math.exp %146 : vector<16x128xf32>
    %cst_46 = arith.constant 1.000000e+00 : f32
    %148 = vector.broadcast %cst_46 : f32 to vector<16x128xf32>
    %149 = arith.addf %148, %147 : vector<16x128xf32>
    %150 = arith.divf %148, %149 : vector<16x128xf32>
    %151 = vector.extract_strided_slice %144 {offsets = [0, 128], sizes = [16, 128], strides = [1, 1]} : vector<16x512xf32> to vector<16x128xf32>
    %152 = arith.negf %151 : vector<16x128xf32>
    %153 = math.exp %152 : vector<16x128xf32>
    %cst_47 = arith.constant 1.000000e+00 : f32
    %154 = vector.broadcast %cst_47 : f32 to vector<16x128xf32>
    %155 = arith.addf %154, %153 : vector<16x128xf32>
    %156 = arith.divf %154, %155 : vector<16x128xf32>
    %157 = vector.extract_strided_slice %144 {offsets = [0, 256], sizes = [16, 128], strides = [1, 1]} : vector<16x512xf32> to vector<16x128xf32>
    %158 = math.tanh %157 : vector<16x128xf32>
    %159 = vector.extract_strided_slice %144 {offsets = [0, 384], sizes = [16, 128], strides = [1, 1]} : vector<16x512xf32> to vector<16x128xf32>
    %160 = arith.negf %159 : vector<16x128xf32>
    %161 = math.exp %160 : vector<16x128xf32>
    %cst_48 = arith.constant 1.000000e+00 : f32
    %162 = vector.broadcast %cst_48 : f32 to vector<16x128xf32>
    %163 = arith.addf %162, %161 : vector<16x128xf32>
    %164 = arith.divf %162, %163 : vector<16x128xf32>
    %165 = arith.mulf %156, %97 : vector<16x128xf32>
    %166 = arith.mulf %150, %158 : vector<16x128xf32>
    %167 = arith.addf %165, %166 : vector<16x128xf32>
    %168 = math.tanh %167 : vector<16x128xf32>
    %169 = arith.mulf %164, %168 : vector<16x128xf32>
    %170 = vector.broadcast %136 : i32 to vector<16x1xi32>
    %171 = arith.cmpi slt, %170, %14 : vector<16x1xi32>
    %172 = vector.shape_cast %171 : vector<16x1xi1> to vector<16x1xi1>
    %173 = vector.broadcast %172 : vector<16x1xi1> to vector<16x128xi1>
    %174 = arith.select %173, %169, %94 : vector<16x128xi1>, vector<16x128xf32>
    %175 = vector.shape_cast %171 : vector<16x1xi1> to vector<16x1xi1>
    %176 = vector.broadcast %175 : vector<16x1xi1> to vector<16x128xi1>
    %177 = arith.select %176, %167, %97 : vector<16x128xi1>, vector<16x128xf32>
    %c2_i32 = arith.constant 2 : i32
    %178 = arith.index_cast %c2_i32 : i32 to index
    %c0_49 = arith.constant 0 : index
    %c0_50 = arith.constant 0 : index
    %179 = vector.load %arg11[%178, %c0_49, %c0_50] : memref<8x16x512xbf16, #tpu.memory_space<vmem>>, vector<1x16x512xbf16>
    %180 = vector.shape_cast %179 : vector<1x16x512xbf16> to vector<16x512xbf16>
    %181 = arith.extf %180 : vector<16x512xbf16> to vector<16x512xf32>
    %182 = arith.truncf %130 : vector<16x128xf32> to vector<16x128xbf16>
    %c0_51 = arith.constant 0 : index
    %c0_52 = arith.constant 0 : index
    %183 = vector.load %arg5[%c0_51, %c0_52] : memref<128x512xbf16, #tpu.memory_space<vmem>>, vector<128x512xbf16>
    %cst_53 = arith.constant dense<0.000000e+00> : vector<16x512xf32>
    %184 = tpu.matmul %182, %183, %cst_53 {dimension_numbers = #tpu.dot_dimension_numbers<[1], [0], [0], [1], [0, 0, 1, 1], [], []>} : vector<16x128xbf16>, vector<128x512xbf16>, vector<16x512xf32> -> vector<16x512xf32>
    %185 = arith.addf %181, %184 : vector<16x512xf32>
    %186 = vector.extract_strided_slice %185 {offsets = [0, 0], sizes = [16, 128], strides = [1, 1]} : vector<16x512xf32> to vector<16x128xf32>
    %187 = arith.negf %186 : vector<16x128xf32>
    %188 = math.exp %187 : vector<16x128xf32>
    %cst_54 = arith.constant 1.000000e+00 : f32
    %189 = vector.broadcast %cst_54 : f32 to vector<16x128xf32>
    %190 = arith.addf %189, %188 : vector<16x128xf32>
    %191 = arith.divf %189, %190 : vector<16x128xf32>
    %192 = vector.extract_strided_slice %185 {offsets = [0, 128], sizes = [16, 128], strides = [1, 1]} : vector<16x512xf32> to vector<16x128xf32>
    %193 = arith.negf %192 : vector<16x128xf32>
    %194 = math.exp %193 : vector<16x128xf32>
    %cst_55 = arith.constant 1.000000e+00 : f32
    %195 = vector.broadcast %cst_55 : f32 to vector<16x128xf32>
    %196 = arith.addf %195, %194 : vector<16x128xf32>
    %197 = arith.divf %195, %196 : vector<16x128xf32>
    %198 = vector.extract_strided_slice %185 {offsets = [0, 256], sizes = [16, 128], strides = [1, 1]} : vector<16x512xf32> to vector<16x128xf32>
    %199 = math.tanh %198 : vector<16x128xf32>
    %200 = vector.extract_strided_slice %185 {offsets = [0, 384], sizes = [16, 128], strides = [1, 1]} : vector<16x512xf32> to vector<16x128xf32>
    %201 = arith.negf %200 : vector<16x128xf32>
    %202 = math.exp %201 : vector<16x128xf32>
    %cst_56 = arith.constant 1.000000e+00 : f32
    %203 = vector.broadcast %cst_56 : f32 to vector<16x128xf32>
    %204 = arith.addf %203, %202 : vector<16x128xf32>
    %205 = arith.divf %203, %204 : vector<16x128xf32>
    %206 = arith.mulf %197, %128 : vector<16x128xf32>
    %207 = arith.mulf %191, %199 : vector<16x128xf32>
    %208 = arith.addf %206, %207 : vector<16x128xf32>
    %209 = math.tanh %208 : vector<16x128xf32>
    %210 = arith.mulf %205, %209 : vector<16x128xf32>
    %211 = vector.broadcast %c2_i32 : i32 to vector<16x1xi32>
    %212 = arith.cmpi eq, %16, %211 : vector<16x1xi32>
    %213 = vector.shape_cast %212 : vector<16x1xi1> to vector<16x1xi1>
    %214 = vector.broadcast %213 : vector<16x1xi1> to vector<16x128xi1>
    %215 = arith.select %214, %210, %135 : vector<16x128xi1>, vector<16x128xf32>
    %c7_i32_57 = arith.constant 7 : i32
    %216 = arith.subi %c7_i32_57, %c2_i32 : i32
    %217 = arith.index_cast %216 : i32 to index
    %c0_58 = arith.constant 0 : index
    %c0_59 = arith.constant 0 : index
    %218 = vector.load %arg12[%217, %c0_58, %c0_59] : memref<8x16x512xbf16, #tpu.memory_space<vmem>>, vector<1x16x512xbf16>
    %219 = vector.shape_cast %218 : vector<1x16x512xbf16> to vector<16x512xbf16>
    %220 = arith.extf %219 : vector<16x512xbf16> to vector<16x512xf32>
    %221 = arith.truncf %174 : vector<16x128xf32> to vector<16x128xbf16>
    %c0_60 = arith.constant 0 : index
    %c0_61 = arith.constant 0 : index
    %222 = vector.load %arg6[%c0_60, %c0_61] : memref<128x512xbf16, #tpu.memory_space<vmem>>, vector<128x512xbf16>
    %cst_62 = arith.constant dense<0.000000e+00> : vector<16x512xf32>
    %223 = tpu.matmul %221, %222, %cst_62 {dimension_numbers = #tpu.dot_dimension_numbers<[1], [0], [0], [1], [0, 0, 1, 1], [], []>} : vector<16x128xbf16>, vector<128x512xbf16>, vector<16x512xf32> -> vector<16x512xf32>
    %224 = arith.addf %220, %223 : vector<16x512xf32>
    %225 = vector.extract_strided_slice %224 {offsets = [0, 0], sizes = [16, 128], strides = [1, 1]} : vector<16x512xf32> to vector<16x128xf32>
    %226 = arith.negf %225 : vector<16x128xf32>
    %227 = math.exp %226 : vector<16x128xf32>
    %cst_63 = arith.constant 1.000000e+00 : f32
    %228 = vector.broadcast %cst_63 : f32 to vector<16x128xf32>
    %229 = arith.addf %228, %227 : vector<16x128xf32>
    %230 = arith.divf %228, %229 : vector<16x128xf32>
    %231 = vector.extract_strided_slice %224 {offsets = [0, 128], sizes = [16, 128], strides = [1, 1]} : vector<16x512xf32> to vector<16x128xf32>
    %232 = arith.negf %231 : vector<16x128xf32>
    %233 = math.exp %232 : vector<16x128xf32>
    %cst_64 = arith.constant 1.000000e+00 : f32
    %234 = vector.broadcast %cst_64 : f32 to vector<16x128xf32>
    %235 = arith.addf %234, %233 : vector<16x128xf32>
    %236 = arith.divf %234, %235 : vector<16x128xf32>
    %237 = vector.extract_strided_slice %224 {offsets = [0, 256], sizes = [16, 128], strides = [1, 1]} : vector<16x512xf32> to vector<16x128xf32>
    %238 = math.tanh %237 : vector<16x128xf32>
    %239 = vector.extract_strided_slice %224 {offsets = [0, 384], sizes = [16, 128], strides = [1, 1]} : vector<16x512xf32> to vector<16x128xf32>
    %240 = arith.negf %239 : vector<16x128xf32>
    %241 = math.exp %240 : vector<16x128xf32>
    %cst_65 = arith.constant 1.000000e+00 : f32
    %242 = vector.broadcast %cst_65 : f32 to vector<16x128xf32>
    %243 = arith.addf %242, %241 : vector<16x128xf32>
    %244 = arith.divf %242, %243 : vector<16x128xf32>
    %245 = arith.mulf %236, %177 : vector<16x128xf32>
    %246 = arith.mulf %230, %238 : vector<16x128xf32>
    %247 = arith.addf %245, %246 : vector<16x128xf32>
    %248 = math.tanh %247 : vector<16x128xf32>
    %249 = arith.mulf %244, %248 : vector<16x128xf32>
    %250 = vector.broadcast %216 : i32 to vector<16x1xi32>
    %251 = arith.cmpi slt, %250, %14 : vector<16x1xi32>
    %252 = vector.shape_cast %251 : vector<16x1xi1> to vector<16x1xi1>
    %253 = vector.broadcast %252 : vector<16x1xi1> to vector<16x128xi1>
    %254 = arith.select %253, %249, %174 : vector<16x128xi1>, vector<16x128xf32>
    %255 = vector.shape_cast %251 : vector<16x1xi1> to vector<16x1xi1>
    %256 = vector.broadcast %255 : vector<16x1xi1> to vector<16x128xi1>
    %257 = arith.select %256, %247, %177 : vector<16x128xi1>, vector<16x128xf32>
    %c3_i32 = arith.constant 3 : i32
    %258 = arith.index_cast %c3_i32 : i32 to index
    %c0_66 = arith.constant 0 : index
    %c0_67 = arith.constant 0 : index
    %259 = vector.load %arg11[%258, %c0_66, %c0_67] : memref<8x16x512xbf16, #tpu.memory_space<vmem>>, vector<1x16x512xbf16>
    %260 = vector.shape_cast %259 : vector<1x16x512xbf16> to vector<16x512xbf16>
    %261 = arith.extf %260 : vector<16x512xbf16> to vector<16x512xf32>
    %262 = arith.truncf %210 : vector<16x128xf32> to vector<16x128xbf16>
    %c0_68 = arith.constant 0 : index
    %c0_69 = arith.constant 0 : index
    %263 = vector.load %arg5[%c0_68, %c0_69] : memref<128x512xbf16, #tpu.memory_space<vmem>>, vector<128x512xbf16>
    %cst_70 = arith.constant dense<0.000000e+00> : vector<16x512xf32>
    %264 = tpu.matmul %262, %263, %cst_70 {dimension_numbers = #tpu.dot_dimension_numbers<[1], [0], [0], [1], [0, 0, 1, 1], [], []>} : vector<16x128xbf16>, vector<128x512xbf16>, vector<16x512xf32> -> vector<16x512xf32>
    %265 = arith.addf %261, %264 : vector<16x512xf32>
    %266 = vector.extract_strided_slice %265 {offsets = [0, 0], sizes = [16, 128], strides = [1, 1]} : vector<16x512xf32> to vector<16x128xf32>
    %267 = arith.negf %266 : vector<16x128xf32>
    %268 = math.exp %267 : vector<16x128xf32>
    %cst_71 = arith.constant 1.000000e+00 : f32
    %269 = vector.broadcast %cst_71 : f32 to vector<16x128xf32>
    %270 = arith.addf %269, %268 : vector<16x128xf32>
    %271 = arith.divf %269, %270 : vector<16x128xf32>
    %272 = vector.extract_strided_slice %265 {offsets = [0, 128], sizes = [16, 128], strides = [1, 1]} : vector<16x512xf32> to vector<16x128xf32>
    %273 = arith.negf %272 : vector<16x128xf32>
    %274 = math.exp %273 : vector<16x128xf32>
    %cst_72 = arith.constant 1.000000e+00 : f32
    %275 = vector.broadcast %cst_72 : f32 to vector<16x128xf32>
    %276 = arith.addf %275, %274 : vector<16x128xf32>
    %277 = arith.divf %275, %276 : vector<16x128xf32>
    %278 = vector.extract_strided_slice %265 {offsets = [0, 256], sizes = [16, 128], strides = [1, 1]} : vector<16x512xf32> to vector<16x128xf32>
    %279 = math.tanh %278 : vector<16x128xf32>
    %280 = vector.extract_strided_slice %265 {offsets = [0, 384], sizes = [16, 128], strides = [1, 1]} : vector<16x512xf32> to vector<16x128xf32>
    %281 = arith.negf %280 : vector<16x128xf32>
    %282 = math.exp %281 : vector<16x128xf32>
    %cst_73 = arith.constant 1.000000e+00 : f32
    %283 = vector.broadcast %cst_73 : f32 to vector<16x128xf32>
    %284 = arith.addf %283, %282 : vector<16x128xf32>
    %285 = arith.divf %283, %284 : vector<16x128xf32>
    %286 = arith.mulf %277, %208 : vector<16x128xf32>
    %287 = arith.mulf %271, %279 : vector<16x128xf32>
    %288 = arith.addf %286, %287 : vector<16x128xf32>
    %289 = math.tanh %288 : vector<16x128xf32>
    %290 = arith.mulf %285, %289 : vector<16x128xf32>
    %291 = vector.broadcast %c3_i32 : i32 to vector<16x1xi32>
    %292 = arith.cmpi eq, %16, %291 : vector<16x1xi32>
    %293 = vector.shape_cast %292 : vector<16x1xi1> to vector<16x1xi1>
    %294 = vector.broadcast %293 : vector<16x1xi1> to vector<16x128xi1>
    %295 = arith.select %294, %290, %215 : vector<16x128xi1>, vector<16x128xf32>
    %c7_i32_74 = arith.constant 7 : i32
    %296 = arith.subi %c7_i32_74, %c3_i32 : i32
    %297 = arith.index_cast %296 : i32 to index
    %c0_75 = arith.constant 0 : index
    %c0_76 = arith.constant 0 : index
    %298 = vector.load %arg12[%297, %c0_75, %c0_76] : memref<8x16x512xbf16, #tpu.memory_space<vmem>>, vector<1x16x512xbf16>
    %299 = vector.shape_cast %298 : vector<1x16x512xbf16> to vector<16x512xbf16>
    %300 = arith.extf %299 : vector<16x512xbf16> to vector<16x512xf32>
    %301 = arith.truncf %254 : vector<16x128xf32> to vector<16x128xbf16>
    %c0_77 = arith.constant 0 : index
    %c0_78 = arith.constant 0 : index
    %302 = vector.load %arg6[%c0_77, %c0_78] : memref<128x512xbf16, #tpu.memory_space<vmem>>, vector<128x512xbf16>
    %cst_79 = arith.constant dense<0.000000e+00> : vector<16x512xf32>
    %303 = tpu.matmul %301, %302, %cst_79 {dimension_numbers = #tpu.dot_dimension_numbers<[1], [0], [0], [1], [0, 0, 1, 1], [], []>} : vector<16x128xbf16>, vector<128x512xbf16>, vector<16x512xf32> -> vector<16x512xf32>
    %304 = arith.addf %300, %303 : vector<16x512xf32>
    %305 = vector.extract_strided_slice %304 {offsets = [0, 0], sizes = [16, 128], strides = [1, 1]} : vector<16x512xf32> to vector<16x128xf32>
    %306 = arith.negf %305 : vector<16x128xf32>
    %307 = math.exp %306 : vector<16x128xf32>
    %cst_80 = arith.constant 1.000000e+00 : f32
    %308 = vector.broadcast %cst_80 : f32 to vector<16x128xf32>
    %309 = arith.addf %308, %307 : vector<16x128xf32>
    %310 = arith.divf %308, %309 : vector<16x128xf32>
    %311 = vector.extract_strided_slice %304 {offsets = [0, 128], sizes = [16, 128], strides = [1, 1]} : vector<16x512xf32> to vector<16x128xf32>
    %312 = arith.negf %311 : vector<16x128xf32>
    %313 = math.exp %312 : vector<16x128xf32>
    %cst_81 = arith.constant 1.000000e+00 : f32
    %314 = vector.broadcast %cst_81 : f32 to vector<16x128xf32>
    %315 = arith.addf %314, %313 : vector<16x128xf32>
    %316 = arith.divf %314, %315 : vector<16x128xf32>
    %317 = vector.extract_strided_slice %304 {offsets = [0, 256], sizes = [16, 128], strides = [1, 1]} : vector<16x512xf32> to vector<16x128xf32>
    %318 = math.tanh %317 : vector<16x128xf32>
    %319 = vector.extract_strided_slice %304 {offsets = [0, 384], sizes = [16, 128], strides = [1, 1]} : vector<16x512xf32> to vector<16x128xf32>
    %320 = arith.negf %319 : vector<16x128xf32>
    %321 = math.exp %320 : vector<16x128xf32>
    %cst_82 = arith.constant 1.000000e+00 : f32
    %322 = vector.broadcast %cst_82 : f32 to vector<16x128xf32>
    %323 = arith.addf %322, %321 : vector<16x128xf32>
    %324 = arith.divf %322, %323 : vector<16x128xf32>
    %325 = arith.mulf %316, %257 : vector<16x128xf32>
    %326 = arith.mulf %310, %318 : vector<16x128xf32>
    %327 = arith.addf %325, %326 : vector<16x128xf32>
    %328 = math.tanh %327 : vector<16x128xf32>
    %329 = arith.mulf %324, %328 : vector<16x128xf32>
    %330 = vector.broadcast %296 : i32 to vector<16x1xi32>
    %331 = arith.cmpi slt, %330, %14 : vector<16x1xi32>
    %332 = vector.shape_cast %331 : vector<16x1xi1> to vector<16x1xi1>
    %333 = vector.broadcast %332 : vector<16x1xi1> to vector<16x128xi1>
    %334 = arith.select %333, %329, %254 : vector<16x128xi1>, vector<16x128xf32>
    %335 = vector.shape_cast %331 : vector<16x1xi1> to vector<16x1xi1>
    %336 = vector.broadcast %335 : vector<16x1xi1> to vector<16x128xi1>
    %337 = arith.select %336, %327, %257 : vector<16x128xi1>, vector<16x128xf32>
    %c4_i32 = arith.constant 4 : i32
    %338 = arith.index_cast %c4_i32 : i32 to index
    %c0_83 = arith.constant 0 : index
    %c0_84 = arith.constant 0 : index
    %339 = vector.load %arg11[%338, %c0_83, %c0_84] : memref<8x16x512xbf16, #tpu.memory_space<vmem>>, vector<1x16x512xbf16>
    %340 = vector.shape_cast %339 : vector<1x16x512xbf16> to vector<16x512xbf16>
    %341 = arith.extf %340 : vector<16x512xbf16> to vector<16x512xf32>
    %342 = arith.truncf %290 : vector<16x128xf32> to vector<16x128xbf16>
    %c0_85 = arith.constant 0 : index
    %c0_86 = arith.constant 0 : index
    %343 = vector.load %arg5[%c0_85, %c0_86] : memref<128x512xbf16, #tpu.memory_space<vmem>>, vector<128x512xbf16>
    %cst_87 = arith.constant dense<0.000000e+00> : vector<16x512xf32>
    %344 = tpu.matmul %342, %343, %cst_87 {dimension_numbers = #tpu.dot_dimension_numbers<[1], [0], [0], [1], [0, 0, 1, 1], [], []>} : vector<16x128xbf16>, vector<128x512xbf16>, vector<16x512xf32> -> vector<16x512xf32>
    %345 = arith.addf %341, %344 : vector<16x512xf32>
    %346 = vector.extract_strided_slice %345 {offsets = [0, 0], sizes = [16, 128], strides = [1, 1]} : vector<16x512xf32> to vector<16x128xf32>
    %347 = arith.negf %346 : vector<16x128xf32>
    %348 = math.exp %347 : vector<16x128xf32>
    %cst_88 = arith.constant 1.000000e+00 : f32
    %349 = vector.broadcast %cst_88 : f32 to vector<16x128xf32>
    %350 = arith.addf %349, %348 : vector<16x128xf32>
    %351 = arith.divf %349, %350 : vector<16x128xf32>
    %352 = vector.extract_strided_slice %345 {offsets = [0, 128], sizes = [16, 128], strides = [1, 1]} : vector<16x512xf32> to vector<16x128xf32>
    %353 = arith.negf %352 : vector<16x128xf32>
    %354 = math.exp %353 : vector<16x128xf32>
    %cst_89 = arith.constant 1.000000e+00 : f32
    %355 = vector.broadcast %cst_89 : f32 to vector<16x128xf32>
    %356 = arith.addf %355, %354 : vector<16x128xf32>
    %357 = arith.divf %355, %356 : vector<16x128xf32>
    %358 = vector.extract_strided_slice %345 {offsets = [0, 256], sizes = [16, 128], strides = [1, 1]} : vector<16x512xf32> to vector<16x128xf32>
    %359 = math.tanh %358 : vector<16x128xf32>
    %360 = vector.extract_strided_slice %345 {offsets = [0, 384], sizes = [16, 128], strides = [1, 1]} : vector<16x512xf32> to vector<16x128xf32>
    %361 = arith.negf %360 : vector<16x128xf32>
    %362 = math.exp %361 : vector<16x128xf32>
    %cst_90 = arith.constant 1.000000e+00 : f32
    %363 = vector.broadcast %cst_90 : f32 to vector<16x128xf32>
    %364 = arith.addf %363, %362 : vector<16x128xf32>
    %365 = arith.divf %363, %364 : vector<16x128xf32>
    %366 = arith.mulf %357, %288 : vector<16x128xf32>
    %367 = arith.mulf %351, %359 : vector<16x128xf32>
    %368 = arith.addf %366, %367 : vector<16x128xf32>
    %369 = math.tanh %368 : vector<16x128xf32>
    %370 = arith.mulf %365, %369 : vector<16x128xf32>
    %371 = vector.broadcast %c4_i32 : i32 to vector<16x1xi32>
    %372 = arith.cmpi eq, %16, %371 : vector<16x1xi32>
    %373 = vector.shape_cast %372 : vector<16x1xi1> to vector<16x1xi1>
    %374 = vector.broadcast %373 : vector<16x1xi1> to vector<16x128xi1>
    %375 = arith.select %374, %370, %295 : vector<16x128xi1>, vector<16x128xf32>
    %c7_i32_91 = arith.constant 7 : i32
    %376 = arith.subi %c7_i32_91, %c4_i32 : i32
    %377 = arith.index_cast %376 : i32 to index
    %c0_92 = arith.constant 0 : index
    %c0_93 = arith.constant 0 : index
    %378 = vector.load %arg12[%377, %c0_92, %c0_93] : memref<8x16x512xbf16, #tpu.memory_space<vmem>>, vector<1x16x512xbf16>
    %379 = vector.shape_cast %378 : vector<1x16x512xbf16> to vector<16x512xbf16>
    %380 = arith.extf %379 : vector<16x512xbf16> to vector<16x512xf32>
    %381 = arith.truncf %334 : vector<16x128xf32> to vector<16x128xbf16>
    %c0_94 = arith.constant 0 : index
    %c0_95 = arith.constant 0 : index
    %382 = vector.load %arg6[%c0_94, %c0_95] : memref<128x512xbf16, #tpu.memory_space<vmem>>, vector<128x512xbf16>
    %cst_96 = arith.constant dense<0.000000e+00> : vector<16x512xf32>
    %383 = tpu.matmul %381, %382, %cst_96 {dimension_numbers = #tpu.dot_dimension_numbers<[1], [0], [0], [1], [0, 0, 1, 1], [], []>} : vector<16x128xbf16>, vector<128x512xbf16>, vector<16x512xf32> -> vector<16x512xf32>
    %384 = arith.addf %380, %383 : vector<16x512xf32>
    %385 = vector.extract_strided_slice %384 {offsets = [0, 0], sizes = [16, 128], strides = [1, 1]} : vector<16x512xf32> to vector<16x128xf32>
    %386 = arith.negf %385 : vector<16x128xf32>
    %387 = math.exp %386 : vector<16x128xf32>
    %cst_97 = arith.constant 1.000000e+00 : f32
    %388 = vector.broadcast %cst_97 : f32 to vector<16x128xf32>
    %389 = arith.addf %388, %387 : vector<16x128xf32>
    %390 = arith.divf %388, %389 : vector<16x128xf32>
    %391 = vector.extract_strided_slice %384 {offsets = [0, 128], sizes = [16, 128], strides = [1, 1]} : vector<16x512xf32> to vector<16x128xf32>
    %392 = arith.negf %391 : vector<16x128xf32>
    %393 = math.exp %392 : vector<16x128xf32>
    %cst_98 = arith.constant 1.000000e+00 : f32
    %394 = vector.broadcast %cst_98 : f32 to vector<16x128xf32>
    %395 = arith.addf %394, %393 : vector<16x128xf32>
    %396 = arith.divf %394, %395 : vector<16x128xf32>
    %397 = vector.extract_strided_slice %384 {offsets = [0, 256], sizes = [16, 128], strides = [1, 1]} : vector<16x512xf32> to vector<16x128xf32>
    %398 = math.tanh %397 : vector<16x128xf32>
    %399 = vector.extract_strided_slice %384 {offsets = [0, 384], sizes = [16, 128], strides = [1, 1]} : vector<16x512xf32> to vector<16x128xf32>
    %400 = arith.negf %399 : vector<16x128xf32>
    %401 = math.exp %400 : vector<16x128xf32>
    %cst_99 = arith.constant 1.000000e+00 : f32
    %402 = vector.broadcast %cst_99 : f32 to vector<16x128xf32>
    %403 = arith.addf %402, %401 : vector<16x128xf32>
    %404 = arith.divf %402, %403 : vector<16x128xf32>
    %405 = arith.mulf %396, %337 : vector<16x128xf32>
    %406 = arith.mulf %390, %398 : vector<16x128xf32>
    %407 = arith.addf %405, %406 : vector<16x128xf32>
    %408 = math.tanh %407 : vector<16x128xf32>
    %409 = arith.mulf %404, %408 : vector<16x128xf32>
    %410 = vector.broadcast %376 : i32 to vector<16x1xi32>
    %411 = arith.cmpi slt, %410, %14 : vector<16x1xi32>
    %412 = vector.shape_cast %411 : vector<16x1xi1> to vector<16x1xi1>
    %413 = vector.broadcast %412 : vector<16x1xi1> to vector<16x128xi1>
    %414 = arith.select %413, %409, %334 : vector<16x128xi1>, vector<16x128xf32>
    %415 = vector.shape_cast %411 : vector<16x1xi1> to vector<16x1xi1>
    %416 = vector.broadcast %415 : vector<16x1xi1> to vector<16x128xi1>
    %417 = arith.select %416, %407, %337 : vector<16x128xi1>, vector<16x128xf32>
    %c5_i32 = arith.constant 5 : i32
    %418 = arith.index_cast %c5_i32 : i32 to index
    %c0_100 = arith.constant 0 : index
    %c0_101 = arith.constant 0 : index
    %419 = vector.load %arg11[%418, %c0_100, %c0_101] : memref<8x16x512xbf16, #tpu.memory_space<vmem>>, vector<1x16x512xbf16>
    %420 = vector.shape_cast %419 : vector<1x16x512xbf16> to vector<16x512xbf16>
    %421 = arith.extf %420 : vector<16x512xbf16> to vector<16x512xf32>
    %422 = arith.truncf %370 : vector<16x128xf32> to vector<16x128xbf16>
    %c0_102 = arith.constant 0 : index
    %c0_103 = arith.constant 0 : index
    %423 = vector.load %arg5[%c0_102, %c0_103] : memref<128x512xbf16, #tpu.memory_space<vmem>>, vector<128x512xbf16>
    %cst_104 = arith.constant dense<0.000000e+00> : vector<16x512xf32>
    %424 = tpu.matmul %422, %423, %cst_104 {dimension_numbers = #tpu.dot_dimension_numbers<[1], [0], [0], [1], [0, 0, 1, 1], [], []>} : vector<16x128xbf16>, vector<128x512xbf16>, vector<16x512xf32> -> vector<16x512xf32>
    %425 = arith.addf %421, %424 : vector<16x512xf32>
    %426 = vector.extract_strided_slice %425 {offsets = [0, 0], sizes = [16, 128], strides = [1, 1]} : vector<16x512xf32> to vector<16x128xf32>
    %427 = arith.negf %426 : vector<16x128xf32>
    %428 = math.exp %427 : vector<16x128xf32>
    %cst_105 = arith.constant 1.000000e+00 : f32
    %429 = vector.broadcast %cst_105 : f32 to vector<16x128xf32>
    %430 = arith.addf %429, %428 : vector<16x128xf32>
    %431 = arith.divf %429, %430 : vector<16x128xf32>
    %432 = vector.extract_strided_slice %425 {offsets = [0, 128], sizes = [16, 128], strides = [1, 1]} : vector<16x512xf32> to vector<16x128xf32>
    %433 = arith.negf %432 : vector<16x128xf32>
    %434 = math.exp %433 : vector<16x128xf32>
    %cst_106 = arith.constant 1.000000e+00 : f32
    %435 = vector.broadcast %cst_106 : f32 to vector<16x128xf32>
    %436 = arith.addf %435, %434 : vector<16x128xf32>
    %437 = arith.divf %435, %436 : vector<16x128xf32>
    %438 = vector.extract_strided_slice %425 {offsets = [0, 256], sizes = [16, 128], strides = [1, 1]} : vector<16x512xf32> to vector<16x128xf32>
    %439 = math.tanh %438 : vector<16x128xf32>
    %440 = vector.extract_strided_slice %425 {offsets = [0, 384], sizes = [16, 128], strides = [1, 1]} : vector<16x512xf32> to vector<16x128xf32>
    %441 = arith.negf %440 : vector<16x128xf32>
    %442 = math.exp %441 : vector<16x128xf32>
    %cst_107 = arith.constant 1.000000e+00 : f32
    %443 = vector.broadcast %cst_107 : f32 to vector<16x128xf32>
    %444 = arith.addf %443, %442 : vector<16x128xf32>
    %445 = arith.divf %443, %444 : vector<16x128xf32>
    %446 = arith.mulf %437, %368 : vector<16x128xf32>
    %447 = arith.mulf %431, %439 : vector<16x128xf32>
    %448 = arith.addf %446, %447 : vector<16x128xf32>
    %449 = math.tanh %448 : vector<16x128xf32>
    %450 = arith.mulf %445, %449 : vector<16x128xf32>
    %451 = vector.broadcast %c5_i32 : i32 to vector<16x1xi32>
    %452 = arith.cmpi eq, %16, %451 : vector<16x1xi32>
    %453 = vector.shape_cast %452 : vector<16x1xi1> to vector<16x1xi1>
    %454 = vector.broadcast %453 : vector<16x1xi1> to vector<16x128xi1>
    %455 = arith.select %454, %450, %375 : vector<16x128xi1>, vector<16x128xf32>
    %c7_i32_108 = arith.constant 7 : i32
    %456 = arith.subi %c7_i32_108, %c5_i32 : i32
    %457 = arith.index_cast %456 : i32 to index
    %c0_109 = arith.constant 0 : index
    %c0_110 = arith.constant 0 : index
    %458 = vector.load %arg12[%457, %c0_109, %c0_110] : memref<8x16x512xbf16, #tpu.memory_space<vmem>>, vector<1x16x512xbf16>
    %459 = vector.shape_cast %458 : vector<1x16x512xbf16> to vector<16x512xbf16>
    %460 = arith.extf %459 : vector<16x512xbf16> to vector<16x512xf32>
    %461 = arith.truncf %414 : vector<16x128xf32> to vector<16x128xbf16>
    %c0_111 = arith.constant 0 : index
    %c0_112 = arith.constant 0 : index
    %462 = vector.load %arg6[%c0_111, %c0_112] : memref<128x512xbf16, #tpu.memory_space<vmem>>, vector<128x512xbf16>
    %cst_113 = arith.constant dense<0.000000e+00> : vector<16x512xf32>
    %463 = tpu.matmul %461, %462, %cst_113 {dimension_numbers = #tpu.dot_dimension_numbers<[1], [0], [0], [1], [0, 0, 1, 1], [], []>} : vector<16x128xbf16>, vector<128x512xbf16>, vector<16x512xf32> -> vector<16x512xf32>
    %464 = arith.addf %460, %463 : vector<16x512xf32>
    %465 = vector.extract_strided_slice %464 {offsets = [0, 0], sizes = [16, 128], strides = [1, 1]} : vector<16x512xf32> to vector<16x128xf32>
    %466 = arith.negf %465 : vector<16x128xf32>
    %467 = math.exp %466 : vector<16x128xf32>
    %cst_114 = arith.constant 1.000000e+00 : f32
    %468 = vector.broadcast %cst_114 : f32 to vector<16x128xf32>
    %469 = arith.addf %468, %467 : vector<16x128xf32>
    %470 = arith.divf %468, %469 : vector<16x128xf32>
    %471 = vector.extract_strided_slice %464 {offsets = [0, 128], sizes = [16, 128], strides = [1, 1]} : vector<16x512xf32> to vector<16x128xf32>
    %472 = arith.negf %471 : vector<16x128xf32>
    %473 = math.exp %472 : vector<16x128xf32>
    %cst_115 = arith.constant 1.000000e+00 : f32
    %474 = vector.broadcast %cst_115 : f32 to vector<16x128xf32>
    %475 = arith.addf %474, %473 : vector<16x128xf32>
    %476 = arith.divf %474, %475 : vector<16x128xf32>
    %477 = vector.extract_strided_slice %464 {offsets = [0, 256], sizes = [16, 128], strides = [1, 1]} : vector<16x512xf32> to vector<16x128xf32>
    %478 = math.tanh %477 : vector<16x128xf32>
    %479 = vector.extract_strided_slice %464 {offsets = [0, 384], sizes = [16, 128], strides = [1, 1]} : vector<16x512xf32> to vector<16x128xf32>
    %480 = arith.negf %479 : vector<16x128xf32>
    %481 = math.exp %480 : vector<16x128xf32>
    %cst_116 = arith.constant 1.000000e+00 : f32
    %482 = vector.broadcast %cst_116 : f32 to vector<16x128xf32>
    %483 = arith.addf %482, %481 : vector<16x128xf32>
    %484 = arith.divf %482, %483 : vector<16x128xf32>
    %485 = arith.mulf %476, %417 : vector<16x128xf32>
    %486 = arith.mulf %470, %478 : vector<16x128xf32>
    %487 = arith.addf %485, %486 : vector<16x128xf32>
    %488 = math.tanh %487 : vector<16x128xf32>
    %489 = arith.mulf %484, %488 : vector<16x128xf32>
    %490 = vector.broadcast %456 : i32 to vector<16x1xi32>
    %491 = arith.cmpi slt, %490, %14 : vector<16x1xi32>
    %492 = vector.shape_cast %491 : vector<16x1xi1> to vector<16x1xi1>
    %493 = vector.broadcast %492 : vector<16x1xi1> to vector<16x128xi1>
    %494 = arith.select %493, %489, %414 : vector<16x128xi1>, vector<16x128xf32>
    %495 = vector.shape_cast %491 : vector<16x1xi1> to vector<16x1xi1>
    %496 = vector.broadcast %495 : vector<16x1xi1> to vector<16x128xi1>
    %497 = arith.select %496, %487, %417 : vector<16x128xi1>, vector<16x128xf32>
    %c6_i32 = arith.constant 6 : i32
    %498 = arith.index_cast %c6_i32 : i32 to index
    %c0_117 = arith.constant 0 : index
    %c0_118 = arith.constant 0 : index
    %499 = vector.load %arg11[%498, %c0_117, %c0_118] : memref<8x16x512xbf16, #tpu.memory_space<vmem>>, vector<1x16x512xbf16>
    %500 = vector.shape_cast %499 : vector<1x16x512xbf16> to vector<16x512xbf16>
    %501 = arith.extf %500 : vector<16x512xbf16> to vector<16x512xf32>
    %502 = arith.truncf %450 : vector<16x128xf32> to vector<16x128xbf16>
    %c0_119 = arith.constant 0 : index
    %c0_120 = arith.constant 0 : index
    %503 = vector.load %arg5[%c0_119, %c0_120] : memref<128x512xbf16, #tpu.memory_space<vmem>>, vector<128x512xbf16>
    %cst_121 = arith.constant dense<0.000000e+00> : vector<16x512xf32>
    %504 = tpu.matmul %502, %503, %cst_121 {dimension_numbers = #tpu.dot_dimension_numbers<[1], [0], [0], [1], [0, 0, 1, 1], [], []>} : vector<16x128xbf16>, vector<128x512xbf16>, vector<16x512xf32> -> vector<16x512xf32>
    %505 = arith.addf %501, %504 : vector<16x512xf32>
    %506 = vector.extract_strided_slice %505 {offsets = [0, 0], sizes = [16, 128], strides = [1, 1]} : vector<16x512xf32> to vector<16x128xf32>
    %507 = arith.negf %506 : vector<16x128xf32>
    %508 = math.exp %507 : vector<16x128xf32>
    %cst_122 = arith.constant 1.000000e+00 : f32
    %509 = vector.broadcast %cst_122 : f32 to vector<16x128xf32>
    %510 = arith.addf %509, %508 : vector<16x128xf32>
    %511 = arith.divf %509, %510 : vector<16x128xf32>
    %512 = vector.extract_strided_slice %505 {offsets = [0, 128], sizes = [16, 128], strides = [1, 1]} : vector<16x512xf32> to vector<16x128xf32>
    %513 = arith.negf %512 : vector<16x128xf32>
    %514 = math.exp %513 : vector<16x128xf32>
    %cst_123 = arith.constant 1.000000e+00 : f32
    %515 = vector.broadcast %cst_123 : f32 to vector<16x128xf32>
    %516 = arith.addf %515, %514 : vector<16x128xf32>
    %517 = arith.divf %515, %516 : vector<16x128xf32>
    %518 = vector.extract_strided_slice %505 {offsets = [0, 256], sizes = [16, 128], strides = [1, 1]} : vector<16x512xf32> to vector<16x128xf32>
    %519 = math.tanh %518 : vector<16x128xf32>
    %520 = vector.extract_strided_slice %505 {offsets = [0, 384], sizes = [16, 128], strides = [1, 1]} : vector<16x512xf32> to vector<16x128xf32>
    %521 = arith.negf %520 : vector<16x128xf32>
    %522 = math.exp %521 : vector<16x128xf32>
    %cst_124 = arith.constant 1.000000e+00 : f32
    %523 = vector.broadcast %cst_124 : f32 to vector<16x128xf32>
    %524 = arith.addf %523, %522 : vector<16x128xf32>
    %525 = arith.divf %523, %524 : vector<16x128xf32>
    %526 = arith.mulf %517, %448 : vector<16x128xf32>
    %527 = arith.mulf %511, %519 : vector<16x128xf32>
    %528 = arith.addf %526, %527 : vector<16x128xf32>
    %529 = math.tanh %528 : vector<16x128xf32>
    %530 = arith.mulf %525, %529 : vector<16x128xf32>
    %531 = vector.broadcast %c6_i32 : i32 to vector<16x1xi32>
    %532 = arith.cmpi eq, %16, %531 : vector<16x1xi32>
    %533 = vector.shape_cast %532 : vector<16x1xi1> to vector<16x1xi1>
    %534 = vector.broadcast %533 : vector<16x1xi1> to vector<16x128xi1>
    %535 = arith.select %534, %530, %455 : vector<16x128xi1>, vector<16x128xf32>
    %c7_i32_125 = arith.constant 7 : i32
    %536 = arith.subi %c7_i32_125, %c6_i32 : i32
    %537 = arith.index_cast %536 : i32 to index
    %c0_126 = arith.constant 0 : index
    %c0_127 = arith.constant 0 : index
    %538 = vector.load %arg12[%537, %c0_126, %c0_127] : memref<8x16x512xbf16, #tpu.memory_space<vmem>>, vector<1x16x512xbf16>
    %539 = vector.shape_cast %538 : vector<1x16x512xbf16> to vector<16x512xbf16>
    %540 = arith.extf %539 : vector<16x512xbf16> to vector<16x512xf32>
    %541 = arith.truncf %494 : vector<16x128xf32> to vector<16x128xbf16>
    %c0_128 = arith.constant 0 : index
    %c0_129 = arith.constant 0 : index
    %542 = vector.load %arg6[%c0_128, %c0_129] : memref<128x512xbf16, #tpu.memory_space<vmem>>, vector<128x512xbf16>
    %cst_130 = arith.constant dense<0.000000e+00> : vector<16x512xf32>
    %543 = tpu.matmul %541, %542, %cst_130 {dimension_numbers = #tpu.dot_dimension_numbers<[1], [0], [0], [1], [0, 0, 1, 1], [], []>} : vector<16x128xbf16>, vector<128x512xbf16>, vector<16x512xf32> -> vector<16x512xf32>
    %544 = arith.addf %540, %543 : vector<16x512xf32>
    %545 = vector.extract_strided_slice %544 {offsets = [0, 0], sizes = [16, 128], strides = [1, 1]} : vector<16x512xf32> to vector<16x128xf32>
    %546 = arith.negf %545 : vector<16x128xf32>
    %547 = math.exp %546 : vector<16x128xf32>
    %cst_131 = arith.constant 1.000000e+00 : f32
    %548 = vector.broadcast %cst_131 : f32 to vector<16x128xf32>
    %549 = arith.addf %548, %547 : vector<16x128xf32>
    %550 = arith.divf %548, %549 : vector<16x128xf32>
    %551 = vector.extract_strided_slice %544 {offsets = [0, 128], sizes = [16, 128], strides = [1, 1]} : vector<16x512xf32> to vector<16x128xf32>
    %552 = arith.negf %551 : vector<16x128xf32>
    %553 = math.exp %552 : vector<16x128xf32>
    %cst_132 = arith.constant 1.000000e+00 : f32
    %554 = vector.broadcast %cst_132 : f32 to vector<16x128xf32>
    %555 = arith.addf %554, %553 : vector<16x128xf32>
    %556 = arith.divf %554, %555 : vector<16x128xf32>
    %557 = vector.extract_strided_slice %544 {offsets = [0, 256], sizes = [16, 128], strides = [1, 1]} : vector<16x512xf32> to vector<16x128xf32>
    %558 = math.tanh %557 : vector<16x128xf32>
    %559 = vector.extract_strided_slice %544 {offsets = [0, 384], sizes = [16, 128], strides = [1, 1]} : vector<16x512xf32> to vector<16x128xf32>
    %560 = arith.negf %559 : vector<16x128xf32>
    %561 = math.exp %560 : vector<16x128xf32>
    %cst_133 = arith.constant 1.000000e+00 : f32
    %562 = vector.broadcast %cst_133 : f32 to vector<16x128xf32>
    %563 = arith.addf %562, %561 : vector<16x128xf32>
    %564 = arith.divf %562, %563 : vector<16x128xf32>
    %565 = arith.mulf %556, %497 : vector<16x128xf32>
    %566 = arith.mulf %550, %558 : vector<16x128xf32>
    %567 = arith.addf %565, %566 : vector<16x128xf32>
    %568 = math.tanh %567 : vector<16x128xf32>
    %569 = arith.mulf %564, %568 : vector<16x128xf32>
    %570 = vector.broadcast %536 : i32 to vector<16x1xi32>
    %571 = arith.cmpi slt, %570, %14 : vector<16x1xi32>
    %572 = vector.shape_cast %571 : vector<16x1xi1> to vector<16x1xi1>
    %573 = vector.broadcast %572 : vector<16x1xi1> to vector<16x128xi1>
    %574 = arith.select %573, %569, %494 : vector<16x128xi1>, vector<16x128xf32>
    %575 = vector.shape_cast %571 : vector<16x1xi1> to vector<16x1xi1>
    %576 = vector.broadcast %575 : vector<16x1xi1> to vector<16x128xi1>
    %577 = arith.select %576, %567, %497 : vector<16x128xi1>, vector<16x128xf32>
    %c7_i32_134 = arith.constant 7 : i32
    %578 = arith.index_cast %c7_i32_134 : i32 to index
    %c0_135 = arith.constant 0 : index
    %c0_136 = arith.constant 0 : index
    %579 = vector.load %arg11[%578, %c0_135, %c0_136] : memref<8x16x512xbf16, #tpu.memory_space<vmem>>, vector<1x16x512xbf16>
    %580 = vector.shape_cast %579 : vector<1x16x512xbf16> to vector<16x512xbf16>
    %581 = arith.extf %580 : vector<16x512xbf16> to vector<16x512xf32>
    %582 = arith.truncf %530 : vector<16x128xf32> to vector<16x128xbf16>
    %c0_137 = arith.constant 0 : index
    %c0_138 = arith.constant 0 : index
    %583 = vector.load %arg5[%c0_137, %c0_138] : memref<128x512xbf16, #tpu.memory_space<vmem>>, vector<128x512xbf16>
    %cst_139 = arith.constant dense<0.000000e+00> : vector<16x512xf32>
    %584 = tpu.matmul %582, %583, %cst_139 {dimension_numbers = #tpu.dot_dimension_numbers<[1], [0], [0], [1], [0, 0, 1, 1], [], []>} : vector<16x128xbf16>, vector<128x512xbf16>, vector<16x512xf32> -> vector<16x512xf32>
    %585 = arith.addf %581, %584 : vector<16x512xf32>
    %586 = vector.extract_strided_slice %585 {offsets = [0, 0], sizes = [16, 128], strides = [1, 1]} : vector<16x512xf32> to vector<16x128xf32>
    %587 = arith.negf %586 : vector<16x128xf32>
    %588 = math.exp %587 : vector<16x128xf32>
    %cst_140 = arith.constant 1.000000e+00 : f32
    %589 = vector.broadcast %cst_140 : f32 to vector<16x128xf32>
    %590 = arith.addf %589, %588 : vector<16x128xf32>
    %591 = arith.divf %589, %590 : vector<16x128xf32>
    %592 = vector.extract_strided_slice %585 {offsets = [0, 128], sizes = [16, 128], strides = [1, 1]} : vector<16x512xf32> to vector<16x128xf32>
    %593 = arith.negf %592 : vector<16x128xf32>
    %594 = math.exp %593 : vector<16x128xf32>
    %cst_141 = arith.constant 1.000000e+00 : f32
    %595 = vector.broadcast %cst_141 : f32 to vector<16x128xf32>
    %596 = arith.addf %595, %594 : vector<16x128xf32>
    %597 = arith.divf %595, %596 : vector<16x128xf32>
    %598 = vector.extract_strided_slice %585 {offsets = [0, 256], sizes = [16, 128], strides = [1, 1]} : vector<16x512xf32> to vector<16x128xf32>
    %599 = math.tanh %598 : vector<16x128xf32>
    %600 = vector.extract_strided_slice %585 {offsets = [0, 384], sizes = [16, 128], strides = [1, 1]} : vector<16x512xf32> to vector<16x128xf32>
    %601 = arith.negf %600 : vector<16x128xf32>
    %602 = math.exp %601 : vector<16x128xf32>
    %cst_142 = arith.constant 1.000000e+00 : f32
    %603 = vector.broadcast %cst_142 : f32 to vector<16x128xf32>
    %604 = arith.addf %603, %602 : vector<16x128xf32>
    %605 = arith.divf %603, %604 : vector<16x128xf32>
    %606 = arith.mulf %597, %528 : vector<16x128xf32>
    %607 = arith.mulf %591, %599 : vector<16x128xf32>
    %608 = arith.addf %606, %607 : vector<16x128xf32>
    %609 = math.tanh %608 : vector<16x128xf32>
    %610 = arith.mulf %605, %609 : vector<16x128xf32>
    %611 = vector.broadcast %c7_i32_134 : i32 to vector<16x1xi32>
    %612 = arith.cmpi eq, %16, %611 : vector<16x1xi32>
    %613 = vector.shape_cast %612 : vector<16x1xi1> to vector<16x1xi1>
    %614 = vector.broadcast %613 : vector<16x1xi1> to vector<16x128xi1>
    %615 = arith.select %614, %610, %535 : vector<16x128xi1>, vector<16x128xf32>
    %c7_i32_143 = arith.constant 7 : i32
    %616 = arith.subi %c7_i32_143, %c7_i32_134 : i32
    %617 = arith.index_cast %616 : i32 to index
    %c0_144 = arith.constant 0 : index
    %c0_145 = arith.constant 0 : index
    %618 = vector.load %arg12[%617, %c0_144, %c0_145] : memref<8x16x512xbf16, #tpu.memory_space<vmem>>, vector<1x16x512xbf16>
    %619 = vector.shape_cast %618 : vector<1x16x512xbf16> to vector<16x512xbf16>
    %620 = arith.extf %619 : vector<16x512xbf16> to vector<16x512xf32>
    %621 = arith.truncf %574 : vector<16x128xf32> to vector<16x128xbf16>
    %c0_146 = arith.constant 0 : index
    %c0_147 = arith.constant 0 : index
    %622 = vector.load %arg6[%c0_146, %c0_147] : memref<128x512xbf16, #tpu.memory_space<vmem>>, vector<128x512xbf16>
    %cst_148 = arith.constant dense<0.000000e+00> : vector<16x512xf32>
    %623 = tpu.matmul %621, %622, %cst_148 {dimension_numbers = #tpu.dot_dimension_numbers<[1], [0], [0], [1], [0, 0, 1, 1], [], []>} : vector<16x128xbf16>, vector<128x512xbf16>, vector<16x512xf32> -> vector<16x512xf32>
    %624 = arith.addf %620, %623 : vector<16x512xf32>
    %625 = vector.extract_strided_slice %624 {offsets = [0, 0], sizes = [16, 128], strides = [1, 1]} : vector<16x512xf32> to vector<16x128xf32>
    %626 = arith.negf %625 : vector<16x128xf32>
    %627 = math.exp %626 : vector<16x128xf32>
    %cst_149 = arith.constant 1.000000e+00 : f32
    %628 = vector.broadcast %cst_149 : f32 to vector<16x128xf32>
    %629 = arith.addf %628, %627 : vector<16x128xf32>
    %630 = arith.divf %628, %629 : vector<16x128xf32>
    %631 = vector.extract_strided_slice %624 {offsets = [0, 128], sizes = [16, 128], strides = [1, 1]} : vector<16x512xf32> to vector<16x128xf32>
    %632 = arith.negf %631 : vector<16x128xf32>
    %633 = math.exp %632 : vector<16x128xf32>
    %cst_150 = arith.constant 1.000000e+00 : f32
    %634 = vector.broadcast %cst_150 : f32 to vector<16x128xf32>
    %635 = arith.addf %634, %633 : vector<16x128xf32>
    %636 = arith.divf %634, %635 : vector<16x128xf32>
    %637 = vector.extract_strided_slice %624 {offsets = [0, 256], sizes = [16, 128], strides = [1, 1]} : vector<16x512xf32> to vector<16x128xf32>
    %638 = math.tanh %637 : vector<16x128xf32>
    %639 = vector.extract_strided_slice %624 {offsets = [0, 384], sizes = [16, 128], strides = [1, 1]} : vector<16x512xf32> to vector<16x128xf32>
    %640 = arith.negf %639 : vector<16x128xf32>
    %641 = math.exp %640 : vector<16x128xf32>
    %cst_151 = arith.constant 1.000000e+00 : f32
    %642 = vector.broadcast %cst_151 : f32 to vector<16x128xf32>
    %643 = arith.addf %642, %641 : vector<16x128xf32>
    %644 = arith.divf %642, %643 : vector<16x128xf32>
    %645 = arith.mulf %636, %577 : vector<16x128xf32>
    %646 = arith.mulf %630, %638 : vector<16x128xf32>
    %647 = arith.addf %645, %646 : vector<16x128xf32>
    %648 = math.tanh %647 : vector<16x128xf32>
    %649 = arith.mulf %644, %648 : vector<16x128xf32>
    %650 = vector.broadcast %616 : i32 to vector<16x1xi32>
    %651 = arith.cmpi slt, %650, %14 : vector<16x1xi32>
    %652 = vector.shape_cast %651 : vector<16x1xi1> to vector<16x1xi1>
    %653 = vector.broadcast %652 : vector<16x1xi1> to vector<16x128xi1>
    %654 = arith.select %653, %649, %574 : vector<16x128xi1>, vector<16x128xf32>
    %655 = vector.shape_cast %651 : vector<16x1xi1> to vector<16x1xi1>
    %656 = vector.broadcast %655 : vector<16x1xi1> to vector<16x128xi1>
    %657 = arith.select %656, %647, %577 : vector<16x128xi1>, vector<16x128xf32>
    %c8_i32 = arith.constant 8 : i32
    %658 = arith.truncf %615 : vector<16x128xf32> to vector<16x128xbf16>
    %c0_152 = arith.constant 0 : index
    %c0_153 = arith.constant 0 : index
    %659 = vector.load %arg7[%c0_152, %c0_153] : memref<128x128xbf16, #tpu.memory_space<vmem>>, vector<128x128xbf16>
    %cst_154 = arith.constant dense<0.000000e+00> : vector<16x128xf32>
    %660 = tpu.matmul %658, %659, %cst_154 {dimension_numbers = #tpu.dot_dimension_numbers<[1], [0], [0], [1], [0, 0, 1, 1], [], []>} : vector<16x128xbf16>, vector<128x128xbf16>, vector<16x128xf32> -> vector<16x128xf32>
    %661 = arith.truncf %654 : vector<16x128xf32> to vector<16x128xbf16>
    %c0_155 = arith.constant 0 : index
    %c0_156 = arith.constant 0 : index
    %662 = vector.load %arg8[%c0_155, %c0_156] : memref<128x128xbf16, #tpu.memory_space<vmem>>, vector<128x128xbf16>
    %cst_157 = arith.constant dense<0.000000e+00> : vector<16x128xf32>
    %663 = tpu.matmul %661, %662, %cst_157 {dimension_numbers = #tpu.dot_dimension_numbers<[1], [0], [0], [1], [0, 0, 1, 1], [], []>} : vector<16x128xbf16>, vector<128x128xbf16>, vector<16x128xf32> -> vector<16x128xf32>
    %664 = arith.addf %660, %663 : vector<16x128xf32>
    %c0_158 = arith.constant 0 : index
    %c0_159 = arith.constant 0 : index
    %665 = vector.load %arg9[%c0_158, %c0_159] : memref<1x128xf32, #tpu.memory_space<vmem>>, vector<1x128xf32>
    %666 = vector.broadcast %665 : vector<1x128xf32> to vector<16x128xf32>
    %667 = arith.addf %664, %666 : vector<16x128xf32>
    %c0_160 = arith.constant 0 : index
    %c0_161 = arith.constant 0 : index
    %668 = vector.load %arg10[%c0_160, %c0_161] : memref<16x128xf32, #tpu.memory_space<vmem>>, vector<16x128xf32>
    tpu.vector_store %arg10[%c0_160, %c0_161], %667 {strides = array<i32>} : memref<16x128xf32, #tpu.memory_space<vmem>>, vector<16x128xf32>,
    return
  }
  func.func @transform_0(%arg0: i32) -> (i32, i32) {
    %c0_i32 = arith.constant 0 : i32
    %c0_i32_0 = arith.constant 0 : i32
    return %arg0, %c0_i32 : i32, i32
  }
  func.func @transform_1(%arg0: i32) -> (i32, i32, i32) {
    %c0_i32 = arith.constant 0 : i32
    %c0_i32_0 = arith.constant 0 : i32
    %c0_i32_1 = arith.constant 0 : i32
    return %c0_i32, %arg0, %c0_i32_0 : i32, i32, i32
  }
  func.func @transform_2(%arg0: i32) -> (i32, i32) {
    %c0_i32 = arith.constant 0 : i32
    %c0_i32_0 = arith.constant 0 : i32
    %c0_i32_1 = arith.constant 0 : i32
    return %c0_i32, %c0_i32_0 : i32, i32
  }
  func.func @transform_3(%arg0: i32) -> (i32, i32) {
    %c0_i32 = arith.constant 0 : i32
    %c0_i32_0 = arith.constant 0 : i32
    %c0_i32_1 = arith.constant 0 : i32
    return %c0_i32, %c0_i32_0 : i32, i32
  }
  func.func @transform_4(%arg0: i32) -> (i32, i32) {
    %c0_i32 = arith.constant 0 : i32
    %c0_i32_0 = arith.constant 0 : i32
    %c0_i32_1 = arith.constant 0 : i32
    return %c0_i32, %c0_i32_0 : i32, i32
  }
  func.func @transform_5(%arg0: i32) -> (i32, i32) {
    %c0_i32 = arith.constant 0 : i32
    %c0_i32_0 = arith.constant 0 : i32
    %c0_i32_1 = arith.constant 0 : i32
    return %c0_i32, %c0_i32_0 : i32, i32
  }
  func.func @transform_6(%arg0: i32) -> (i32, i32) {
    %c0_i32 = arith.constant 0 : i32
    %c0_i32_0 = arith.constant 0 : i32
    %c0_i32_1 = arith.constant 0 : i32
    return %c0_i32, %c0_i32_0 : i32, i32
  }
  func.func @transform_7(%arg0: i32) -> (i32, i32) {
    %c0_i32 = arith.constant 0 : i32
    %c0_i32_0 = arith.constant 0 : i32
    %c0_i32_1 = arith.constant 0 : i32
    return %c0_i32, %c0_i32_0 : i32, i32
  }
  func.func @transform_8(%arg0: i32) -> (i32, i32) {
    %c0_i32 = arith.constant 0 : i32
    %c0_i32_0 = arith.constant 0 : i32
    %c0_i32_1 = arith.constant 0 : i32
    return %c0_i32, %c0_i32_0 : i32, i32
  }
  func.func @transform_9(%arg0: i32) -> (i32, i32) {
    %c0_i32 = arith.constant 0 : i32
    %c0_i32_0 = arith.constant 0 : i32
    return %arg0, %c0_i32 : i32, i32
  }
}

</mosaic_0001>

<llo_original>
// kernel: tpu_custom_call.1
$region0: #{tpu_custom_call.1}
  #allocation0 [shape = 'u32[]', space=smem, size = 0x4, offset = 0x4, fixed_abs, tag = 'smem constant byte address 0x4 - core index']
  #allocation1 [shape = 'u32[144,128]{1,0:T(1,128)}', space=vmem, size = 0x12000, scoped, tag = 'internal scratch']
  #allocation2 [shape = 'bf16[8,16,512]{2,1,0:T(16,128)(2,1)}', space=vmem, size = 0x20000, scoped, tag = 'scratch operand']
  #allocation3 [shape = 'bf16[8,16,512]{2,1,0:T(16,128)(2,1)}', space=vmem, size = 0x20000, scoped, tag = 'scratch operand']
  %s0 = inlined_call_operand.vmem [shape: s32[16,1], index: 0, kind: input, shape index: {}]
  %s1 = inlined_call_operand.hbm [shape: bf16[8,16,128], index: 1, kind: input, shape index: {}]
  %s2 = inlined_call_operand.hbm [shape: bf16[128,1024], index: 2, kind: input, shape index: {}]
  %s3 = inlined_call_operand.vmem [shape: f32[1,1024], index: 3, kind: input, shape index: {}]
  %s4 = inlined_call_operand.hbm [shape: bf16[128,512], index: 4, kind: input, shape index: {}]
  %s5 = inlined_call_operand.hbm [shape: bf16[128,512], index: 5, kind: input, shape index: {}]
  %s6 = inlined_call_operand.hbm [shape: bf16[128,128], index: 6, kind: input, shape index: {}]
  %s7 = inlined_call_operand.hbm [shape: bf16[128,128], index: 7, kind: input, shape index: {}]
  %s8 = inlined_call_operand.vmem [shape: f32[1,128], index: 8, kind: input, shape index: {}]
  %s9 = inlined_call_operand.hbm [shape: f32[16,128], index: 9, kind: output, shape index: {}]
  %s10 = sld [smem:[#allocation0]]
  $region70: #{tpu_custom_call.1} parent=0
    _
  %s12 = ssub.s32 1, %s10
  %s13 = scalar_select 0, %s12, %s10
  $region1: #{tpu_custom_call.1} parent=0
    #allocation4 [shape = 'u8[32768]{0}', space=vmem, size = 0x8000, scoped, tag = 'input window, operand 1, single buffered']
    #allocation5 [shape = 's32[1]{0}', space=sflag, size = 0x4, scoped, tag = 'scoped memory for tpu_custom_call.1']
    #allocation6 [shape = 's32[1]{0}', space=sflag, size = 0x4, scoped, tag = 'scoped memory for tpu_custom_call.1']
    #allocation7 [shape = 'u8[262144]{0}', space=vmem, size = 0x40000, scoped, tag = 'input window, operand 2, single buffered']
    #allocation8 [shape = 's32[1]{0}', space=sflag, size = 0x4, scoped, tag = 'scoped memory for tpu_custom_call.1']
    #allocation9 [shape = 'u8[131072]{0}', space=vmem, size = 0x20000, scoped, tag = 'input window, operand 4, single buffered']
    #allocation10 [shape = 'u8[131072]{0}', space=vmem, size = 0x20000, scoped, tag = 'input window, operand 5, single buffered']
    #allocation11 [shape = 's32[1]{0}', space=sflag, size = 0x4, scoped, tag = 'scoped memory for tpu_custom_call.1']
    #allocation12 [shape = 'u8[32768]{0}', space=vmem, size = 0x8000, scoped, tag = 'input window, operand 6, single buffered']
    #allocation13 [shape = 'u8[32768]{0}', space=vmem, size = 0x8000, scoped, tag = 'input window, operand 7, single buffered']
    #allocation14 [shape = 's32[1]{0}', space=sflag, size = 0x4, scoped, tag = 'scoped memory for tpu_custom_call.1']
    #allocation15 [shape = 'u8[8192]{0}', space=vmem, size = 0x2000, scoped, tag = 'output window, operand 0, single buffered']
    %14 = vsyncpa [#allocation5], 0
    %15 = vsyncpa [#allocation8], 0
    %16 = vsyncpa [#allocation11], 0
    %17 = vsyncpa [#allocation14], 0
    %18 = vsyncpa [#allocation6], 0
    // Predicated region
    $region2: #{tpu_custom_call.1} parent=1 // pred_check
      _
    $region3: #{tpu_custom_call.1} parent=1 // pred_check_branch
      %20 = sbr.rel (0) target = $region5
    $region4: #{tpu_custom_call.1} parent=1 // pred_region
      _
    $region5: #{tpu_custom_call.1} parent=1 // pred_fallthru
      _
    // Predicated region
    $region6: #{tpu_custom_call.1} parent=1 // pred_check
      _
    $region7: #{tpu_custom_call.1} parent=1 // pred_check_branch
      %22 = sbr.rel (0) target = $region9
    $region8: #{tpu_custom_call.1} parent=1 // pred_region
      %s24 = ssub.s32 1024, 1024
      %25 = vsyncadd [#allocation5], %s24
      %s26 = sshll.u32 [#allocation4], 4
      %s27 = int_to_ptr.vmem [resolvable:$true] %s26
      %32 = dma.hbm_to_vmem [thread:$0]  %s1, 1024, %s27, [#allocation5], 64, 64, 4
    $region9: #{tpu_custom_call.1} parent=1 // pred_fallthru
      _
    // Predicated region
    $region10: #{tpu_custom_call.1} parent=1 // pred_check
      _
    $region11: #{tpu_custom_call.1} parent=1 // pred_check_branch
      %34 = sbr.rel (0) target = $region13
    $region12: #{tpu_custom_call.1} parent=1 // pred_region
      %s36 = ssub.s32 8192, 8192
      %37 = vsyncadd [#allocation8], %s36
      %s38 = sshll.u32 [#allocation7], 4
      %s39 = int_to_ptr.vmem [resolvable:$true] %s38
      %44 = dma.hbm_to_vmem [thread:$0]  %s2, 8192, %s39, [#allocation8], 512, 512, 32
    $region13: #{tpu_custom_call.1} parent=1 // pred_fallthru
      _
    // Predicated region
    $region14: #{tpu_custom_call.1} parent=1 // pred_check
      _
    $region15: #{tpu_custom_call.1} parent=1 // pred_check_branch
      %46 = sbr.rel (0) target = $region17
    $region16: #{tpu_custom_call.1} parent=1 // pred_region
      _
    $region17: #{tpu_custom_call.1} parent=1 // pred_fallthru
      _
    // Predicated region
    $region18: #{tpu_custom_call.1} parent=1 // pred_check
      _
    $region19: #{tpu_custom_call.1} parent=1 // pred_check_branch
      %48 = sbr.rel (0) target = $region21
    $region20: #{tpu_custom_call.1} parent=1 // pred_region
      %s50 = ssub.s32 4096, 4096
      %51 = vsyncadd [#allocation8], %s50
      %s52 = sshll.u32 [#allocation9], 4
      %s53 = int_to_ptr.vmem [resolvable:$true] %s52
      %58 = dma.hbm_to_vmem [thread:$0]  %s4, 4096, %s53, [#allocation8], 256, 256, 16
    $region21: #{tpu_custom_call.1} parent=1 // pred_fallthru
      _
    // Predicated region
    $region22: #{tpu_custom_call.1} parent=1 // pred_check
      _
    $region23: #{tpu_custom_call.1} parent=1 // pred_check_branch
      %60 = sbr.rel (0) target = $region25
    $region24: #{tpu_custom_call.1} parent=1 // pred_region
      %s62 = ssub.s32 4096, 4096
      %63 = vsyncadd [#allocation11], %s62
      %s64 = sshll.u32 [#allocation10], 4
      %s65 = int_to_ptr.vmem [resolvable:$true] %s64
      %70 = dma.hbm_to_vmem [thread:$0]  %s5, 4096, %s65, [#allocation11], 256, 256, 16
    $region25: #{tpu_custom_call.1} parent=1 // pred_fallthru
      _
    // Predicated region
    $region26: #{tpu_custom_call.1} parent=1 // pred_check
      _
    $region27: #{tpu_custom_call.1} parent=1 // pred_check_branch
      %72 = sbr.rel (0) target = $region29
    $region28: #{tpu_custom_call.1} parent=1 // pred_region
      %s74 = ssub.s32 1024, 1024
      %75 = vsyncadd [#allocation11], %s74
      %s76 = sshll.u32 [#allocation12], 4
      %s77 = int_to_ptr.vmem [resolvable:$true] %s76
      %82 = dma.hbm_to_vmem [thread:$0]  %s6, 1024, %s77, [#allocation11], 64, 64, 4
    $region29: #{tpu_custom_call.1} parent=1 // pred_fallthru
      _
    // Predicated region
    $region30: #{tpu_custom_call.1} parent=1 // pred_check
      _
    $region31: #{tpu_custom_call.1} parent=1 // pred_check_branch
      %84 = sbr.rel (0) target = $region33
    $region32: #{tpu_custom_call.1} parent=1 // pred_region
      %s86 = ssub.s32 1024, 1024
      %87 = vsyncadd [#allocation14], %s86
      %s88 = sshll.u32 [#allocation13], 4
      %s89 = int_to_ptr.vmem [resolvable:$true] %s88
      %94 = dma.hbm_to_vmem [thread:$0]  %s7, 1024, %s89, [#allocation14], 64, 64, 4
    $region33: #{tpu_custom_call.1} parent=1 // pred_fallthru
      _
    // Predicated region
    $region34: #{tpu_custom_call.1} parent=1 // pred_check
      _
    $region35: #{tpu_custom_call.1} parent=1 // pred_check_branch
      %96 = sbr.rel (0) target = $region37
    $region36: #{tpu_custom_call.1} parent=1 // pred_region
      _
    $region37: #{tpu_custom_call.1} parent=1 // pred_fallthru
      _
    // Predicated region
    $region38: #{tpu_custom_call.1} parent=1 // pred_check
      _
    $region39: #{tpu_custom_call.1} parent=1 // pred_check_branch
      %98 = sbr.rel (0) target = $region41
    $region40: #{tpu_custom_call.1} parent=1 // pred_region
      %99 = dma.done [#allocation5], 1024
    $region41: #{tpu_custom_call.1} parent=1 // pred_fallthru
      _
    // Predicated region
    $region42: #{tpu_custom_call.1} parent=1 // pred_check
      _
    $region43: #{tpu_custom_call.1} parent=1 // pred_check_branch
      %101 = sbr.rel (0) target = $region45
    $region44: #{tpu_custom_call.1} parent=1 // pred_region
      %102 = dma.done [#allocation8], 8192
    $region45: #{tpu_custom_call.1} parent=1 // pred_fallthru
      _
    // Predicated region
    $region46: #{tpu_custom_call.1} parent=1 // pred_check
      _
    $region47: #{tpu_custom_call.1} parent=1 // pred_check_branch
      %104 = sbr.rel (0) target = $region49
    $region48: #{tpu_custom_call.1} parent=1 // pred_region
      %105 = dma.done [#allocation8], 4096
    $region49: #{tpu_custom_call.1} parent=1 // pred_fallthru
      _
    // Predicated region
    $region50: #{tpu_custom_call.1} parent=1 // pred_check
      _
    $region51: #{tpu_custom_call.1} parent=1 // pred_check_branch
      %107 = sbr.rel (0) target = $region53
    $region52: #{tpu_custom_call.1} parent=1 // pred_region
      %108 = dma.done [#allocation11], 4096
    $region53: #{tpu_custom_call.1} parent=1 // pred_fallthru
      _
    // Predicated region
    $region54: #{tpu_custom_call.1} parent=1 // pred_check
      _
    $region55: #{tpu_custom_call.1} parent=1 // pred_check_branch
      %110 = sbr.rel (0) target = $region57
    $region56: #{tpu_custom_call.1} parent=1 // pred_region
      %111 = dma.done [#allocation11], 1024
    $region57: #{tpu_custom_call.1} parent=1 // pred_fallthru
      _
    // Predicated region
    $region58: #{tpu_custom_call.1} parent=1 // pred_check
      _
    $region59: #{tpu_custom_call.1} parent=1 // pred_check_branch
      %113 = sbr.rel (0) target = $region61
    $region60: #{tpu_custom_call.1} parent=1 // pred_region
      %114 = dma.done [#allocation14], 1024
    $region61: #{tpu_custom_call.1} parent=1 // pred_fallthru
      _
    %v116 = vld [vmem:[#allocation4] sm:$0xf]
    %v117 = vld [vmem:[#allocation4 + $0x4] sm:$0xf]
    %v118 = vld [vmem:[#allocation4 + $0x8] sm:$0xf]
    %v119 = vld [vmem:[#allocation4 + $0xc] sm:$0xf]
    %v120 = vld [vmem:[#allocation4 + $0x10] sm:$0xf]
    %v121 = vld [vmem:[#allocation4 + $0x14] sm:$0xf]
    %v122 = vld [vmem:[#allocation4 + $0x18] sm:$0xf]
    %v123 = vld [vmem:[#allocation4 + $0x1c] sm:$0xf]
    %v124 = vld [vmem:[#allocation4 + $0x20] sm:$0xf]
    %v125 = vld [vmem:[#allocation4 + $0x24] sm:$0xf]
    %v126 = vld [vmem:[#allocation4 + $0x28] sm:$0xf]
    %v127 = vld [vmem:[#allocation4 + $0x2c] sm:$0xf]
    %v128 = vld [vmem:[#allocation4 + $0x30] sm:$0xf]
    %v129 = vld [vmem:[#allocation4 + $0x34] sm:$0xf]
    %v130 = vld [vmem:[#allocation4 + $0x38] sm:$0xf]
    %v131 = vld [vmem:[#allocation4 + $0x3c] sm:$0xf]
    %v132 = vld [vmem:[#allocation7] sm:$0xff]
    %v133 = vld [vmem:[#allocation7 + $0x8] sm:$0xff]
    %v134 = vld [vmem:[#allocation7 + $0x10] sm:$0xff]
    %v135 = vld [vmem:[#allocation7 + $0x18] sm:$0xff]
    %v136 = vld [vmem:[#allocation7 + $0x20] sm:$0xff]
    %v137 = vld [vmem:[#allocation7 + $0x28] sm:$0xff]
    %v138 = vld [vmem:[#allocation7 + $0x30] sm:$0xff]
    %v139 = vld [vmem:[#allocation7 + $0x38] sm:$0xff]
    %v140 = vld [vmem:[#allocation7 + $0x40] sm:$0xff]
    %v141 = vld [vmem:[#allocation7 + $0x48] sm:$0xff]
    %v142 = vld [vmem:[#allocation7 + $0x50] sm:$0xff]
    %v143 = vld [vmem:[#allocation7 + $0x58] sm:$0xff]
    %v144 = vld [vmem:[#allocation7 + $0x60] sm:$0xff]
    %v145 = vld [vmem:[#allocation7 + $0x68] sm:$0xff]
    %v146 = vld [vmem:[#allocation7 + $0x70] sm:$0xff]
    %v147 = vld [vmem:[#allocation7 + $0x78] sm:$0xff]
    %v148 = vld [vmem:[#allocation7 + $0x80] sm:$0xff]
    %v149 = vld [vmem:[#allocation7 + $0x88] sm:$0xff]
    %v150 = vld [vmem:[#allocation7 + $0x90] sm:$0xff]
    %v151 = vld [vmem:[#allocation7 + $0x98] sm:$0xff]
    %v152 = vld [vmem:[#allocation7 + $0xa0] sm:$0xff]
    %v153 = vld [vmem:[#allocation7 + $0xa8] sm:$0xff]
    %v154 = vld [vmem:[#allocation7 + $0xb0] sm:$0xff]
    %v155 = vld [vmem:[#allocation7 + $0xb8] sm:$0xff]
    %v156 = vld [vmem:[#allocation7 + $0xc0] sm:$0xff]
    %v157 = vld [vmem:[#allocation7 + $0xc8] sm:$0xff]
    %v158 = vld [vmem:[#allocation7 + $0xd0] sm:$0xff]
    %v159 = vld [vmem:[#allocation7 + $0xd8] sm:$0xff]
    %v160 = vld [vmem:[#allocation7 + $0xe0] sm:$0xff]
    %v161 = vld [vmem:[#allocation7 + $0xe8] sm:$0xff]
    %v162 = vld [vmem:[#allocation7 + $0xf0] sm:$0xff]
    %v163 = vld [vmem:[#allocation7 + $0xf8] sm:$0xff]
    %v164 = vld [vmem:[#allocation7 + $0x100] sm:$0xff]
    %v165 = vld [vmem:[#allocation7 + $0x108] sm:$0xff]
    %v166 = vld [vmem:[#allocation7 + $0x110] sm:$0xff]
    %v167 = vld [vmem:[#allocation7 + $0x118] sm:$0xff]
    %v168 = vld [vmem:[#allocation7 + $0x120] sm:$0xff]
    %v169 = vld [vmem:[#allocation7 + $0x128] sm:$0xff]
    %v170 = vld [vmem:[#allocation7 + $0x130] sm:$0xff]
    %v171 = vld [vmem:[#allocation7 + $0x138] sm:$0xff]
    %v172 = vld [vmem:[#allocation7 + $0x140] sm:$0xff]
    %v173 = vld [vmem:[#allocation7 + $0x148] sm:$0xff]
    %v174 = vld [vmem:[#allocation7 + $0x150] sm:$0xff]
    %v175 = vld [vmem:[#allocation7 + $0x158] sm:$0xff]
    %v176 = vld [vmem:[#allocation7 + $0x160] sm:$0xff]
    %v177 = vld [vmem:[#allocation7 + $0x168] sm:$0xff]
    %v178 = vld [vmem:[#allocation7 + $0x170] sm:$0xff]
    %v179 = vld [vmem:[#allocation7 + $0x178] sm:$0xff]
    %v180 = vld [vmem:[#allocation7 + $0x180] sm:$0xff]
    %v181 = vld [vmem:[#allocation7 + $0x188] sm:$0xff]
    %v182 = vld [vmem:[#allocation7 + $0x190] sm:$0xff]
    %v183 = vld [vmem:[#allocation7 + $0x198] sm:$0xff]
    %v184 = vld [vmem:[#allocation7 + $0x1a0] sm:$0xff]
    %v185 = vld [vmem:[#allocation7 + $0x1a8] sm:$0xff]
    %v186 = vld [vmem:[#allocation7 + $0x1b0] sm:$0xff]
    %v187 = vld [vmem:[#allocation7 + $0x1b8] sm:$0xff]
    %v188 = vld [vmem:[#allocation7 + $0x1c0] sm:$0xff]
    %v189 = vld [vmem:[#allocation7 + $0x1c8] sm:$0xff]
    %v190 = vld [vmem:[#allocation7 + $0x1d0] sm:$0xff]
    %v191 = vld [vmem:[#allocation7 + $0x1d8] sm:$0xff]
    %v192 = vld [vmem:[#allocation7 + $0x1e0] sm:$0xff]
    %v193 = vld [vmem:[#allocation7 + $0x1e8] sm:$0xff]
    %v194 = vld [vmem:[#allocation7 + $0x1f0] sm:$0xff]
    %v195 = vld [vmem:[#allocation7 + $0x1f8] sm:$0xff]
    %v196 = vld [vmem:[%s3] sm:$0xff]
    %v198 = vlaneseq
    %v199 = vshrl.u32 %v198, 7
    %v200 = vsub.s32 0, %v199
    %v201 = vrot.slane %v196, %v200
    %v202 = vlaneseq
    %v203 = vshrl.u32 %v202, 7
    %v204 = vsub.s32 1, %v203
    %v205 = vrot.slane %v196, %v204
    %v206 = vlaneseq
    %v207 = vshrl.u32 %v206, 7
    %v208 = vsub.s32 2, %v207
    %v209 = vrot.slane %v196, %v208
    %v210 = vlaneseq
    %v211 = vshrl.u32 %v210, 7
    %v212 = vsub.s32 3, %v211
    %v213 = vrot.slane %v196, %v212
    %v214 = vlaneseq
    %v215 = vshrl.u32 %v214, 7
    %v216 = vsub.s32 4, %v215
    %v217 = vrot.slane %v196, %v216
    %v218 = vlaneseq
    %v219 = vshrl.u32 %v218, 7
    %v220 = vsub.s32 5, %v219
    %v221 = vrot.slane %v196, %v220
    %v222 = vlaneseq
    %v223 = vshrl.u32 %v222, 7
    %v224 = vsub.s32 6, %v223
    %v225 = vrot.slane %v196, %v224
    %v226 = vlaneseq
    %v227 = vshrl.u32 %v226, 7
    %v228 = vsub.s32 7, %v227
    %v229 = vrot.slane %v196, %v228
    %v254 = vunpack.c.l.b16 %v116
    %v255 = vunpack.c.l.b16 %v117
    %v256 = vunpack.c.l.b16 %v118
    %v257 = vunpack.c.l.b16 %v119
    %v258 = vunpack.c.l.b16 %v120
    %v259 = vunpack.c.l.b16 %v121
    %v260 = vunpack.c.l.b16 %v122
    %v261 = vunpack.c.l.b16 %v123
    %v262 = vunpack.c.l.b16 %v124
    %v263 = vunpack.c.l.b16 %v125
    %v264 = vunpack.c.l.b16 %v126
    %v265 = vunpack.c.l.b16 %v127
    %v266 = vunpack.c.l.b16 %v128
    %v267 = vunpack.c.l.b16 %v129
    %v268 = vunpack.c.l.b16 %v130
    %v269 = vunpack.c.l.b16 %v131
    %v270 = vpack.c.b16 %v255, %v254
    %v271 = vpack.c.b16 %v257, %v256
    %v272 = vpack.c.b16 %v259, %v258
    %v273 = vpack.c.b16 %v261, %v260
    %v274 = vpack.c.b16 %v263, %v262
    %v275 = vpack.c.b16 %v265, %v264
    %v276 = vpack.c.b16 %v267, %v266
    %v277 = vpack.c.b16 %v269, %v268
    %v350 = vunpack.c.l.b16 %v132
    %v351 = vunpack.c.h.b16 %v132
    %v352 = vunpack.c.l.b16 %v133
    %v353 = vunpack.c.h.b16 %v133
    %v354 = vunpack.c.l.b16 %v134
    %v355 = vunpack.c.h.b16 %v134
    %v356 = vunpack.c.l.b16 %v135
    %v357 = vunpack.c.h.b16 %v135
    %v358 = vunpack.c.l.b16 %v136
    %v359 = vunpack.c.h.b16 %v136
    %v360 = vunpack.c.l.b16 %v137
    %v361 = vunpack.c.h.b16 %v137
    %v362 = vunpack.c.l.b16 %v138
    %v363 = vunpack.c.h.b16 %v138
    %v364 = vunpack.c.l.b16 %v139
    %v365 = vunpack.c.h.b16 %v139
    %v366 = vunpack.c.l.b16 %v140
    %v367 = vunpack.c.h.b16 %v140
    %v368 = vunpack.c.l.b16 %v141
    %v369 = vunpack.c.h.b16 %v141
    %v370 = vunpack.c.l.b16 %v142
    %v371 = vunpack.c.h.b16 %v142
    %v372 = vunpack.c.l.b16 %v143
    %v373 = vunpack.c.h.b16 %v143
    %v374 = vunpack.c.l.b16 %v144
    %v375 = vunpack.c.h.b16 %v144
    %v376 = vunpack.c.l.b16 %v145
    %v377 = vunpack.c.h.b16 %v145
    %v378 = vunpack.c.l.b16 %v146
    %v379 = vunpack.c.h.b16 %v146
    %v380 = vunpack.c.l.b16 %v147
    %v381 = vunpack.c.h.b16 %v147
    %v382 = vunpack.c.l.b16 %v148
    %v383 = vunpack.c.h.b16 %v148
    %v384 = vunpack.c.l.b16 %v149
    %v385 = vunpack.c.h.b16 %v149
    %v386 = vunpack.c.l.b16 %v150
    %v387 = vunpack.c.h.b16 %v150
    %v388 = vunpack.c.l.b16 %v151
    %v389 = vunpack.c.h.b16 %v151
    %v390 = vunpack.c.l.b16 %v152
    %v391 = vunpack.c.h.b16 %v152
    %v392 = vunpack.c.l.b16 %v153
    %v393 = vunpack.c.h.b16 %v153
    %v394 = vunpack.c.l.b16 %v154
    %v395 = vunpack.c.h.b16 %v154
    %v396 = vunpack.c.l.b16 %v155
    %v397 = vunpack.c.h.b16 %v155
    %v398 = vunpack.c.l.b16 %v156
    %v399 = vunpack.c.h.b16 %v156
    %v400 = vunpack.c.l.b16 %v157
    %v401 = vunpack.c.h.b16 %v157
    %v402 = vunpack.c.l.b16 %v158
    %v403 = vunpack.c.h.b16 %v158
    %v404 = vunpack.c.l.b16 %v159
    %v405 = vunpack.c.h.b16 %v159
    %v406 = vunpack.c.l.b16 %v160
    %v407 = vunpack.c.h.b16 %v160
    %v408 = vunpack.c.l.b16 %v161
    %v409 = vunpack.c.h.b16 %v161
    %v410 = vunpack.c.l.b16 %v162
    %v411 = vunpack.c.h.b16 %v162
    %v412 = vunpack.c.l.b16 %v163
    %v413 = vunpack.c.h.b16 %v163
    %v414 = vunpack.c.l.b16 %v164
    %v415 = vunpack.c.h.b16 %v164
    %v416 = vunpack.c.l.b16 %v165
    %v417 = vunpack.c.h.b16 %v165
    %v418 = vunpack.c.l.b16 %v166
    %v419 = vunpack.c.h.b16 %v166
    %v420 = vunpack.c.l.b16 %v167
    %v421 = vunpack.c.h.b16 %v167
    %v422 = vunpack.c.l.b16 %v168
    %v423 = vunpack.c.h.b16 %v168
    %v424 = vunpack.c.l.b16 %v169
    %v425 = vunpack.c.h.b16 %v169
    %v426 = vunpack.c.l.b16 %v170
    %v427 = vunpack.c.h.b16 %v170
    %v428 = vunpack.c.l.b16 %v171
    %v429 = vunpack.c.h.b16 %v171
    %v430 = vunpack.c.l.b16 %v172
    %v431 = vunpack.c.h.b16 %v172
    %v432 = vunpack.c.l.b16 %v173
    %v433 = vunpack.c.h.b16 %v173
    %v434 = vunpack.c.l.b16 %v174
    %v435 = vunpack.c.h.b16 %v174
    %v436 = vunpack.c.l.b16 %v175
    %v437 = vunpack.c.h.b16 %v175
    %v438 = vunpack.c.l.b16 %v176
    %v439 = vunpack.c.h.b16 %v176
    %v440 = vunpack.c.l.b16 %v177
    %v441 = vunpack.c.h.b16 %v177
    %v442 = vunpack.c.l.b16 %v178
    %v443 = vunpack.c.h.b16 %v178
    %v444 = vunpack.c.l.b16 %v179
    %v445 = vunpack.c.h.b16 %v179
    %v446 = vunpack.c.l.b16 %v180
    %v447 = vunpack.c.h.b16 %v180
    %v448 = vunpack.c.l.b16 %v181
    %v449 = vunpack.c.h.b16 %v181
    %v450 = vunpack.c.l.b16 %v182
    %v451 = vunpack.c.h.b16 %v182
    %v452 = vunpack.c.l.b16 %v183
    %v453 = vunpack.c.h.b16 %v183
    %v454 = vunpack.c.l.b16 %v184
    %v455 = vunpack.c.h.b16 %v184
    %v456 = vunpack.c.l.b16 %v185
    %v457 = vunpack.c.h.b16 %v185
    %v458 = vunpack.c.l.b16 %v186
    %v459 = vunpack.c.h.b16 %v186
    %v460 = vunpack.c.l.b16 %v187
    %v461 = vunpack.c.h.b16 %v187
    %v462 = vunpack.c.l.b16 %v188
    %v463 = vunpack.c.h.b16 %v188
    %v464 = vunpack.c.l.b16 %v189
    %v465 = vunpack.c.h.b16 %v189
    %v466 = vunpack.c.l.b16 %v190
    %v467 = vunpack.c.h.b16 %v190
    %v468 = vunpack.c.l.b16 %v191
    %v469 = vunpack.c.h.b16 %v191
    %v470 = vunpack.c.l.b16 %v192
    %v471 = vunpack.c.h.b16 %v192
    %v472 = vunpack.c.l.b16 %v193
    %v473 = vunpack.c.h.b16 %v193
    %v474 = vunpack.c.l.b16 %v194
    %v475 = vunpack.c.h.b16 %v194
    %v476 = vunpack.c.l.b16 %v195
    %v477 = vunpack.c.h.b16 %v195
    %v478 = vpack.c.b16 %v358, %v350
    %v479 = vpack.c.b16 %v359, %v351
    %v480 = vpack.c.b16 %v360, %v352
    %v481 = vpack.c.b16 %v361, %v353
    %v482 = vpack.c.b16 %v362, %v354
    %v483 = vpack.c.b16 %v363, %v355
    %v484 = vpack.c.b16 %v364, %v356
    %v485 = vpack.c.b16 %v365, %v357
    %v486 = vpack.c.b16 %v374, %v366
    %v487 = vpack.c.b16 %v375, %v367
    %v488 = vpack.c.b16 %v376, %v368
    %v489 = vpack.c.b16 %v377, %v369
    %v490 = vpack.c.b16 %v378, %v370
    %v491 = vpack.c.b16 %v379, %v371
    %v492 = vpack.c.b16 %v380, %v372
    %v493 = vpack.c.b16 %v381, %v373
    %v494 = vpack.c.b16 %v390, %v382
    %v495 = vpack.c.b16 %v391, %v383
    %v496 = vpack.c.b16 %v392, %v384
    %v497 = vpack.c.b16 %v393, %v385
    %v498 = vpack.c.b16 %v394, %v386
    %v499 = vpack.c.b16 %v395, %v387
    %v500 = vpack.c.b16 %v396, %v388
    %v501 = vpack.c.b16 %v397, %v389
    %v502 = vpack.c.b16 %v406, %v398
    %v503 = vpack.c.b16 %v407, %v399
    %v504 = vpack.c.b16 %v408, %v400
    %v505 = vpack.c.b16 %v409, %v401
    %v506 = vpack.c.b16 %v410, %v402
    %v507 = vpack.c.b16 %v411, %v403
    %v508 = vpack.c.b16 %v412, %v404
    %v509 = vpack.c.b16 %v413, %v405
    %v510 = vpack.c.b16 %v422, %v414
    %v511 = vpack.c.b16 %v423, %v415
    %v512 = vpack.c.b16 %v424, %v416
    %v513 = vpack.c.b16 %v425, %v417
    %v514 = vpack.c.b16 %v426, %v418
    %v515 = vpack.c.b16 %v427, %v419
    %v516 = vpack.c.b16 %v428, %v420
    %v517 = vpack.c.b16 %v429, %v421
    %v518 = vpack.c.b16 %v438, %v430
    %v519 = vpack.c.b16 %v439, %v431
    %v520 = vpack.c.b16 %v440, %v432
    %v521 = vpack.c.b16 %v441, %v433
    %v522 = vpack.c.b16 %v442, %v434
    %v523 = vpack.c.b16 %v443, %v435
    %v524 = vpack.c.b16 %v444, %v436
    %v525 = vpack.c.b16 %v445, %v437
    %v526 = vpack.c.b16 %v454, %v446
    %v527 = vpack.c.b16 %v455, %v447
    %v528 = vpack.c.b16 %v456, %v448
    %v529 = vpack.c.b16 %v457, %v449
    %v530 = vpack.c.b16 %v458, %v450
    %v531 = vpack.c.b16 %v459, %v451
    %v532 = vpack.c.b16 %v460, %v452
    %v533 = vpack.c.b16 %v461, %v453
    %v534 = vpack.c.b16 %v470, %v462
    %v535 = vpack.c.b16 %v471, %v463
    %v536 = vpack.c.b16 %v472, %v464
    %v537 = vpack.c.b16 %v473, %v465
    %v538 = vpack.c.b16 %v474, %v466
    %v539 = vpack.c.b16 %v475, %v467
    %v540 = vpack.c.b16 %v476, %v468
    %v541 = vpack.c.b16 %v477, %v469
    %606 = vmatprep.subr.bf16.mxu0 %v479
    %607 = vmatpush1.bf16.msra.mxu0 %v478
    %608 = vmatprep.subr.bf16.mxu0 %v487
    %609 = vmatpush1.bf16.msra.mxu0 %v486
    %610 = vmatprep.subr.bf16.mxu0 %v495
    %611 = vmatpush1.bf16.msra.mxu0 %v494
    %612 = vmatprep.subr.bf16.mxu0 %v503
    %613 = vmatpush1.bf16.msra.mxu0 %v502
    %614 = vmatprep.subr.bf16.mxu0 %v511
    %615 = vmatpush1.bf16.msra.mxu0 %v510
    %616 = vmatprep.subr.bf16.mxu0 %v519
    %617 = vmatpush1.bf16.msra.mxu0 %v518
    %618 = vmatprep.subr.bf16.mxu0 %v527
    %619 = vmatpush1.bf16.msra.mxu0 %v526
    %620 = vmatprep.subr.bf16.mxu0 %v535
    %621 = vmatpush1.bf16.msra.mxu0 %v534
    %622 = vmatprep.subr.bf16.mxu0 0
    %623 = vmatpush1.bf16.msra.mxu0 0
    %624 = vmatprep.subr.bf16.mxu0 0
    %625 = vmatpush1.bf16.msra.mxu0 0
    %626 = vmatprep.subr.bf16.mxu0 0
    %627 = vmatpush1.bf16.msra.mxu0 0
    %628 = vmatprep.subr.bf16.mxu0 0
    %629 = vmatpush1.bf16.msra.mxu0 0
    %630 = vmatprep.subr.bf16.mxu0 0
    %631 = vmatpush1.bf16.msra.mxu0 0
    %632 = vmatprep.subr.bf16.mxu0 0
    %633 = vmatpush1.bf16.msra.mxu0 0
    %634 = vmatprep.subr.bf16.mxu0 0
    %635 = vmatpush1.bf16.msra.mxu0 0
    %636 = vmatprep.subr.bf16.mxu0 0
    %637 = vmatpush1.bf16.msra.mxu0 0
    %638 = vmatprep.mubr.bf16.mxu0 0
    %639 = vmatmul.mubr.bf16.gmra.mrb[0].mxu0 %v270
    %v640 = vpop.f32.mrb[0].mxu0
    %v641 = vadd.f32 %v201, %v640
    %v642 = vpop.f32.mrb[0].mxu0
    %v643 = vadd.f32 %v205, %v642
    %v644 = vpop.f32.mrb[0].mxu0
    %v645 = vadd.f32 %v201, %v644
    %v646 = vpop.f32.mrb[0].mxu0
    %v647 = vadd.f32 %v205, %v646
    %648 = vmatprep.mubr.bf16.mxu0 0
    %649 = vmatmul.mubr.bf16.gmra.mrb[0].mxu0 %v271
    %v650 = vpop.f32.mrb[0].mxu0
    %v651 = vadd.f32 %v201, %v650
    %v652 = vpop.f32.mrb[0].mxu0
    %v653 = vadd.f32 %v205, %v652
    %v654 = vpop.f32.mrb[0].mxu0
    %v655 = vadd.f32 %v201, %v654
    %v656 = vpop.f32.mrb[0].mxu0
    %v657 = vadd.f32 %v205, %v656
    %658 = vmatprep.mubr.bf16.mxu0 0
    %659 = vmatmul.mubr.bf16.gmra.mrb[0].mxu0 %v272
    %v660 = vpop.f32.mrb[0].mxu0
    %v661 = vadd.f32 %v201, %v660
    %v662 = vpop.f32.mrb[0].mxu0
    %v663 = vadd.f32 %v205, %v662
    %v664 = vpop.f32.mrb[0].mxu0
    %v665 = vadd.f32 %v201, %v664
    %v666 = vpop.f32.mrb[0].mxu0
    %v667 = vadd.f32 %v205, %v666
    %668 = vmatprep.mubr.bf16.mxu0 0
    %669 = vmatmul.mubr.bf16.gmra.mrb[0].mxu0 %v273
    %v670 = vpop.f32.mrb[0].mxu0
    %v671 = vadd.f32 %v201, %v670
    %v672 = vpop.f32.mrb[0].mxu0
    %v673 = vadd.f32 %v205, %v672
    %v674 = vpop.f32.mrb[0].mxu0
    %v675 = vadd.f32 %v201, %v674
    %v676 = vpop.f32.mrb[0].mxu0
    %v677 = vadd.f32 %v205, %v676
    %678 = vmatprep.mubr.bf16.mxu0 0
    %679 = vmatmul.mubr.bf16.gmra.mrb[0].mxu0 %v274
    %v680 = vpop.f32.mrb[0].mxu0
    %v681 = vadd.f32 %v201, %v680
    %v682 = vpop.f32.mrb[0].mxu0
    %v683 = vadd.f32 %v205, %v682
    %v684 = vpop.f32.mrb[0].mxu0
    %v685 = vadd.f32 %v201, %v684
    %v686 = vpop.f32.mrb[0].mxu0
    %v687 = vadd.f32 %v205, %v686
    %688 = vmatprep.mubr.bf16.mxu0 0
    %689 = vmatmul.mubr.bf16.gmra.mrb[0].mxu0 %v275
    %v690 = vpop.f32.mrb[0].mxu0
    %v691 = vadd.f32 %v201, %v690
    %v692 = vpop.f32.mrb[0].mxu0
    %v693 = vadd.f32 %v205, %v692
    %v694 = vpop.f32.mrb[0].mxu0
    %v695 = vadd.f32 %v201, %v694
    %v696 = vpop.f32.mrb[0].mxu0
    %v697 = vadd.f32 %v205, %v696
    %698 = vmatprep.mubr.bf16.mxu0 0
    %699 = vmatmul.mubr.bf16.gmra.mrb[0].mxu0 %v276
    %v700 = vpop.f32.mrb[0].mxu0
    %v701 = vadd.f32 %v201, %v700
    %v702 = vpop.f32.mrb[0].mxu0
    %v703 = vadd.f32 %v205, %v702
    %v704 = vpop.f32.mrb[0].mxu0
    %v705 = vadd.f32 %v201, %v704
    %v706 = vpop.f32.mrb[0].mxu0
    %v707 = vadd.f32 %v205, %v706
    %708 = vmatprep.mubr.bf16.mxu0 0
    %709 = vmatmul.mubr.bf16.gmra.mrb[0].mxu0 %v277
    %v710 = vpop.f32.mrb[0].mxu0
    %v711 = vadd.f32 %v201, %v710
    %v712 = vpop.f32.mrb[0].mxu0
    %v713 = vadd.f32 %v205, %v712
    %v714 = vpop.f32.mrb[0].mxu0
    %v715 = vadd.f32 %v201, %v714
    %v716 = vpop.f32.mrb[0].mxu0
    %v717 = vadd.f32 %v205, %v716
    %718 = vdwg.mxu0
    %719 = vmatprep.subr.bf16.mxu0 %v481
    %720 = vmatpush1.bf16.msra.mxu0 %v480
    %721 = vmatprep.subr.bf16.mxu0 %v489
    %722 = vmatpush1.bf16.msra.mxu0 %v488
    %723 = vmatprep.subr.bf16.mxu0 %v497
    %724 = vmatpush1.bf16.msra.mxu0 %v496
    %725 = vmatprep.subr.bf16.mxu0 %v505
    %726 = vmatpush1.bf16.msra.mxu0 %v504
    %727 = vmatprep.subr.bf16.mxu0 %v513
    %728 = vmatpush1.bf16.msra.mxu0 %v512
    %729 = vmatprep.subr.bf16.mxu0 %v521
    %730 = vmatpush1.bf16.msra.mxu0 %v520
    %731 = vmatprep.subr.bf16.mxu0 %v529
    %732 = vmatpush1.bf16.msra.mxu0 %v528
    %733 = vmatprep.subr.bf16.mxu0 %v537
    %734 = vmatpush1.bf16.msra.mxu0 %v536
    %735 = vmatprep.subr.bf16.mxu0 0
    %736 = vmatpush1.bf16.msra.mxu0 0
    %737 = vmatprep.subr.bf16.mxu0 0
    %738 = vmatpush1.bf16.msra.mxu0 0
    %739 = vmatprep.subr.bf16.mxu0 0
    %740 = vmatpush1.bf16.msra.mxu0 0
    %741 = vmatprep.subr.bf16.mxu0 0
    %742 = vmatpush1.bf16.msra.mxu0 0
    %743 = vmatprep.subr.bf16.mxu0 0
    %744 = vmatpush1.bf16.msra.mxu0 0
    %745 = vmatprep.subr.bf16.mxu0 0
    %746 = vmatpush1.bf16.msra.mxu0 0
    %747 = vmatprep.subr.bf16.mxu0 0
    %748 = vmatpush1.bf16.msra.mxu0 0
    %749 = vmatprep.subr.bf16.mxu0 0
    %750 = vmatpush1.bf16.msra.mxu0 0
    %751 = vmatprep.mubr.bf16.mxu0 0
    %752 = vmatmul.mubr.bf16.gmra.mrb[0].mxu0 %v270
    %v753 = vpop.f32.mrb[0].mxu0
    %v754 = vadd.f32 %v209, %v753
    %v755 = vpop.f32.mrb[0].mxu0
    %v756 = vadd.f32 %v213, %v755
    %v757 = vpop.f32.mrb[0].mxu0
    %v758 = vadd.f32 %v209, %v757
    %v759 = vpop.f32.mrb[0].mxu0
    %v760 = vadd.f32 %v213, %v759
    %761 = vmatprep.mubr.bf16.mxu0 0
    %762 = vmatmul.mubr.bf16.gmra.mrb[0].mxu0 %v271
    %v763 = vpop.f32.mrb[0].mxu0
    %v764 = vadd.f32 %v209, %v763
    %v765 = vpop.f32.mrb[0].mxu0
    %v766 = vadd.f32 %v213, %v765
    %v767 = vpop.f32.mrb[0].mxu0
    %v768 = vadd.f32 %v209, %v767
    %v769 = vpop.f32.mrb[0].mxu0
    %v770 = vadd.f32 %v213, %v769
    %771 = vmatprep.mubr.bf16.mxu0 0
    %772 = vmatmul.mubr.bf16.gmra.mrb[0].mxu0 %v272
    %v773 = vpop.f32.mrb[0].mxu0
    %v774 = vadd.f32 %v209, %v773
    %v775 = vpop.f32.mrb[0].mxu0
    %v776 = vadd.f32 %v213, %v775
    %v777 = vpop.f32.mrb[0].mxu0
    %v778 = vadd.f32 %v209, %v777
    %v779 = vpop.f32.mrb[0].mxu0
    %v780 = vadd.f32 %v213, %v779
    %781 = vmatprep.mubr.bf16.mxu0 0
    %782 = vmatmul.mubr.bf16.gmra.mrb[0].mxu0 %v273
    %v783 = vpop.f32.mrb[0].mxu0
    %v784 = vadd.f32 %v209, %v783
    %v785 = vpop.f32.mrb[0].mxu0
    %v786 = vadd.f32 %v213, %v785
    %v787 = vpop.f32.mrb[0].mxu0
    %v788 = vadd.f32 %v209, %v787
    %v789 = vpop.f32.mrb[0].mxu0
    %v790 = vadd.f32 %v213, %v789
    %791 = vmatprep.mubr.bf16.mxu0 0
    %792 = vmatmul.mubr.bf16.gmra.mrb[0].mxu0 %v274
    %v793 = vpop.f32.mrb[0].mxu0
    %v794 = vadd.f32 %v209, %v793
    %v795 = vpop.f32.mrb[0].mxu0
    %v796 = vadd.f32 %v213, %v795
    %v797 = vpop.f32.mrb[0].mxu0
    %v798 = vadd.f32 %v209, %v797
    %v799 = vpop.f32.mrb[0].mxu0
    %v800 = vadd.f32 %v213, %v799
    %801 = vmatprep.mubr.bf16.mxu0 0
    %802 = vmatmul.mubr.bf16.gmra.mrb[0].mxu0 %v275
    %v803 = vpop.f32.mrb[0].mxu0
    %v804 = vadd.f32 %v209, %v803
    %v805 = vpop.f32.mrb[0].mxu0
    %v806 = vadd.f32 %v213, %v805
    %v807 = vpop.f32.mrb[0].mxu0
    %v808 = vadd.f32 %v209, %v807
    %v809 = vpop.f32.mrb[0].mxu0
    %v810 = vadd.f32 %v213, %v809
    %811 = vmatprep.mubr.bf16.mxu0 0
    %812 = vmatmul.mubr.bf16.gmra.mrb[0].mxu0 %v276
    %v813 = vpop.f32.mrb[0].mxu0
    %v814 = vadd.f32 %v209, %v813
    %v815 = vpop.f32.mrb[0].mxu0
    %v816 = vadd.f32 %v213, %v815
    %v817 = vpop.f32.mrb[0].mxu0
    %v818 = vadd.f32 %v209, %v817
    %v819 = vpop.f32.mrb[0].mxu0
    %v820 = vadd.f32 %v213, %v819
    %821 = vmatprep.mubr.bf16.mxu0 0
    %822 = vmatmul.mubr.bf16.gmra.mrb[0].mxu0 %v277
    %v823 = vpop.f32.mrb[0].mxu0
    %v824 = vadd.f32 %v209, %v823
    %v825 = vpop.f32.mrb[0].mxu0
    %v826 = vadd.f32 %v213, %v825
    %v827 = vpop.f32.mrb[0].mxu0
    %v828 = vadd.f32 %v209, %v827
    %v829 = vpop.f32.mrb[0].mxu0
    %v830 = vadd.f32 %v213, %v829
    %831 = vdwg.mxu0
    %832 = vmatprep.subr.bf16.mxu0 %v483
    %833 = vmatpush1.bf16.msra.mxu0 %v482
    %834 = vmatprep.subr.bf16.mxu0 %v491
    %835 = vmatpush1.bf16.msra.mxu0 %v490
    %836 = vmatprep.subr.bf16.mxu0 %v499
    %837 = vmatpush1.bf16.msra.mxu0 %v498
    %838 = vmatprep.subr.bf16.mxu0 %v507
    %839 = vmatpush1.bf16.msra.mxu0 %v506
    %840 = vmatprep.subr.bf16.mxu0 %v515
    %841 = vmatpush1.bf16.msra.mxu0 %v514
    %842 = vmatprep.subr.bf16.mxu0 %v523
    %843 = vmatpush1.bf16.msra.mxu0 %v522
    %844 = vmatprep.subr.bf16.mxu0 %v531
    %845 = vmatpush1.bf16.msra.mxu0 %v530
    %846 = vmatprep.subr.bf16.mxu0 %v539
    %847 = vmatpush1.bf16.msra.mxu0 %v538
    %848 = vmatprep.subr.bf16.mxu0 0
    %849 = vmatpush1.bf16.msra.mxu0 0
    %850 = vmatprep.subr.bf16.mxu0 0
    %851 = vmatpush1.bf16.msra.mxu0 0
    %852 = vmatprep.subr.bf16.mxu0 0
    %853 = vmatpush1.bf16.msra.mxu0 0
    %854 = vmatprep.subr.bf16.mxu0 0
    %855 = vmatpush1.bf16.msra.mxu0 0
    %856 = vmatprep.subr.bf16.mxu0 0
    %857 = vmatpush1.bf16.msra.mxu0 0
    %858 = vmatprep.subr.bf16.mxu0 0
    %859 = vmatpush1.bf16.msra.mxu0 0
    %860 = vmatprep.subr.bf16.mxu0 0
    %861 = vmatpush1.bf16.msra.mxu0 0
    %862 = vmatprep.subr.bf16.mxu0 0
    %863 = vmatpush1.bf16.msra.mxu0 0
    %864 = vmatprep.mubr.bf16.mxu0 0
    %865 = vmatmul.mubr.bf16.gmra.mrb[0].mxu0 %v270
    %v866 = vpop.f32.mrb[0].mxu0
    %v867 = vadd.f32 %v217, %v866
    %v868 = vpop.f32.mrb[0].mxu0
    %v869 = vadd.f32 %v221, %v868
    %v870 = vpop.f32.mrb[0].mxu0
    %v871 = vadd.f32 %v217, %v870
    %v872 = vpop.f32.mrb[0].mxu0
    %v873 = vadd.f32 %v221, %v872
    %874 = vmatprep.mubr.bf16.mxu0 0
    %875 = vmatmul.mubr.bf16.gmra.mrb[0].mxu0 %v271
    %v876 = vpop.f32.mrb[0].mxu0
    %v877 = vadd.f32 %v217, %v876
    %v878 = vpop.f32.mrb[0].mxu0
    %v879 = vadd.f32 %v221, %v878
    %v880 = vpop.f32.mrb[0].mxu0
    %v881 = vadd.f32 %v217, %v880
    %v882 = vpop.f32.mrb[0].mxu0
    %v883 = vadd.f32 %v221, %v882
    %884 = vmatprep.mubr.bf16.mxu0 0
    %885 = vmatmul.mubr.bf16.gmra.mrb[0].mxu0 %v272
    %v886 = vpop.f32.mrb[0].mxu0
    %v887 = vadd.f32 %v217, %v886
    %v888 = vpop.f32.mrb[0].mxu0
    %v889 = vadd.f32 %v221, %v888
    %v890 = vpop.f32.mrb[0].mxu0
    %v891 = vadd.f32 %v217, %v890
    %v892 = vpop.f32.mrb[0].mxu0
    %v893 = vadd.f32 %v221, %v892
    %894 = vmatprep.mubr.bf16.mxu0 0
    %895 = vmatmul.mubr.bf16.gmra.mrb[0].mxu0 %v273
    %v896 = vpop.f32.mrb[0].mxu0
    %v897 = vadd.f32 %v217, %v896
    %v898 = vpop.f32.mrb[0].mxu0
    %v899 = vadd.f32 %v221, %v898
    %v900 = vpop.f32.mrb[0].mxu0
    %v901 = vadd.f32 %v217, %v900
    %v902 = vpop.f32.mrb[0].mxu0
    %v903 = vadd.f32 %v221, %v902
    %904 = vmatprep.mubr.bf16.mxu0 0
    %905 = vmatmul.mubr.bf16.gmra.mrb[0].mxu0 %v274
    %v906 = vpop.f32.mrb[0].mxu0
    %v907 = vadd.f32 %v217, %v906
    %v908 = vpop.f32.mrb[0].mxu0
    %v909 = vadd.f32 %v221, %v908
    %v910 = vpop.f32.mrb[0].mxu0
    %v911 = vadd.f32 %v217, %v910
    %v912 = vpop.f32.mrb[0].mxu0
    %v913 = vadd.f32 %v221, %v912
    %914 = vmatprep.mubr.bf16.mxu0 0
    %915 = vmatmul.mubr.bf16.gmra.mrb[0].mxu0 %v275
    %v916 = vpop.f32.mrb[0].mxu0
    %v917 = vadd.f32 %v217, %v916
    %v918 = vpop.f32.mrb[0].mxu0
    %v919 = vadd.f32 %v221, %v918
    %v920 = vpop.f32.mrb[0].mxu0
    %v921 = vadd.f32 %v217, %v920
    %v922 = vpop.f32.mrb[0].mxu0
    %v923 = vadd.f32 %v221, %v922
    %924 = vmatprep.mubr.bf16.mxu0 0
    %925 = vmatmul.mubr.bf16.gmra.mrb[0].mxu0 %v276
    %v926 = vpop.f32.mrb[0].mxu0
    %v927 = vadd.f32 %v217, %v926
    %v928 = vpop.f32.mrb[0].mxu0
    %v929 = vadd.f32 %v221, %v928
    %v930 = vpop.f32.mrb[0].mxu0
    %v931 = vadd.f32 %v217, %v930
    %v932 = vpop.f32.mrb[0].mxu0
    %v933 = vadd.f32 %v221, %v932
    %934 = vmatprep.mubr.bf16.mxu0 0
    %935 = vmatmul.mubr.bf16.gmra.mrb[0].mxu0 %v277
    %v936 = vpop.f32.mrb[0].mxu0
    %v937 = vadd.f32 %v217, %v936
    %v938 = vpop.f32.mrb[0].mxu0
    %v939 = vadd.f32 %v221, %v938
    %v940 = vpop.f32.mrb[0].mxu0
    %v941 = vadd.f32 %v217, %v940
    %v942 = vpop.f32.mrb[0].mxu0
    %v943 = vadd.f32 %v221, %v942
    %944 = vdwg.mxu0
    %945 = vmatprep.subr.bf16.mxu0 %v485
    %946 = vmatpush1.bf16.msra.mxu0 %v484
    %947 = vmatprep.subr.bf16.mxu0 %v493
    %948 = vmatpush1.bf16.msra.mxu0 %v492
    %949 = vmatprep.subr.bf16.mxu0 %v501
    %950 = vmatpush1.bf16.msra.mxu0 %v500
    %951 = vmatprep.subr.bf16.mxu0 %v509
    %952 = vmatpush1.bf16.msra.mxu0 %v508
    %953 = vmatprep.subr.bf16.mxu0 %v517
    %954 = vmatpush1.bf16.msra.mxu0 %v516
    %955 = vmatprep.subr.bf16.mxu0 %v525
    %956 = vmatpush1.bf16.msra.mxu0 %v524
    %957 = vmatprep.subr.bf16.mxu0 %v533
    %958 = vmatpush1.bf16.msra.mxu0 %v532
    %959 = vmatprep.subr.bf16.mxu0 %v541
    %960 = vmatpush1.bf16.msra.mxu0 %v540
    %961 = vmatprep.subr.bf16.mxu0 0
    %962 = vmatpush1.bf16.msra.mxu0 0
    %963 = vmatprep.subr.bf16.mxu0 0
    %964 = vmatpush1.bf16.msra.mxu0 0
    %965 = vmatprep.subr.bf16.mxu0 0
    %966 = vmatpush1.bf16.msra.mxu0 0
    %967 = vmatprep.subr.bf16.mxu0 0
    %968 = vmatpush1.bf16.msra.mxu0 0
    %969 = vmatprep.subr.bf16.mxu0 0
    %970 = vmatpush1.bf16.msra.mxu0 0
    %971 = vmatprep.subr.bf16.mxu0 0
    %972 = vmatpush1.bf16.msra.mxu0 0
    %973 = vmatprep.subr.bf16.mxu0 0
    %974 = vmatpush1.bf16.msra.mxu0 0
    %975 = vmatprep.subr.bf16.mxu0 0
    %976 = vmatpush1.bf16.msra.mxu0 0
    %977 = vmatprep.mubr.bf16.mxu0 0
    %978 = vmatmul.mubr.bf16.gmra.mrb[0].mxu0 %v270
    %v979 = vpop.f32.mrb[0].mxu0
    %v980 = vadd.f32 %v225, %v979
    %v981 = vpop.f32.mrb[0].mxu0
    %v982 = vadd.f32 %v229, %v981
    %v983 = vpop.f32.mrb[0].mxu0
    %v984 = vadd.f32 %v225, %v983
    %v985 = vpop.f32.mrb[0].mxu0
    %v986 = vadd.f32 %v229, %v985
    %987 = vmatprep.mubr.bf16.mxu0 0
    %988 = vmatmul.mubr.bf16.gmra.mrb[0].mxu0 %v271
    %v989 = vpop.f32.mrb[0].mxu0
    %v990 = vadd.f32 %v225, %v989
    %v991 = vpop.f32.mrb[0].mxu0
    %v992 = vadd.f32 %v229, %v991
    %v993 = vpop.f32.mrb[0].mxu0
    %v994 = vadd.f32 %v225, %v993
    %v995 = vpop.f32.mrb[0].mxu0
    %v996 = vadd.f32 %v229, %v995
    %997 = vmatprep.mubr.bf16.mxu0 0
    %998 = vmatmul.mubr.bf16.gmra.mrb[0].mxu0 %v272
    %v999 = vpop.f32.mrb[0].mxu0
    %v1000 = vadd.f32 %v225, %v999
    %v1001 = vpop.f32.mrb[0].mxu0
    %v1002 = vadd.f32 %v229, %v1001
    %v1003 = vpop.f32.mrb[0].mxu0
    %v1004 = vadd.f32 %v225, %v1003
    %v1005 = vpop.f32.mrb[0].mxu0
    %v1006 = vadd.f32 %v229, %v1005
    %1007 = vmatprep.mubr.bf16.mxu0 0
    %1008 = vmatmul.mubr.bf16.gmra.mrb[0].mxu0 %v273
    %v1009 = vpop.f32.mrb[0].mxu0
    %v1010 = vadd.f32 %v225, %v1009
    %v1011 = vpop.f32.mrb[0].mxu0
    %v1012 = vadd.f32 %v229, %v1011
    %v1013 = vpop.f32.mrb[0].mxu0
    %v1014 = vadd.f32 %v225, %v1013
    %v1015 = vpop.f32.mrb[0].mxu0
    %v1016 = vadd.f32 %v229, %v1015
    %1017 = vmatprep.mubr.bf16.mxu0 0
    %1018 = vmatmul.mubr.bf16.gmra.mrb[0].mxu0 %v274
    %v1019 = vpop.f32.mrb[0].mxu0
    %v1020 = vadd.f32 %v225, %v1019
    %v1021 = vpop.f32.mrb[0].mxu0
    %v1022 = vadd.f32 %v229, %v1021
    %v1023 = vpop.f32.mrb[0].mxu0
    %v1024 = vadd.f32 %v225, %v1023
    %v1025 = vpop.f32.mrb[0].mxu0
    %v1026 = vadd.f32 %v229, %v1025
    %1027 = vmatprep.mubr.bf16.mxu0 0
    %1028 = vmatmul.mubr.bf16.gmra.mrb[0].mxu0 %v275
    %v1029 = vpop.f32.mrb[0].mxu0
    %v1030 = vadd.f32 %v225, %v1029
    %v1031 = vpop.f32.mrb[0].mxu0
    %v1032 = vadd.f32 %v229, %v1031
    %v1033 = vpop.f32.mrb[0].mxu0
    %v1034 = vadd.f32 %v225, %v1033
    %v1035 = vpop.f32.mrb[0].mxu0
    %v1036 = vadd.f32 %v229, %v1035
    %1037 = vmatprep.mubr.bf16.mxu0 0
    %1038 = vmatmul.mubr.bf16.gmra.mrb[0].mxu0 %v276
    %v1039 = vpop.f32.mrb[0].mxu0
    %v1040 = vadd.f32 %v225, %v1039
    %v1041 = vpop.f32.mrb[0].mxu0
    %v1042 = vadd.f32 %v229, %v1041
    %v1043 = vpop.f32.mrb[0].mxu0
    %v1044 = vadd.f32 %v225, %v1043
    %v1045 = vpop.f32.mrb[0].mxu0
    %v1046 = vadd.f32 %v229, %v1045
    %1047 = vmatprep.mubr.bf16.mxu0 0
    %1048 = vmatmul.mubr.bf16.gmra.mrb[0].mxu0 %v277
    %v1049 = vpop.f32.mrb[0].mxu0
    %v1050 = vadd.f32 %v225, %v1049
    %v1051 = vpop.f32.mrb[0].mxu0
    %v1052 = vadd.f32 %v229, %v1051
    %v1053 = vpop.f32.mrb[0].mxu0
    %v1054 = vadd.f32 %v225, %v1053
    %v1055 = vpop.f32.mrb[0].mxu0
    %v1056 = vadd.f32 %v229, %v1055
    %1057 = vdwg.mxu0
    %v1058 = vpack.c.bf16 %v645, %v641
    %v1059 = vpack.c.bf16 %v647, %v643
    %v1060 = vpack.c.bf16 %v758, %v754
    %v1061 = vpack.c.bf16 %v760, %v756
    %v1062 = vpack.c.bf16 %v871, %v867
    %v1063 = vpack.c.bf16 %v873, %v869
    %v1064 = vpack.c.bf16 %v984, %v980
    %v1065 = vpack.c.bf16 %v986, %v982
    %v1066 = vpack.c.bf16 %v655, %v651
    %v1067 = vpack.c.bf16 %v657, %v653
    %v1068 = vpack.c.bf16 %v768, %v764
    %v1069 = vpack.c.bf16 %v770, %v766
    %v1070 = vpack.c.bf16 %v881, %v877
    %v1071 = vpack.c.bf16 %v883, %v879
    %v1072 = vpack.c.bf16 %v994, %v990
    %v1073 = vpack.c.bf16 %v996, %v992
    %v1074 = vpack.c.bf16 %v665, %v661
    %v1075 = vpack.c.bf16 %v667, %v663
    %v1076 = vpack.c.bf16 %v778, %v774
    %v1077 = vpack.c.bf16 %v780, %v776
    %v1078 = vpack.c.bf16 %v891, %v887
    %v1079 = vpack.c.bf16 %v893, %v889
    %v1080 = vpack.c.bf16 %v1004, %v1000
    %v1081 = vpack.c.bf16 %v1006, %v1002
    %v1082 = vpack.c.bf16 %v675, %v671
    %v1083 = vpack.c.bf16 %v677, %v673
    %v1084 = vpack.c.bf16 %v788, %v784
    %v1085 = vpack.c.bf16 %v790, %v786
    %v1086 = vpack.c.bf16 %v901, %v897
    %v1087 = vpack.c.bf16 %v903, %v899
    %v1088 = vpack.c.bf16 %v1014, %v1010
    %v1089 = vpack.c.bf16 %v1016, %v1012
    %v1090 = vpack.c.bf16 %v685, %v681
    %v1091 = vpack.c.bf16 %v687, %v683
    %v1092 = vpack.c.bf16 %v798, %v794
    %v1093 = vpack.c.bf16 %v800, %v796
    %v1094 = vpack.c.bf16 %v911, %v907
    %v1095 = vpack.c.bf16 %v913, %v909
    %v1096 = vpack.c.bf16 %v1024, %v1020
    %v1097 = vpack.c.bf16 %v1026, %v1022
    %v1098 = vpack.c.bf16 %v695, %v691
    %v1099 = vpack.c.bf16 %v697, %v693
    %v1100 = vpack.c.bf16 %v808, %v804
    %v1101 = vpack.c.bf16 %v810, %v806
    %v1102 = vpack.c.bf16 %v921, %v917
    %v1103 = vpack.c.bf16 %v923, %v919
    %v1104 = vpack.c.bf16 %v1034, %v1030
    %v1105 = vpack.c.bf16 %v1036, %v1032
    %v1106 = vpack.c.bf16 %v705, %v701
    %v1107 = vpack.c.bf16 %v707, %v703
    %v1108 = vpack.c.bf16 %v818, %v814
    %v1109 = vpack.c.bf16 %v820, %v816
    %v1110 = vpack.c.bf16 %v931, %v927
    %v1111 = vpack.c.bf16 %v933, %v929
    %v1112 = vpack.c.bf16 %v1044, %v1040
    %v1113 = vpack.c.bf16 %v1046, %v1042
    %v1114 = vpack.c.bf16 %v715, %v711
    %v1115 = vpack.c.bf16 %v717, %v713
    %v1116 = vpack.c.bf16 %v828, %v824
    %v1117 = vpack.c.bf16 %v830, %v826
    %v1118 = vpack.c.bf16 %v941, %v937
    %v1119 = vpack.c.bf16 %v943, %v939
    %v1120 = vpack.c.bf16 %v1054, %v1050
    %v1121 = vpack.c.bf16 %v1056, %v1052
    %1122 = vst [vmem:[#allocation2] sm:$0xff] %v1058
    %1123 = vst [vmem:[#allocation2 + $0x8] sm:$0xff] %v1059
    %1124 = vst [vmem:[#allocation2 + $0x10] sm:$0xff] %v1060
    %1125 = vst [vmem:[#allocation2 + $0x18] sm:$0xff] %v1061
    %1126 = vst [vmem:[#allocation2 + $0x20] sm:$0xff] %v1066
    %1127 = vst [vmem:[#allocation2 + $0x28] sm:$0xff] %v1067
    %1128 = vst [vmem:[#allocation2 + $0x30] sm:$0xff] %v1068
    %1129 = vst [vmem:[#allocation2 + $0x38] sm:$0xff] %v1069
    %1130 = vst [vmem:[#allocation2 + $0x40] sm:$0xff] %v1074
    %1131 = vst [vmem:[#allocation2 + $0x48] sm:$0xff] %v1075
    %1132 = vst [vmem:[#allocation2 + $0x50] sm:$0xff] %v1076
    %1133 = vst [vmem:[#allocation2 + $0x58] sm:$0xff] %v1077
    %1134 = vst [vmem:[#allocation2 + $0x60] sm:$0xff] %v1082
    %1135 = vst [vmem:[#allocation2 + $0x68] sm:$0xff] %v1083
    %1136 = vst [vmem:[#allocation2 + $0x70] sm:$0xff] %v1084
    %1137 = vst [vmem:[#allocation2 + $0x78] sm:$0xff] %v1085
    %1138 = vst [vmem:[#allocation2 + $0x80] sm:$0xff] %v1090
    %1139 = vst [vmem:[#allocation2 + $0x88] sm:$0xff] %v1091
    %1140 = vst [vmem:[#allocation2 + $0x90] sm:$0xff] %v1092
    %1141 = vst [vmem:[#allocation2 + $0x98] sm:$0xff] %v1093
    %1142 = vst [vmem:[#allocation2 + $0xa0] sm:$0xff] %v1098
    %1143 = vst [vmem:[#allocation2 + $0xa8] sm:$0xff] %v1099
    %1144 = vst [vmem:[#allocation2 + $0xb0] sm:$0xff] %v1100
    %1145 = vst [vmem:[#allocation2 + $0xb8] sm:$0xff] %v1101
    %1146 = vst [vmem:[#allocation2 + $0xc0] sm:$0xff] %v1106
    %1147 = vst [vmem:[#allocation2 + $0xc8] sm:$0xff] %v1107
    %1148 = vst [vmem:[#allocation2 + $0xd0] sm:$0xff] %v1108
    %1149 = vst [vmem:[#allocation2 + $0xd8] sm:$0xff] %v1109
    %1150 = vst [vmem:[#allocation2 + $0xe0] sm:$0xff] %v1114
    %1151 = vst [vmem:[#allocation2 + $0xe8] sm:$0xff] %v1115
    %1152 = vst [vmem:[#allocation2 + $0xf0] sm:$0xff] %v1116
    %1153 = vst [vmem:[#allocation2 + $0xf8] sm:$0xff] %v1117
    %1154 = vst [vmem:[#allocation3] sm:$0xff] %v1062
    %1155 = vst [vmem:[#allocation3 + $0x8] sm:$0xff] %v1063
    %1156 = vst [vmem:[#allocation3 + $0x10] sm:$0xff] %v1064
    %1157 = vst [vmem:[#allocation3 + $0x18] sm:$0xff] %v1065
    %1158 = vst [vmem:[#allocation3 + $0x20] sm:$0xff] %v1070
    %1159 = vst [vmem:[#allocation3 + $0x28] sm:$0xff] %v1071
    %1160 = vst [vmem:[#allocation3 + $0x30] sm:$0xff] %v1072
    %1161 = vst [vmem:[#allocation3 + $0x38] sm:$0xff] %v1073
    %1162 = vst [vmem:[#allocation3 + $0x40] sm:$0xff] %v1078
    %1163 = vst [vmem:[#allocation3 + $0x48] sm:$0xff] %v1079
    %1164 = vst [vmem:[#allocation3 + $0x50] sm:$0xff] %v1080
    %1165 = vst [vmem:[#allocation3 + $0x58] sm:$0xff] %v1081
    %1166 = vst [vmem:[#allocation3 + $0x60] sm:$0xff] %v1086
    %1167 = vst [vmem:[#allocation3 + $0x68] sm:$0xff] %v1087
    %1168 = vst [vmem:[#allocation3 + $0x70] sm:$0xff] %v1088
    %1169 = vst [vmem:[#allocation3 + $0x78] sm:$0xff] %v1089
    %1170 = vst [vmem:[#allocation3 + $0x80] sm:$0xff] %v1094
    %1171 = vst [vmem:[#allocation3 + $0x88] sm:$0xff] %v1095
    %1172 = vst [vmem:[#allocation3 + $0x90] sm:$0xff] %v1096
    %1173 = vst [vmem:[#allocation3 + $0x98] sm:$0xff] %v1097
    %1174 = vst [vmem:[#allocation3 + $0xa0] sm:$0xff] %v1102
    %1175 = vst [vmem:[#allocation3 + $0xa8] sm:$0xff] %v1103
    %1176 = vst [vmem:[#allocation3 + $0xb0] sm:$0xff] %v1104
    %1177 = vst [vmem:[#allocation3 + $0xb8] sm:$0xff] %v1105
    %1178 = vst [vmem:[#allocation3 + $0xc0] sm:$0xff] %v1110
    %1179 = vst [vmem:[#allocation3 + $0xc8] sm:$0xff] %v1111
    %1180 = vst [vmem:[#allocation3 + $0xd0] sm:$0xff] %v1112
    %1181 = vst [vmem:[#allocation3 + $0xd8] sm:$0xff] %v1113
    %1182 = vst [vmem:[#allocation3 + $0xe0] sm:$0xff] %v1118
    %1183 = vst [vmem:[#allocation3 + $0xe8] sm:$0xff] %v1119
    %1184 = vst [vmem:[#allocation3 + $0xf0] sm:$0xff] %v1120
    %1185 = vst [vmem:[#allocation3 + $0xf8] sm:$0xff] %v1121
    %v1186 = vld [vmem:[%s0] sm:$0xff]
    %v1187 = vld [vmem:[%s0 + $0x8] sm:$0xff]
    %v1188 = vsub.s32 %v1186, 1
    %v1189 = vsub.s32 %v1187, 1
    %v1190 = vld [vmem:[#allocation2] sm:$0xff]
    %v1191 = vld [vmem:[#allocation2 + $0x8] sm:$0xff]
    %v1192 = vld [vmem:[#allocation2 + $0x10] sm:$0xff]
    %v1193 = vld [vmem:[#allocation2 + $0x18] sm:$0xff]
    %v1194 = vunpack.c.l.bf16 %v1190
    %v1195 = vunpack.c.l.bf16 %v1191
    %v1196 = vunpack.c.l.bf16 %v1192
    %v1197 = vunpack.c.l.bf16 %v1193
    %v1198 = vunpack.c.h.bf16 %v1190
    %v1199 = vunpack.c.h.bf16 %v1191
    %v1200 = vunpack.c.h.bf16 %v1192
    %v1201 = vunpack.c.h.bf16 %v1193
    %v1202 = vld [vmem:[#allocation9] sm:$0xff]
    %v1203 = vld [vmem:[#allocation9 + $0x8] sm:$0xff]
    %v1204 = vld [vmem:[#allocation9 + $0x10] sm:$0xff]
    %v1205 = vld [vmem:[#allocation9 + $0x18] sm:$0xff]
    %v1206 = vld [vmem:[#allocation9 + $0x20] sm:$0xff]
    %v1207 = vld [vmem:[#allocation9 + $0x28] sm:$0xff]
    %v1208 = vld [vmem:[#allocation9 + $0x30] sm:$0xff]
    %v1209 = vld [vmem:[#allocation9 + $0x38] sm:$0xff]
    %v1210 = vld [vmem:[#allocation9 + $0x40] sm:$0xff]
    %v1211 = vld [vmem:[#allocation9 + $0x48] sm:$0xff]
    %v1212 = vld [vmem:[#allocation9 + $0x50] sm:$0xff]
    %v1213 = vld [vmem:[#allocation9 + $0x58] sm:$0xff]
    %v1214 = vld [vmem:[#allocation9 + $0x60] sm:$0xff]
    %v1215 = vld [vmem:[#allocation9 + $0x68] sm:$0xff]
    %v1216 = vld [vmem:[#allocation9 + $0x70] sm:$0xff]
    %v1217 = vld [vmem:[#allocation9 + $0x78] sm:$0xff]
    %v1218 = vld [vmem:[#allocation9 + $0x80] sm:$0xff]
    %v1219 = vld [vmem:[#allocation9 + $0x88] sm:$0xff]
    %v1220 = vld [vmem:[#allocation9 + $0x90] sm:$0xff]
    %v1221 = vld [vmem:[#allocation9 + $0x98] sm:$0xff]
    %v1222 = vld [vmem:[#allocation9 + $0xa0] sm:$0xff]
    %v1223 = vld [vmem:[#allocation9 + $0xa8] sm:$0xff]
    %v1224 = vld [vmem:[#allocation9 + $0xb0] sm:$0xff]
    %v1225 = vld [vmem:[#allocation9 + $0xb8] sm:$0xff]
    %v1226 = vld [vmem:[#allocation9 + $0xc0] sm:$0xff]
    %v1227 = vld [vmem:[#allocation9 + $0xc8] sm:$0xff]
    %v1228 = vld [vmem:[#allocation9 + $0xd0] sm:$0xff]
    %v1229 = vld [vmem:[#allocation9 + $0xd8] sm:$0xff]
    %v1230 = vld [vmem:[#allocation9 + $0xe0] sm:$0xff]
    %v1231 = vld [vmem:[#allocation9 + $0xe8] sm:$0xff]
    %v1232 = vld [vmem:[#allocation9 + $0xf0] sm:$0xff]
    %v1233 = vld [vmem:[#allocation9 + $0xf8] sm:$0xff]
    %v1266 = vunpack.c.l.b16 %v1202
    %v1267 = vunpack.c.h.b16 %v1202
    %v1268 = vunpack.c.l.b16 %v1203
    %v1269 = vunpack.c.h.b16 %v1203
    %v1270 = vunpack.c.l.b16 %v1204
    %v1271 = vunpack.c.h.b16 %v1204
    %v1272 = vunpack.c.l.b16 %v1205
    %v1273 = vunpack.c.h.b16 %v1205
    %v1274 = vunpack.c.l.b16 %v1206
    %v1275 = vunpack.c.h.b16 %v1206
    %v1276 = vunpack.c.l.b16 %v1207
    %v1277 = vunpack.c.h.b16 %v1207
    %v1278 = vunpack.c.l.b16 %v1208
    %v1279 = vunpack.c.h.b16 %v1208
    %v1280 = vunpack.c.l.b16 %v1209
    %v1281 = vunpack.c.h.b16 %v1209
    %v1282 = vunpack.c.l.b16 %v1210
    %v1283 = vunpack.c.h.b16 %v1210
    %v1284 = vunpack.c.l.b16 %v1211
    %v1285 = vunpack.c.h.b16 %v1211
    %v1286 = vunpack.c.l.b16 %v1212
    %v1287 = vunpack.c.h.b16 %v1212
    %v1288 = vunpack.c.l.b16 %v1213
    %v1289 = vunpack.c.h.b16 %v1213
    %v1290 = vunpack.c.l.b16 %v1214
    %v1291 = vunpack.c.h.b16 %v1214
    %v1292 = vunpack.c.l.b16 %v1215
    %v1293 = vunpack.c.h.b16 %v1215
    %v1294 = vunpack.c.l.b16 %v1216
    %v1295 = vunpack.c.h.b16 %v1216
    %v1296 = vunpack.c.l.b16 %v1217
    %v1297 = vunpack.c.h.b16 %v1217
    %v1298 = vunpack.c.l.b16 %v1218
    %v1299 = vunpack.c.h.b16 %v1218
    %v1300 = vunpack.c.l.b16 %v1219
    %v1301 = vunpack.c.h.b16 %v1219
    %v1302 = vunpack.c.l.b16 %v1220
    %v1303 = vunpack.c.h.b16 %v1220
    %v1304 = vunpack.c.l.b16 %v1221
    %v1305 = vunpack.c.h.b16 %v1221
    %v1306 = vunpack.c.l.b16 %v1222
    %v1307 = vunpack.c.h.b16 %v1222
    %v1308 = vunpack.c.l.b16 %v1223
    %v1309 = vunpack.c.h.b16 %v1223
    %v1310 = vunpack.c.l.b16 %v1224
    %v1311 = vunpack.c.h.b16 %v1224
    %v1312 = vunpack.c.l.b16 %v1225
    %v1313 = vunpack.c.h.b16 %v1225
    %v1314 = vunpack.c.l.b16 %v1226
    %v1315 = vunpack.c.h.b16 %v1226
    %v1316 = vunpack.c.l.b16 %v1227
    %v1317 = vunpack.c.h.b16 %v1227
    %v1318 = vunpack.c.l.b16 %v1228
    %v1319 = vunpack.c.h.b16 %v1228
    %v1320 = vunpack.c.l.b16 %v1229
    %v1321 = vunpack.c.h.b16 %v1229
    %v1322 = vunpack.c.l.b16 %v1230
    %v1323 = vunpack.c.h.b16 %v1230
    %v1324 = vunpack.c.l.b16 %v1231
    %v1325 = vunpack.c.h.b16 %v1231
    %v1326 = vunpack.c.l.b16 %v1232
    %v1327 = vunpack.c.h.b16 %v1232
    %v1328 = vunpack.c.l.b16 %v1233
    %v1329 = vunpack.c.h.b16 %v1233
    %v1330 = vpack.c.b16 %v1270, %v1266
    %v1331 = vpack.c.b16 %v1271, %v1267
    %v1332 = vpack.c.b16 %v1272, %v1268
    %v1333 = vpack.c.b16 %v1273, %v1269
    %v1334 = vpack.c.b16 %v1278, %v1274
    %v1335 = vpack.c.b16 %v1279, %v1275
    %v1336 = vpack.c.b16 %v1280, %v1276
    %v1337 = vpack.c.b16 %v1281, %v1277
    %v1338 = vpack.c.b16 %v1286, %v1282
    %v1339 = vpack.c.b16 %v1287, %v1283
    %v1340 = vpack.c.b16 %v1288, %v1284
    %v1341 = vpack.c.b16 %v1289, %v1285
    %v1342 = vpack.c.b16 %v1294, %v1290
    %v1343 = vpack.c.b16 %v1295, %v1291
    %v1344 = vpack.c.b16 %v1296, %v1292
    %v1345 = vpack.c.b16 %v1297, %v1293
    %v1346 = vpack.c.b16 %v1302, %v1298
    %v1347 = vpack.c.b16 %v1303, %v1299
    %v1348 = vpack.c.b16 %v1304, %v1300
    %v1349 = vpack.c.b16 %v1305, %v1301
    %v1350 = vpack.c.b16 %v1310, %v1306
    %v1351 = vpack.c.b16 %v1311, %v1307
    %v1352 = vpack.c.b16 %v1312, %v1308
    %v1353 = vpack.c.b16 %v1313, %v1309
    %v1354 = vpack.c.b16 %v1318, %v1314
    %v1355 = vpack.c.b16 %v1319, %v1315
    %v1356 = vpack.c.b16 %v1320, %v1316
    %v1357 = vpack.c.b16 %v1321, %v1317
    %v1358 = vpack.c.b16 %v1326, %v1322
    %v1359 = vpack.c.b16 %v1327, %v1323
    %v1360 = vpack.c.b16 %v1328, %v1324
    %v1361 = vpack.c.b16 %v1329, %v1325
    %1394 = vmatprep.subr.bf16.mxu0 %v1331
    %1395 = vmatpush1.bf16.msra.mxu0 %v1330
    %1396 = vmatprep.subr.bf16.mxu0 %v1335
    %1397 = vmatpush1.bf16.msra.mxu0 %v1334
    %1398 = vmatprep.subr.bf16.mxu0 %v1339
    %1399 = vmatpush1.bf16.msra.mxu0 %v1338
    %1400 = vmatprep.subr.bf16.mxu0 %v1343
    %1401 = vmatpush1.bf16.msra.mxu0 %v1342
    %1402 = vmatprep.subr.bf16.mxu0 %v1347
    %1403 = vmatpush1.bf16.msra.mxu0 %v1346
    %1404 = vmatprep.subr.bf16.mxu0 %v1351
    %1405 = vmatpush1.bf16.msra.mxu0 %v1350
    %1406 = vmatprep.subr.bf16.mxu0 %v1355
    %1407 = vmatpush1.bf16.msra.mxu0 %v1354
    %1408 = vmatprep.subr.bf16.mxu0 %v1359
    %1409 = vmatpush1.bf16.msra.mxu0 %v1358
    %1410 = vmatprep.subr.bf16.mxu0 0
    %1411 = vmatpush1.bf16.msra.mxu0 0
    %1412 = vmatprep.subr.bf16.mxu0 0
    %1413 = vmatpush1.bf16.msra.mxu0 0
    %1414 = vmatprep.subr.bf16.mxu0 0
    %1415 = vmatpush1.bf16.msra.mxu0 0
    %1416 = vmatprep.subr.bf16.mxu0 0
    %1417 = vmatpush1.bf16.msra.mxu0 0
    %1418 = vmatprep.subr.bf16.mxu0 0
    %1419 = vmatpush1.bf16.msra.mxu0 0
    %1420 = vmatprep.subr.bf16.mxu0 0
    %1421 = vmatpush1.bf16.msra.mxu0 0
    %1422 = vmatprep.subr.bf16.mxu0 0
    %1423 = vmatpush1.bf16.msra.mxu0 0
    %1424 = vmatprep.subr.bf16.mxu0 0
    %1425 = vmatpush1.bf16.msra.mxu0 0
    %1426 = vmatprep.mubr.bf16.mxu0 0
    %1427 = vmatmul.mubr.bf16.gmra.mrb[0].mxu0 0
    %v1428 = vpop.f32.mrb[0].mxu0
    %v1429 = vadd.f32 0.0, %v1428
    %v1430 = vpop.f32.mrb[0].mxu0
    %v1431 = vadd.f32 0.0, %v1430
    %v1432 = vpop.f32.mrb[0].mxu0
    %v1433 = vadd.f32 0.0, %v1432
    %v1434 = vpop.f32.mrb[0].mxu0
    %v1435 = vadd.f32 0.0, %v1434
    %1436 = vdwg.mxu0
    %1437 = vmatprep.subr.bf16.mxu0 %v1333
    %1438 = vmatpush1.bf16.msra.mxu0 %v1332
    %1439 = vmatprep.subr.bf16.mxu0 %v1337
    %1440 = vmatpush1.bf16.msra.mxu0 %v1336
    %1441 = vmatprep.subr.bf16.mxu0 %v1341
    %1442 = vmatpush1.bf16.msra.mxu0 %v1340
    %1443 = vmatprep.subr.bf16.mxu0 %v1345
    %1444 = vmatpush1.bf16.msra.mxu0 %v1344
    %1445 = vmatprep.subr.bf16.mxu0 %v1349
    %1446 = vmatpush1.bf16.msra.mxu0 %v1348
    %1447 = vmatprep.subr.bf16.mxu0 %v1353
    %1448 = vmatpush1.bf16.msra.mxu0 %v1352
    %1449 = vmatprep.subr.bf16.mxu0 %v1357
    %1450 = vmatpush1.bf16.msra.mxu0 %v1356
    %1451 = vmatprep.subr.bf16.mxu0 %v1361
    %1452 = vmatpush1.bf16.msra.mxu0 %v1360
    %1453 = vmatprep.subr.bf16.mxu0 0
    %1454 = vmatpush1.bf16.msra.mxu0 0
    %1455 = vmatprep.subr.bf16.mxu0 0
    %1456 = vmatpush1.bf16.msra.mxu0 0
    %1457 = vmatprep.subr.bf16.mxu0 0
    %1458 = vmatpush1.bf16.msra.mxu0 0
    %1459 = vmatprep.subr.bf16.mxu0 0
    %1460 = vmatpush1.bf16.msra.mxu0 0
    %1461 = vmatprep.subr.bf16.mxu0 0
    %1462 = vmatpush1.bf16.msra.mxu0 0
    %1463 = vmatprep.subr.bf16.mxu0 0
    %1464 = vmatpush1.bf16.msra.mxu0 0
    %1465 = vmatprep.subr.bf16.mxu0 0
    %1466 = vmatpush1.bf16.msra.mxu0 0
    %1467 = vmatprep.subr.bf16.mxu0 0
    %1468 = vmatpush1.bf16.msra.mxu0 0
    %1469 = vmatprep.mubr.bf16.mxu0 0
    %1470 = vmatmul.mubr.bf16.gmra.mrb[0].mxu0 0
    %v1471 = vpop.f32.mrb[0].mxu0
    %v1472 = vadd.f32 0.0, %v1471
    %v1473 = vpop.f32.mrb[0].mxu0
    %v1474 = vadd.f32 0.0, %v1473
    %v1475 = vpop.f32.mrb[0].mxu0
    %v1476 = vadd.f32 0.0, %v1475
    %v1477 = vpop.f32.mrb[0].mxu0
    %v1478 = vadd.f32 0.0, %v1477
    %1479 = vdwg.mxu0
    %v1480 = vadd.f32 %v1194, %v1429
    %v1481 = vadd.f32 %v1195, %v1431
    %v1482 = vadd.f32 %v1196, %v1472
    %v1483 = vadd.f32 %v1197, %v1474
    %v1484 = vadd.f32 %v1198, %v1433
    %v1485 = vadd.f32 %v1199, %v1435
    %v1486 = vadd.f32 %v1200, %v1476
    %v1487 = vadd.f32 %v1201, %v1478
    %v1488 = vxor.u32 %v1480, 2147483648
    %v1489 = vxor.u32 %v1484, 2147483648
    %v1490 = vmul.f32 %v1488, 1.442695
    %v1491 = vpow.pop %v1490
    %v1492 = vmul.f32 %v1489, 1.442695
    %v1493 = vpow.pop %v1492
    %v1494 = vadd.f32 %v1491, 1.0
    %v1495 = vadd.f32 %v1493, 1.0
    %v1496 = vrcp.pop %v1494
    %v1497 = vmul.f32 1.0, %v1496
    %v1498 = vrcp.pop %v1495
    %v1499 = vmul.f32 1.0, %v1498
    %v1500 = vxor.u32 %v1481, 2147483648
    %v1501 = vxor.u32 %v1485, 2147483648
    %v1502 = vmul.f32 %v1500, 1.442695
    %v1503 = vpow.pop %v1502
    %v1504 = vmul.f32 %v1501, 1.442695
    %v1505 = vpow.pop %v1504
    %v1506 = vadd.f32 %v1503, 1.0
    %v1507 = vadd.f32 %v1505, 1.0
    %v1508 = vrcp.pop %v1506
    %v1509 = vmul.f32 1.0, %v1508
    %v1510 = vrcp.pop %v1507
    %v1511 = vmul.f32 1.0, %v1510
    %v1512 = vtanh.pop %v1482
    %v1513 = vtanh.pop %v1486
    %v1514 = vxor.u32 %v1483, 2147483648
    %v1515 = vxor.u32 %v1487, 2147483648
    %v1516 = vmul.f32 %v1514, 1.442695
    %v1517 = vpow.pop %v1516
    %v1518 = vmul.f32 %v1515, 1.442695
    %v1519 = vpow.pop %v1518
    %v1520 = vadd.f32 %v1517, 1.0
    %v1521 = vadd.f32 %v1519, 1.0
    %v1522 = vrcp.pop %v1520
    %v1523 = vmul.f32 1.0, %v1522
    %v1524 = vrcp.pop %v1521
    %v1525 = vmul.f32 1.0, %v1524
    %v1526 = vmul.f32 %v1509, 0.0
    %v1527 = vmul.f32 %v1511, 0.0
    %v1528 = vmul.f32 %v1497, %v1512
    %v1529 = vmul.f32 %v1499, %v1513
    %v1530 = vadd.f32 %v1526, %v1528
    %v1531 = vadd.f32 %v1527, %v1529
    %v1532 = vtanh.pop %v1530
    %v1533 = vtanh.pop %v1531
    %v1534 = vmul.f32 %v1523, %v1532
    %v1535 = vmul.f32 %v1525, %v1533
    %vm1536 = vcmp.eq.s32.totalorder %v1188, 0
    %vm1537 = vcmp.eq.s32.totalorder %v1189, 0
    %v1538 = vsel %vm1536, 1, 0
    %v1539 = vsel %vm1537, 1, 0
    %1540 = vset.pattern.permute.xlu0 0
    %1541 = vperm.xlu0 %1540, %v1538
    %v1542 = vpop.permute.xlu0 %1541
    %1543 = vset.pattern.permute.xlu0 0
    %1544 = vperm.xlu0 %1543, %v1539
    %v1545 = vpop.permute.xlu0 %1544
    %vm1546 = vcmp.eq.s32.totalorder %v1542, 1
    %vm1547 = vcmp.eq.s32.totalorder %v1545, 1
    %v1548 = vsel %vm1546, %v1534, 0.0
    %v1549 = vsel %vm1547, %v1535, 0.0
    %s1550 = scalar_lea.vmem [#allocation3], 224
    %v1551 = vld [vmem:[%s1550] sm:$0xff]
    %v1552 = vld [vmem:[%s1550 + $0x8] sm:$0xff]
    %v1553 = vld [vmem:[%s1550 + $0x10] sm:$0xff]
    %v1554 = vld [vmem:[%s1550 + $0x18] sm:$0xff]
    %v1555 = vunpack.c.l.bf16 %v1551
    %v1556 = vunpack.c.l.bf16 %v1552
    %v1557 = vunpack.c.l.bf16 %v1553
    %v1558 = vunpack.c.l.bf16 %v1554
    %v1559 = vunpack.c.h.bf16 %v1551
    %v1560 = vunpack.c.h.bf16 %v1552
    %v1561 = vunpack.c.h.bf16 %v1553
    %v1562 = vunpack.c.h.bf16 %v1554
    %v1563 = vld [vmem:[#allocation10] sm:$0xff]
    %v1564 = vld [vmem:[#allocation10 + $0x8] sm:$0xff]
    %v1565 = vld [vmem:[#allocation10 + $0x10] sm:$0xff]
    %v1566 = vld [vmem:[#allocation10 + $0x18] sm:$0xff]
    %v1567 = vld [vmem:[#allocation10 + $0x20] sm:$0xff]
    %v1568 = vld [vmem:[#allocation10 + $0x28] sm:$0xff]
    %v1569 = vld [vmem:[#allocation10 + $0x30] sm:$0xff]
    %v1570 = vld [vmem:[#allocation10 + $0x38] sm:$0xff]
    %v1571 = vld [vmem:[#allocation10 + $0x40] sm:$0xff]
    %v1572 = vld [vmem:[#allocation10 + $0x48] sm:$0xff]
    %v1573 = vld [vmem:[#allocation10 + $0x50] sm:$0xff]
    %v1574 = vld [vmem:[#allocation10 + $0x58] sm:$0xff]
    %v1575 = vld [vmem:[#allocation10 + $0x60] sm:$0xff]
    %v1576 = vld [vmem:[#allocation10 + $0x68] sm:$0xff]
    %v1577 = vld [vmem:[#allocation10 + $0x70] sm:$0xff]
    %v1578 = vld [vmem:[#allocation10 + $0x78] sm:$0xff]
    %v1579 = vld [vmem:[#allocation10 + $0x80] sm:$0xff]
    %v1580 = vld [vmem:[#allocation10 + $0x88] sm:$0xff]
    %v1581 = vld [vmem:[#allocation10 + $0x90] sm:$0xff]
    %v1582 = vld [vmem:[#allocation10 + $0x98] sm:$0xff]
    %v1583 = vld [vmem:[#allocation10 + $0xa0] sm:$0xff]
    %v1584 = vld [vmem:[#allocation10 + $0xa8] sm:$0xff]
    %v1585 = vld [vmem:[#allocation10 + $0xb0] sm:$0xff]
    %v1586 = vld [vmem:[#allocation10 + $0xb8] sm:$0xff]
    %v1587 = vld [vmem:[#allocation10 + $0xc0] sm:$0xff]
    %v1588 = vld [vmem:[#allocation10 + $0xc8] sm:$0xff]
    %v1589 = vld [vmem:[#allocation10 + $0xd0] sm:$0xff]
    %v1590 = vld [vmem:[#allocation10 + $0xd8] sm:$0xff]
    %v1591 = vld [vmem:[#allocation10 + $0xe0] sm:$0xff]
    %v1592 = vld [vmem:[#allocation10 + $0xe8] sm:$0xff]
    %v1593 = vld [vmem:[#allocation10 + $0xf0] sm:$0xff]
    %v1594 = vld [vmem:[#allocation10 + $0xf8] sm:$0xff]
    %v1627 = vunpack.c.l.b16 %v1563
    %v1628 = vunpack.c.h.b16 %v1563
    %v1629 = vunpack.c.l.b16 %v1564
    %v1630 = vunpack.c.h.b16 %v1564
    %v1631 = vunpack.c.l.b16 %v1565
    %v1632 = vunpack.c.h.b16 %v1565
    %v1633 = vunpack.c.l.b16 %v1566
    %v1634 = vunpack.c.h.b16 %v1566
    %v1635 = vunpack.c.l.b16 %v1567
    %v1636 = vunpack.c.h.b16 %v1567
    %v1637 = vunpack.c.l.b16 %v1568
    %v1638 = vunpack.c.h.b16 %v1568
    %v1639 = vunpack.c.l.b16 %v1569
    %v1640 = vunpack.c.h.b16 %v1569
    %v1641 = vunpack.c.l.b16 %v1570
    %v1642 = vunpack.c.h.b16 %v1570
    %v1643 = vunpack.c.l.b16 %v1571
    %v1644 = vunpack.c.h.b16 %v1571
    %v1645 = vunpack.c.l.b16 %v1572
    %v1646 = vunpack.c.h.b16 %v1572
    %v1647 = vunpack.c.l.b16 %v1573
    %v1648 = vunpack.c.h.b16 %v1573
    %v1649 = vunpack.c.l.b16 %v1574
    %v1650 = vunpack.c.h.b16 %v1574
    %v1651 = vunpack.c.l.b16 %v1575
    %v1652 = vunpack.c.h.b16 %v1575
    %v1653 = vunpack.c.l.b16 %v1576
    %v1654 = vunpack.c.h.b16 %v1576
    %v1655 = vunpack.c.l.b16 %v1577
    %v1656 = vunpack.c.h.b16 %v1577
    %v1657 = vunpack.c.l.b16 %v1578
    %v1658 = vunpack.c.h.b16 %v1578
    %v1659 = vunpack.c.l.b16 %v1579
    %v1660 = vunpack.c.h.b16 %v1579
    %v1661 = vunpack.c.l.b16 %v1580
    %v1662 = vunpack.c.h.b16 %v1580
    %v1663 = vunpack.c.l.b16 %v1581
    %v1664 = vunpack.c.h.b16 %v1581
    %v1665 = vunpack.c.l.b16 %v1582
    %v1666 = vunpack.c.h.b16 %v1582
    %v1667 = vunpack.c.l.b16 %v1583
    %v1668 = vunpack.c.h.b16 %v1583
    %v1669 = vunpack.c.l.b16 %v1584
    %v1670 = vunpack.c.h.b16 %v1584
    %v1671 = vunpack.c.l.b16 %v1585
    %v1672 = vunpack.c.h.b16 %v1585
    %v1673 = vunpack.c.l.b16 %v1586
    %v1674 = vunpack.c.h.b16 %v1586
    %v1675 = vunpack.c.l.b16 %v1587
    %v1676 = vunpack.c.h.b16 %v1587
    %v1677 = vunpack.c.l.b16 %v1588
    %v1678 = vunpack.c.h.b16 %v1588
    %v1679 = vunpack.c.l.b16 %v1589
    %v1680 = vunpack.c.h.b16 %v1589
    %v1681 = vunpack.c.l.b16 %v1590
    %v1682 = vunpack.c.h.b16 %v1590
    %v1683 = vunpack.c.l.b16 %v1591
    %v1684 = vunpack.c.h.b16 %v1591
    %v1685 = vunpack.c.l.b16 %v1592
    %v1686 = vunpack.c.h.b16 %v1592
    %v1687 = vunpack.c.l.b16 %v1593
    %v1688 = vunpack.c.h.b16 %v1593
    %v1689 = vunpack.c.l.b16 %v1594
    %v1690 = vunpack.c.h.b16 %v1594
    %v1691 = vpack.c.b16 %v1631, %v1627
    %v1692 = vpack.c.b16 %v1632, %v1628
    %v1693 = vpack.c.b16 %v1633, %v1629
    %v1694 = vpack.c.b16 %v1634, %v1630
    %v1695 = vpack.c.b16 %v1639, %v1635
    %v1696 = vpack.c.b16 %v1640, %v1636
    %v1697 = vpack.c.b16 %v1641, %v1637
    %v1698 = vpack.c.b16 %v1642, %v1638
    %v1699 = vpack.c.b16 %v1647, %v1643
    %v1700 = vpack.c.b16 %v1648, %v1644
    %v1701 = vpack.c.b16 %v1649, %v1645
    %v1702 = vpack.c.b16 %v1650, %v1646
    %v1703 = vpack.c.b16 %v1655, %v1651
    %v1704 = vpack.c.b16 %v1656, %v1652
    %v1705 = vpack.c.b16 %v1657, %v1653
    %v1706 = vpack.c.b16 %v1658, %v1654
    %v1707 = vpack.c.b16 %v1663, %v1659
    %v1708 = vpack.c.b16 %v1664, %v1660
    %v1709 = vpack.c.b16 %v1665, %v1661
    %v1710 = vpack.c.b16 %v1666, %v1662
    %v1711 = vpack.c.b16 %v1671, %v1667
    %v1712 = vpack.c.b16 %v1672, %v1668
    %v1713 = vpack.c.b16 %v1673, %v1669
    %v1714 = vpack.c.b16 %v1674, %v1670
    %v1715 = vpack.c.b16 %v1679, %v1675
    %v1716 = vpack.c.b16 %v1680, %v1676
    %v1717 = vpack.c.b16 %v1681, %v1677
    %v1718 = vpack.c.b16 %v1682, %v1678
    %v1719 = vpack.c.b16 %v1687, %v1683
    %v1720 = vpack.c.b16 %v1688, %v1684
    %v1721 = vpack.c.b16 %v1689, %v1685
    %v1722 = vpack.c.b16 %v1690, %v1686
    %1755 = vmatprep.subr.bf16.mxu0 %v1692
    %1756 = vmatpush1.bf16.msra.mxu0 %v1691
    %1757 = vmatprep.subr.bf16.mxu0 %v1696
    %1758 = vmatpush1.bf16.msra.mxu0 %v1695
    %1759 = vmatprep.subr.bf16.mxu0 %v1700
    %1760 = vmatpush1.bf16.msra.mxu0 %v1699
    %1761 = vmatprep.subr.bf16.mxu0 %v1704
    %1762 = vmatpush1.bf16.msra.mxu0 %v1703
    %1763 = vmatprep.subr.bf16.mxu0 %v1708
    %1764 = vmatpush1.bf16.msra.mxu0 %v1707
    %1765 = vmatprep.subr.bf16.mxu0 %v1712
    %1766 = vmatpush1.bf16.msra.mxu0 %v1711
    %1767 = vmatprep.subr.bf16.mxu0 %v1716
    %1768 = vmatpush1.bf16.msra.mxu0 %v1715
    %1769 = vmatprep.subr.bf16.mxu0 %v1720
    %1770 = vmatpush1.bf16.msra.mxu0 %v1719
    %1771 = vmatprep.subr.bf16.mxu0 0
    %1772 = vmatpush1.bf16.msra.mxu0 0
    %1773 = vmatprep.subr.bf16.mxu0 0
    %1774 = vmatpush1.bf16.msra.mxu0 0
    %1775 = vmatprep.subr.bf16.mxu0 0
    %1776 = vmatpush1.bf16.msra.mxu0 0
    %1777 = vmatprep.subr.bf16.mxu0 0
    %1778 = vmatpush1.bf16.msra.mxu0 0
    %1779 = vmatprep.subr.bf16.mxu0 0
    %1780 = vmatpush1.bf16.msra.mxu0 0
    %1781 = vmatprep.subr.bf16.mxu0 0
    %1782 = vmatpush1.bf16.msra.mxu0 0
    %1783 = vmatprep.subr.bf16.mxu0 0
    %1784 = vmatpush1.bf16.msra.mxu0 0
    %1785 = vmatprep.subr.bf16.mxu0 0
    %1786 = vmatpush1.bf16.msra.mxu0 0
    %1787 = vmatprep.mubr.bf16.mxu0 0
    %1788 = vmatmul.mubr.bf16.gmra.mrb[0].mxu0 0
    %v1789 = vpop.f32.mrb[0].mxu0
    %v1790 = vadd.f32 0.0, %v1789
    %v1791 = vpop.f32.mrb[0].mxu0
    %v1792 = vadd.f32 0.0, %v1791
    %v1793 = vpop.f32.mrb[0].mxu0
    %v1794 = vadd.f32 0.0, %v1793
    %v1795 = vpop.f32.mrb[0].mxu0
    %v1796 = vadd.f32 0.0, %v1795
    %1797 = vdwg.mxu0
    %1798 = vmatprep.subr.bf16.mxu0 %v1694
    %1799 = vmatpush1.bf16.msra.mxu0 %v1693
    %1800 = vmatprep.subr.bf16.mxu0 %v1698
    %1801 = vmatpush1.bf16.msra.mxu0 %v1697
    %1802 = vmatprep.subr.bf16.mxu0 %v1702
    %1803 = vmatpush1.bf16.msra.mxu0 %v1701
    %1804 = vmatprep.subr.bf16.mxu0 %v1706
    %1805 = vmatpush1.bf16.msra.mxu0 %v1705
    %1806 = vmatprep.subr.bf16.mxu0 %v1710
    %1807 = vmatpush1.bf16.msra.mxu0 %v1709
    %1808 = vmatprep.subr.bf16.mxu0 %v1714
    %1809 = vmatpush1.bf16.msra.mxu0 %v1713
    %1810 = vmatprep.subr.bf16.mxu0 %v1718
    %1811 = vmatpush1.bf16.msra.mxu0 %v1717
    %1812 = vmatprep.subr.bf16.mxu0 %v1722
    %1813 = vmatpush1.bf16.msra.mxu0 %v1721
    %1814 = vmatprep.subr.bf16.mxu0 0
    %1815 = vmatpush1.bf16.msra.mxu0 0
    %1816 = vmatprep.subr.bf16.mxu0 0
    %1817 = vmatpush1.bf16.msra.mxu0 0
    %1818 = vmatprep.subr.bf16.mxu0 0
    %1819 = vmatpush1.bf16.msra.mxu0 0
    %1820 = vmatprep.subr.bf16.mxu0 0
    %1821 = vmatpush1.bf16.msra.mxu0 0
    %1822 = vmatprep.subr.bf16.mxu0 0
    %1823 = vmatpush1.bf16.msra.mxu0 0
    %1824 = vmatprep.subr.bf16.mxu0 0
    %1825 = vmatpush1.bf16.msra.mxu0 0
    %1826 = vmatprep.subr.bf16.mxu0 0
    %1827 = vmatpush1.bf16.msra.mxu0 0
    %1828 = vmatprep.subr.bf16.mxu0 0
    %1829 = vmatpush1.bf16.msra.mxu0 0
    %1830 = vmatprep.mubr.bf16.mxu0 0
    %1831 = vmatmul.mubr.bf16.gmra.mrb[0].mxu0 0
    %v1832 = vpop.f32.mrb[0].mxu0
    %v1833 = vadd.f32 0.0, %v1832
    %v1834 = vpop.f32.mrb[0].mxu0
    %v1835 = vadd.f32 0.0, %v1834
    %v1836 = vpop.f32.mrb[0].mxu0
    %v1837 = vadd.f32 0.0, %v1836
    %v1838 = vpop.f32.mrb[0].mxu0
    %v1839 = vadd.f32 0.0, %v1838
    %1840 = vdwg.mxu0
    %v1841 = vadd.f32 %v1555, %v1790
    %v1842 = vadd.f32 %v1556, %v1792
    %v1843 = vadd.f32 %v1557, %v1833
    %v1844 = vadd.f32 %v1558, %v1835
    %v1845 = vadd.f32 %v1559, %v1794
    %v1846 = vadd.f32 %v1560, %v1796
    %v1847 = vadd.f32 %v1561, %v1837
    %v1848 = vadd.f32 %v1562, %v1839
    %v1849 = vxor.u32 %v1841, 2147483648
    %v1850 = vxor.u32 %v1845, 2147483648
    %v1851 = vmul.f32 %v1849, 1.442695
    %v1852 = vpow.pop %v1851
    %v1853 = vmul.f32 %v1850, 1.442695
    %v1854 = vpow.pop %v1853
    %v1855 = vadd.f32 %v1852, 1.0
    %v1856 = vadd.f32 %v1854, 1.0
    %v1857 = vrcp.pop %v1855
    %v1858 = vmul.f32 1.0, %v1857
    %v1859 = vrcp.pop %v1856
    %v1860 = vmul.f32 1.0, %v1859
    %v1861 = vxor.u32 %v1842, 2147483648
    %v1862 = vxor.u32 %v1846, 2147483648
    %v1863 = vmul.f32 %v1861, 1.442695
    %v1864 = vpow.pop %v1863
    %v1865 = vmul.f32 %v1862, 1.442695
    %v1866 = vpow.pop %v1865
    %v1867 = vadd.f32 %v1864, 1.0
    %v1868 = vadd.f32 %v1866, 1.0
    %v1869 = vrcp.pop %v1867
    %v1870 = vmul.f32 1.0, %v1869
    %v1871 = vrcp.pop %v1868
    %v1872 = vmul.f32 1.0, %v1871
    %v1873 = vtanh.pop %v1843
    %v1874 = vtanh.pop %v1847
    %v1875 = vxor.u32 %v1844, 2147483648
    %v1876 = vxor.u32 %v1848, 2147483648
    %v1877 = vmul.f32 %v1875, 1.442695
    %v1878 = vpow.pop %v1877
    %v1879 = vmul.f32 %v1876, 1.442695
    %v1880 = vpow.pop %v1879
    %v1881 = vadd.f32 %v1878, 1.0
    %v1882 = vadd.f32 %v1880, 1.0
    %v1883 = vrcp.pop %v1881
    %v1884 = vmul.f32 1.0, %v1883
    %v1885 = vrcp.pop %v1882
    %v1886 = vmul.f32 1.0, %v1885
    %v1887 = vmul.f32 %v1870, 0.0
    %v1888 = vmul.f32 %v1872, 0.0
    %v1889 = vmul.f32 %v1858, %v1873
    %v1890 = vmul.f32 %v1860, %v1874
    %v1891 = vadd.f32 %v1887, %v1889
    %v1892 = vadd.f32 %v1888, %v1890
    %v1893 = vtanh.pop %v1891
    %v1894 = vtanh.pop %v1892
    %v1895 = vmul.f32 %v1884, %v1893
    %v1896 = vmul.f32 %v1886, %v1894
    %vm1897 = vcmp.gt.s32.totalorder %v1186, 7
    %vm1898 = vcmp.gt.s32.totalorder %v1187, 7
    %v1899 = vsel %vm1897, 1, 0
    %v1900 = vsel %vm1898, 1, 0
    %1901 = vset.pattern.permute.xlu0 0
    %1902 = vperm.xlu0 %1901, %v1899
    %v1903 = vpop.permute.xlu0 %1902
    %1904 = vset.pattern.permute.xlu0 0
    %1905 = vperm.xlu0 %1904, %v1900
    %v1906 = vpop.permute.xlu0 %1905
    %vm1907 = vcmp.eq.s32.totalorder %v1903, 1
    %vm1908 = vcmp.eq.s32.totalorder %v1906, 1
    %v1909 = vsel %vm1907, %v1895, 0.0
    %v1910 = vsel %vm1908, %v1896, 0.0
    %v1911 = vsel %vm1907, %v1891, 0.0
    %v1912 = vsel %vm1908, %v1892, 0.0
    %s1913 = scalar_lea.vmem [#allocation2], 32
    %v1914 = vld [vmem:[%s1913] sm:$0xff]
    %v1915 = vld [vmem:[%s1913 + $0x8] sm:$0xff]
    %v1916 = vld [vmem:[%s1913 + $0x10] sm:$0xff]
    %v1917 = vld [vmem:[%s1913 + $0x18] sm:$0xff]
    %v1918 = vunpack.c.l.bf16 %v1914
    %v1919 = vunpack.c.l.bf16 %v1915
    %v1920 = vunpack.c.l.bf16 %v1916
    %v1921 = vunpack.c.l.bf16 %v1917
    %v1922 = vunpack.c.h.bf16 %v1914
    %v1923 = vunpack.c.h.bf16 %v1915
    %v1924 = vunpack.c.h.bf16 %v1916
    %v1925 = vunpack.c.h.bf16 %v1917
    %v1926 = vpack.c.bf16 %v1535, %v1534
    %1927 = vmatprep.subr.bf16.mxu0 %v1331
    %1928 = vmatpush1.bf16.msra.mxu0 %v1330
    %1929 = vmatprep.subr.bf16.mxu0 %v1335
    %1930 = vmatpush1.bf16.msra.mxu0 %v1334
    %1931 = vmatprep.subr.bf16.mxu0 %v1339
    %1932 = vmatpush1.bf16.msra.mxu0 %v1338
    %1933 = vmatprep.subr.bf16.mxu0 %v1343
    %1934 = vmatpush1.bf16.msra.mxu0 %v1342
    %1935 = vmatprep.subr.bf16.mxu0 %v1347
    %1936 = vmatpush1.bf16.msra.mxu0 %v1346
    %1937 = vmatprep.subr.bf16.mxu0 %v1351
    %1938 = vmatpush1.bf16.msra.mxu0 %v1350
    %1939 = vmatprep.subr.bf16.mxu0 %v1355
    %1940 = vmatpush1.bf16.msra.mxu0 %v1354
    %1941 = vmatprep.subr.bf16.mxu0 %v1359
    %1942 = vmatpush1.bf16.msra.mxu0 %v1358
    %1943 = vmatprep.subr.bf16.mxu0 0
    %1944 = vmatpush1.bf16.msra.mxu0 0
    %1945 = vmatprep.subr.bf16.mxu0 0
    %1946 = vmatpush1.bf16.msra.mxu0 0
    %1947 = vmatprep.subr.bf16.mxu0 0
    %1948 = vmatpush1.bf16.msra.mxu0 0
    %1949 = vmatprep.subr.bf16.mxu0 0
    %1950 = vmatpush1.bf16.msra.mxu0 0
    %1951 = vmatprep.subr.bf16.mxu0 0
    %1952 = vmatpush1.bf16.msra.mxu0 0
    %1953 = vmatprep.subr.bf16.mxu0 0
    %1954 = vmatpush1.bf16.msra.mxu0 0
    %1955 = vmatprep.subr.bf16.mxu0 0
    %1956 = vmatpush1.bf16.msra.mxu0 0
    %1957 = vmatprep.subr.bf16.mxu0 0
    %1958 = vmatpush1.bf16.msra.mxu0 0
    %1959 = vmatprep.mubr.bf16.mxu0 0
    %1960 = vmatmul.mubr.bf16.gmra.mrb[0].mxu0 %v1926
    %v1961 = vpop.f32.mrb[0].mxu0
    %v1962 = vadd.f32 0.0, %v1961
    %v1963 = vpop.f32.mrb[0].mxu0
    %v1964 = vadd.f32 0.0, %v1963
    %v1965 = vpop.f32.mrb[0].mxu0
    %v1966 = vadd.f32 0.0, %v1965
    %v1967 = vpop.f32.mrb[0].mxu0
    %v1968 = vadd.f32 0.0, %v1967
    %1969 = vdwg.mxu0
    %1970 = vmatprep.subr.bf16.mxu0 %v1333
    %1971 = vmatpush1.bf16.msra.mxu0 %v1332
    %1972 = vmatprep.subr.bf16.mxu0 %v1337
    %1973 = vmatpush1.bf16.msra.mxu0 %v1336
    %1974 = vmatprep.subr.bf16.mxu0 %v1341
    %1975 = vmatpush1.bf16.msra.mxu0 %v1340
    %1976 = vmatprep.subr.bf16.mxu0 %v1345
    %1977 = vmatpush1.bf16.msra.mxu0 %v1344
    %1978 = vmatprep.subr.bf16.mxu0 %v1349
    %1979 = vmatpush1.bf16.msra.mxu0 %v1348
    %1980 = vmatprep.subr.bf16.mxu0 %v1353
    %1981 = vmatpush1.bf16.msra.mxu0 %v1352
    %1982 = vmatprep.subr.bf16.mxu0 %v1357
    %1983 = vmatpush1.bf16.msra.mxu0 %v1356
    %1984 = vmatprep.subr.bf16.mxu0 %v1361
    %1985 = vmatpush1.bf16.msra.mxu0 %v1360
    %1986 = vmatprep.subr.bf16.mxu0 0
    %1987 = vmatpush1.bf16.msra.mxu0 0
    %1988 = vmatprep.subr.bf16.mxu0 0
    %1989 = vmatpush1.bf16.msra.mxu0 0
    %1990 = vmatprep.subr.bf16.mxu0 0
    %1991 = vmatpush1.bf16.msra.mxu0 0
    %1992 = vmatprep.subr.bf16.mxu0 0
    %1993 = vmatpush1.bf16.msra.mxu0 0
    %1994 = vmatprep.subr.bf16.mxu0 0
    %1995 = vmatpush1.bf16.msra.mxu0 0
    %1996 = vmatprep.subr.bf16.mxu0 0
    %1997 = vmatpush1.bf16.msra.mxu0 0
    %1998 = vmatprep.subr.bf16.mxu0 0
    %1999 = vmatpush1.bf16.msra.mxu0 0
    %2000 = vmatprep.subr.bf16.mxu0 0
    %2001 = vmatpush1.bf16.msra.mxu0 0
    %2002 = vmatprep.mubr.bf16.mxu0 0
    %2003 = vmatmul.mubr.bf16.gmra.mrb[0].mxu0 %v1926
    %v2004 = vpop.f32.mrb[0].mxu0
    %v2005 = vadd.f32 0.0, %v2004
    %v2006 = vpop.f32.mrb[0].mxu0
    %v2007 = vadd.f32 0.0, %v2006
    %v2008 = vpop.f32.mrb[0].mxu0
    %v2009 = vadd.f32 0.0, %v2008
    %v2010 = vpop.f32.mrb[0].mxu0
    %v2011 = vadd.f32 0.0, %v2010
    %2012 = vdwg.mxu0
    %v2013 = vadd.f32 %v1918, %v1962
    %v2014 = vadd.f32 %v1919, %v1964
    %v2015 = vadd.f32 %v1920, %v2005
    %v2016 = vadd.f32 %v1921, %v2007
    %v2017 = vadd.f32 %v1922, %v1966
    %v2018 = vadd.f32 %v1923, %v1968
    %v2019 = vadd.f32 %v1924, %v2009
    %v2020 = vadd.f32 %v1925, %v2011
    %v2021 = vxor.u32 %v2013, 2147483648
    %v2022 = vxor.u32 %v2017, 2147483648
    %v2023 = vmul.f32 %v2021, 1.442695
    %v2024 = vpow.pop %v2023
    %v2025 = vmul.f32 %v2022, 1.442695
    %v2026 = vpow.pop %v2025
    %v2027 = vadd.f32 %v2024, 1.0
    %v2028 = vadd.f32 %v2026, 1.0
    %v2029 = vrcp.pop %v2027
    %v2030 = vmul.f32 1.0, %v2029
    %v2031 = vrcp.pop %v2028
    %v2032 = vmul.f32 1.0, %v2031
    %v2033 = vxor.u32 %v2014, 2147483648
    %v2034 = vxor.u32 %v2018, 2147483648
    %v2035 = vmul.f32 %v2033, 1.442695
    %v2036 = vpow.pop %v2035
    %v2037 = vmul.f32 %v2034, 1.442695
    %v2038 = vpow.pop %v2037
    %v2039 = vadd.f32 %v2036, 1.0
    %v2040 = vadd.f32 %v2038, 1.0
    %v2041 = vrcp.pop %v2039
    %v2042 = vmul.f32 1.0, %v2041
    %v2043 = vrcp.pop %v2040
    %v2044 = vmul.f32 1.0, %v2043
    %v2045 = vtanh.pop %v2015
    %v2046 = vtanh.pop %v2019
    %v2047 = vxor.u32 %v2016, 2147483648
    %v2048 = vxor.u32 %v2020, 2147483648
    %v2049 = vmul.f32 %v2047, 1.442695
    %v2050 = vpow.pop %v2049
    %v2051 = vmul.f32 %v2048, 1.442695
    %v2052 = vpow.pop %v2051
    %v2053 = vadd.f32 %v2050, 1.0
    %v2054 = vadd.f32 %v2052, 1.0
    %v2055 = vrcp.pop %v2053
    %v2056 = vmul.f32 1.0, %v2055
    %v2057 = vrcp.pop %v2054
    %v2058 = vmul.f32 1.0, %v2057
    %v2059 = vmul.f32 %v2042, %v1530
    %v2060 = vmul.f32 %v2044, %v1531
    %v2061 = vmul.f32 %v2030, %v2045
    %v2062 = vmul.f32 %v2032, %v2046
    %v2063 = vadd.f32 %v2059, %v2061
    %v2064 = vadd.f32 %v2060, %v2062
    %v2065 = vtanh.pop %v2063
    %v2066 = vtanh.pop %v2064
    %v2067 = vmul.f32 %v2056, %v2065
    %v2068 = vmul.f32 %v2058, %v2066
    %vm2069 = vcmp.eq.s32.totalorder %v1188, 1
    %vm2070 = vcmp.eq.s32.totalorder %v1189, 1
    %v2071 = vsel %vm2069, 1, 0
    %v2072 = vsel %vm2070, 1, 0
    %2073 = vset.pattern.permute.xlu0 0
    %2074 = vperm.xlu0 %2073, %v2071
    %v2075 = vpop.permute.xlu0 %2074
    %2076 = vset.pattern.permute.xlu0 0
    %2077 = vperm.xlu0 %2076, %v2072
    %v2078 = vpop.permute.xlu0 %2077
    %vm2079 = vcmp.eq.s32.totalorder %v2075, 1
    %vm2080 = vcmp.eq.s32.totalorder %v2078, 1
    %v2081 = vsel %vm2079, %v2067, %v1548
    %v2082 = vsel %vm2080, %v2068, %v1549
    %s2083 = scalar_lea.vmem [#allocation3], 192
    %v2084 = vld [vmem:[%s2083] sm:$0xff]
    %v2085 = vld [vmem:[%s2083 + $0x8] sm:$0xff]
    %v2086 = vld [vmem:[%s2083 + $0x10] sm:$0xff]
    %v2087 = vld [vmem:[%s2083 + $0x18] sm:$0xff]
    %v2088 = vunpack.c.l.bf16 %v2084
    %v2089 = vunpack.c.l.bf16 %v2085
    %v2090 = vunpack.c.l.bf16 %v2086
    %v2091 = vunpack.c.l.bf16 %v2087
    %v2092 = vunpack.c.h.bf16 %v2084
    %v2093 = vunpack.c.h.bf16 %v2085
    %v2094 = vunpack.c.h.bf16 %v2086
    %v2095 = vunpack.c.h.bf16 %v2087
    %v2096 = vpack.c.bf16 %v1910, %v1909
    %2097 = vmatprep.subr.bf16.mxu0 %v1692
    %2098 = vmatpush1.bf16.msra.mxu0 %v1691
    %2099 = vmatprep.subr.bf16.mxu0 %v1696
    %2100 = vmatpush1.bf16.msra.mxu0 %v1695
    %2101 = vmatprep.subr.bf16.mxu0 %v1700
    %2102 = vmatpush1.bf16.msra.mxu0 %v1699
    %2103 = vmatprep.subr.bf16.mxu0 %v1704
    %2104 = vmatpush1.bf16.msra.mxu0 %v1703
    %2105 = vmatprep.subr.bf16.mxu0 %v1708
    %2106 = vmatpush1.bf16.msra.mxu0 %v1707
    %2107 = vmatprep.subr.bf16.mxu0 %v1712
    %2108 = vmatpush1.bf16.msra.mxu0 %v1711
    %2109 = vmatprep.subr.bf16.mxu0 %v1716
    %2110 = vmatpush1.bf16.msra.mxu0 %v1715
    %2111 = vmatprep.subr.bf16.mxu0 %v1720
    %2112 = vmatpush1.bf16.msra.mxu0 %v1719
    %2113 = vmatprep.subr.bf16.mxu0 0
    %2114 = vmatpush1.bf16.msra.mxu0 0
    %2115 = vmatprep.subr.bf16.mxu0 0
    %2116 = vmatpush1.bf16.msra.mxu0 0
    %2117 = vmatprep.subr.bf16.mxu0 0
    %2118 = vmatpush1.bf16.msra.mxu0 0
    %2119 = vmatprep.subr.bf16.mxu0 0
    %2120 = vmatpush1.bf16.msra.mxu0 0
    %2121 = vmatprep.subr.bf16.mxu0 0
    %2122 = vmatpush1.bf16.msra.mxu0 0
    %2123 = vmatprep.subr.bf16.mxu0 0
    %2124 = vmatpush1.bf16.msra.mxu0 0
    %2125 = vmatprep.subr.bf16.mxu0 0
    %2126 = vmatpush1.bf16.msra.mxu0 0
    %2127 = vmatprep.subr.bf16.mxu0 0
    %2128 = vmatpush1.bf16.msra.mxu0 0
    %2129 = vmatprep.mubr.bf16.mxu0 0
    %2130 = vmatmul.mubr.bf16.gmra.mrb[0].mxu0 %v2096
    %v2131 = vpop.f32.mrb[0].mxu0
    %v2132 = vadd.f32 0.0, %v2131
    %v2133 = vpop.f32.mrb[0].mxu0
    %v2134 = vadd.f32 0.0, %v2133
    %v2135 = vpop.f32.mrb[0].mxu0
    %v2136 = vadd.f32 0.0, %v2135
    %v2137 = vpop.f32.mrb[0].mxu0
    %v2138 = vadd.f32 0.0, %v2137
    %2139 = vdwg.mxu0
    %2140 = vmatprep.subr.bf16.mxu0 %v1694
    %2141 = vmatpush1.bf16.msra.mxu0 %v1693
    %2142 = vmatprep.subr.bf16.mxu0 %v1698
    %2143 = vmatpush1.bf16.msra.mxu0 %v1697
    %2144 = vmatprep.subr.bf16.mxu0 %v1702
    %2145 = vmatpush1.bf16.msra.mxu0 %v1701
    %2146 = vmatprep.subr.bf16.mxu0 %v1706
    %2147 = vmatpush1.bf16.msra.mxu0 %v1705
    %2148 = vmatprep.subr.bf16.mxu0 %v1710
    %2149 = vmatpush1.bf16.msra.mxu0 %v1709
    %2150 = vmatprep.subr.bf16.mxu0 %v1714
    %2151 = vmatpush1.bf16.msra.mxu0 %v1713
    %2152 = vmatprep.subr.bf16.mxu0 %v1718
    %2153 = vmatpush1.bf16.msra.mxu0 %v1717
    %2154 = vmatprep.subr.bf16.mxu0 %v1722
    %2155 = vmatpush1.bf16.msra.mxu0 %v1721
    %2156 = vmatprep.subr.bf16.mxu0 0
    %2157 = vmatpush1.bf16.msra.mxu0 0
    %2158 = vmatprep.subr.bf16.mxu0 0
    %2159 = vmatpush1.bf16.msra.mxu0 0
    %2160 = vmatprep.subr.bf16.mxu0 0
    %2161 = vmatpush1.bf16.msra.mxu0 0
    %2162 = vmatprep.subr.bf16.mxu0 0
    %2163 = vmatpush1.bf16.msra.mxu0 0
    %2164 = vmatprep.subr.bf16.mxu0 0
    %2165 = vmatpush1.bf16.msra.mxu0 0
    %2166 = vmatprep.subr.bf16.mxu0 0
    %2167 = vmatpush1.bf16.msra.mxu0 0
    %2168 = vmatprep.subr.bf16.mxu0 0
    %2169 = vmatpush1.bf16.msra.mxu0 0
    %2170 = vmatprep.subr.bf16.mxu0 0
    %2171 = vmatpush1.bf16.msra.mxu0 0
    %2172 = vmatprep.mubr.bf16.mxu0 0
    %2173 = vmatmul.mubr.bf16.gmra.mrb[0].mxu0 %v2096
    %v2174 = vpop.f32.mrb[0].mxu0
    %v2175 = vadd.f32 0.0, %v2174
    %v2176 = vpop.f32.mrb[0].mxu0
    %v2177 = vadd.f32 0.0, %v2176
    %v2178 = vpop.f32.mrb[0].mxu0
    %v2179 = vadd.f32 0.0, %v2178
    %v2180 = vpop.f32.mrb[0].mxu0
    %v2181 = vadd.f32 0.0, %v2180
    %2182 = vdwg.mxu0
    %v2183 = vadd.f32 %v2088, %v2132
    %v2184 = vadd.f32 %v2089, %v2134
    %v2185 = vadd.f32 %v2090, %v2175
    %v2186 = vadd.f32 %v2091, %v2177
    %v2187 = vadd.f32 %v2092, %v2136
    %v2188 = vadd.f32 %v2093, %v2138
    %v2189 = vadd.f32 %v2094, %v2179
    %v2190 = vadd.f32 %v2095, %v2181
    %v2191 = vxor.u32 %v2183, 2147483648
    %v2192 = vxor.u32 %v2187, 2147483648
    %v2193 = vmul.f32 %v2191, 1.442695
    %v2194 = vpow.pop %v2193
    %v2195 = vmul.f32 %v2192, 1.442695
    %v2196 = vpow.pop %v2195
    %v2197 = vadd.f32 %v2194, 1.0
    %v2198 = vadd.f32 %v2196, 1.0
    %v2199 = vrcp.pop %v2197
    %v2200 = vmul.f32 1.0, %v2199
    %v2201 = vrcp.pop %v2198
    %v2202 = vmul.f32 1.0, %v2201
    %v2203 = vxor.u32 %v2184, 2147483648
    %v2204 = vxor.u32 %v2188, 2147483648
    %v2205 = vmul.f32 %v2203, 1.442695
    %v2206 = vpow.pop %v2205
    %v2207 = vmul.f32 %v2204, 1.442695
    %v2208 = vpow.pop %v2207
    %v2209 = vadd.f32 %v2206, 1.0
    %v2210 = vadd.f32 %v2208, 1.0
    %v2211 = vrcp.pop %v2209
    %v2212 = vmul.f32 1.0, %v2211
    %v2213 = vrcp.pop %v2210
    %v2214 = vmul.f32 1.0, %v2213
    %v2215 = vtanh.pop %v2185
    %v2216 = vtanh.pop %v2189
    %v2217 = vxor.u32 %v2186, 2147483648
    %v2218 = vxor.u32 %v2190, 2147483648
    %v2219 = vmul.f32 %v2217, 1.442695
    %v2220 = vpow.pop %v2219
    %v2221 = vmul.f32 %v2218, 1.442695
    %v2222 = vpow.pop %v2221
    %v2223 = vadd.f32 %v2220, 1.0
    %v2224 = vadd.f32 %v2222, 1.0
    %v2225 = vrcp.pop %v2223
    %v2226 = vmul.f32 1.0, %v2225
    %v2227 = vrcp.pop %v2224
    %v2228 = vmul.f32 1.0, %v2227
    %v2229 = vmul.f32 %v2212, %v1911
    %v2230 = vmul.f32 %v2214, %v1912
    %v2231 = vmul.f32 %v2200, %v2215
    %v2232 = vmul.f32 %v2202, %v2216
    %v2233 = vadd.f32 %v2229, %v2231
    %v2234 = vadd.f32 %v2230, %v2232
    %v2235 = vtanh.pop %v2233
    %v2236 = vtanh.pop %v2234
    %v2237 = vmul.f32 %v2226, %v2235
    %v2238 = vmul.f32 %v2228, %v2236
    %vm2239 = vcmp.gt.s32.totalorder %v1186, 6
    %vm2240 = vcmp.gt.s32.totalorder %v1187, 6
    %v2241 = vsel %vm2239, 1, 0
    %v2242 = vsel %vm2240, 1, 0
    %2243 = vset.pattern.permute.xlu0 0
    %2244 = vperm.xlu0 %2243, %v2241
    %v2245 = vpop.permute.xlu0 %2244
    %2246 = vset.pattern.permute.xlu0 0
    %2247 = vperm.xlu0 %2246, %v2242
    %v2248 = vpop.permute.xlu0 %2247
    %vm2249 = vcmp.eq.s32.totalorder %v2245, 1
    %vm2250 = vcmp.eq.s32.totalorder %v2248, 1
    %v2251 = vsel %vm2249, %v2237, %v1909
    %v2252 = vsel %vm2250, %v2238, %v1910
    %v2253 = vsel %vm2249, %v2233, %v1911
    %v2254 = vsel %vm2250, %v2234, %v1912
    %s2255 = scalar_lea.vmem [#allocation2], 64
    %v2256 = vld [vmem:[%s2255] sm:$0xff]
    %v2257 = vld [vmem:[%s2255 + $0x8] sm:$0xff]
    %v2258 = vld [vmem:[%s2255 + $0x10] sm:$0xff]
    %v2259 = vld [vmem:[%s2255 + $0x18] sm:$0xff]
    %v2260 = vunpack.c.l.bf16 %v2256
    %v2261 = vunpack.c.l.bf16 %v2257
    %v2262 = vunpack.c.l.bf16 %v2258
    %v2263 = vunpack.c.l.bf16 %v2259
    %v2264 = vunpack.c.h.bf16 %v2256
    %v2265 = vunpack.c.h.bf16 %v2257
    %v2266 = vunpack.c.h.bf16 %v2258
    %v2267 = vunpack.c.h.bf16 %v2259
    %v2268 = vpack.c.bf16 %v2068, %v2067
    %2269 = vmatprep.subr.bf16.mxu0 %v1331
    %2270 = vmatpush1.bf16.msra.mxu0 %v1330
    %2271 = vmatprep.subr.bf16.mxu0 %v1335
    %2272 = vmatpush1.bf16.msra.mxu0 %v1334
    %2273 = vmatprep.subr.bf16.mxu0 %v1339
    %2274 = vmatpush1.bf16.msra.mxu0 %v1338
    %2275 = vmatprep.subr.bf16.mxu0 %v1343
    %2276 = vmatpush1.bf16.msra.mxu0 %v1342
    %2277 = vmatprep.subr.bf16.mxu0 %v1347
    %2278 = vmatpush1.bf16.msra.mxu0 %v1346
    %2279 = vmatprep.subr.bf16.mxu0 %v1351
    %2280 = vmatpush1.bf16.msra.mxu0 %v1350
    %2281 = vmatprep.subr.bf16.mxu0 %v1355
    %2282 = vmatpush1.bf16.msra.mxu0 %v1354
    %2283 = vmatprep.subr.bf16.mxu0 %v1359
    %2284 = vmatpush1.bf16.msra.mxu0 %v1358
    %2285 = vmatprep.subr.bf16.mxu0 0
    %2286 = vmatpush1.bf16.msra.mxu0 0
    %2287 = vmatprep.subr.bf16.mxu0 0
    %2288 = vmatpush1.bf16.msra.mxu0 0
    %2289 = vmatprep.subr.bf16.mxu0 0
    %2290 = vmatpush1.bf16.msra.mxu0 0
    %2291 = vmatprep.subr.bf16.mxu0 0
    %2292 = vmatpush1.bf16.msra.mxu0 0
    %2293 = vmatprep.subr.bf16.mxu0 0
    %2294 = vmatpush1.bf16.msra.mxu0 0
    %2295 = vmatprep.subr.bf16.mxu0 0
    %2296 = vmatpush1.bf16.msra.mxu0 0
    %2297 = vmatprep.subr.bf16.mxu0 0
    %2298 = vmatpush1.bf16.msra.mxu0 0
    %2299 = vmatprep.subr.bf16.mxu0 0
    %2300 = vmatpush1.bf16.msra.mxu0 0
    %2301 = vmatprep.mubr.bf16.mxu0 0
    %2302 = vmatmul.mubr.bf16.gmra.mrb[0].mxu0 %v2268
    %v2303 = vpop.f32.mrb[0].mxu0
    %v2304 = vadd.f32 0.0, %v2303
    %v2305 = vpop.f32.mrb[0].mxu0
    %v2306 = vadd.f32 0.0, %v2305
    %v2307 = vpop.f32.mrb[0].mxu0
    %v2308 = vadd.f32 0.0, %v2307
    %v2309 = vpop.f32.mrb[0].mxu0
    %v2310 = vadd.f32 0.0, %v2309
    %2311 = vdwg.mxu0
    %2312 = vmatprep.subr.bf16.mxu0 %v1333
    %2313 = vmatpush1.bf16.msra.mxu0 %v1332
    %2314 = vmatprep.subr.bf16.mxu0 %v1337
    %2315 = vmatpush1.bf16.msra.mxu0 %v1336
    %2316 = vmatprep.subr.bf16.mxu0 %v1341
    %2317 = vmatpush1.bf16.msra.mxu0 %v1340
    %2318 = vmatprep.subr.bf16.mxu0 %v1345
    %2319 = vmatpush1.bf16.msra.mxu0 %v1344
    %2320 = vmatprep.subr.bf16.mxu0 %v1349
    %2321 = vmatpush1.bf16.msra.mxu0 %v1348
    %2322 = vmatprep.subr.bf16.mxu0 %v1353
    %2323 = vmatpush1.bf16.msra.mxu0 %v1352
    %2324 = vmatprep.subr.bf16.mxu0 %v1357
    %2325 = vmatpush1.bf16.msra.mxu0 %v1356
    %2326 = vmatprep.subr.bf16.mxu0 %v1361
    %2327 = vmatpush1.bf16.msra.mxu0 %v1360
    %2328 = vmatprep.subr.bf16.mxu0 0
    %2329 = vmatpush1.bf16.msra.mxu0 0
    %2330 = vmatprep.subr.bf16.mxu0 0
    %2331 = vmatpush1.bf16.msra.mxu0 0
    %2332 = vmatprep.subr.bf16.mxu0 0
    %2333 = vmatpush1.bf16.msra.mxu0 0
    %2334 = vmatprep.subr.bf16.mxu0 0
    %2335 = vmatpush1.bf16.msra.mxu0 0
    %2336 = vmatprep.subr.bf16.mxu0 0
    %2337 = vmatpush1.bf16.msra.mxu0 0
    %2338 = vmatprep.subr.bf16.mxu0 0
    %2339 = vmatpush1.bf16.msra.mxu0 0
    %2340 = vmatprep.subr.bf16.mxu0 0
    %2341 = vmatpush1.bf16.msra.mxu0 0
    %2342 = vmatprep.subr.bf16.mxu0 0
    %2343 = vmatpush1.bf16.msra.mxu0 0
    %2344 = vmatprep.mubr.bf16.mxu0 0
    %2345 = vmatmul.mubr.bf16.gmra.mrb[0].mxu0 %v2268
    %v2346 = vpop.f32.mrb[0].mxu0
    %v2347 = vadd.f32 0.0, %v2346
    %v2348 = vpop.f32.mrb[0].mxu0
    %v2349 = vadd.f32 0.0, %v2348
    %v2350 = vpop.f32.mrb[0].mxu0
    %v2351 = vadd.f32 0.0, %v2350
    %v2352 = vpop.f32.mrb[0].mxu0
    %v2353 = vadd.f32 0.0, %v2352
    %2354 = vdwg.mxu0
    %v2355 = vadd.f32 %v2260, %v2304
    %v2356 = vadd.f32 %v2261, %v2306
    %v2357 = vadd.f32 %v2262, %v2347
    %v2358 = vadd.f32 %v2263, %v2349
    %v2359 = vadd.f32 %v2264, %v2308
    %v2360 = vadd.f32 %v2265, %v2310
    %v2361 = vadd.f32 %v2266, %v2351
    %v2362 = vadd.f32 %v2267, %v2353
    %v2363 = vxor.u32 %v2355, 2147483648
    %v2364 = vxor.u32 %v2359, 2147483648
    %v2365 = vmul.f32 %v2363, 1.442695
    %v2366 = vpow.pop %v2365
    %v2367 = vmul.f32 %v2364, 1.442695
    %v2368 = vpow.pop %v2367
    %v2369 = vadd.f32 %v2366, 1.0
    %v2370 = vadd.f32 %v2368, 1.0
    %v2371 = vrcp.pop %v2369
    %v2372 = vmul.f32 1.0, %v2371
    %v2373 = vrcp.pop %v2370
    %v2374 = vmul.f32 1.0, %v2373
    %v2375 = vxor.u32 %v2356, 2147483648
    %v2376 = vxor.u32 %v2360, 2147483648
    %v2377 = vmul.f32 %v2375, 1.442695
    %v2378 = vpow.pop %v2377
    %v2379 = vmul.f32 %v2376, 1.442695
    %v2380 = vpow.pop %v2379
    %v2381 = vadd.f32 %v2378, 1.0
    %v2382 = vadd.f32 %v2380, 1.0
    %v2383 = vrcp.pop %v2381
    %v2384 = vmul.f32 1.0, %v2383
    %v2385 = vrcp.pop %v2382
    %v2386 = vmul.f32 1.0, %v2385
    %v2387 = vtanh.pop %v2357
    %v2388 = vtanh.pop %v2361
    %v2389 = vxor.u32 %v2358, 2147483648
    %v2390 = vxor.u32 %v2362, 2147483648
    %v2391 = vmul.f32 %v2389, 1.442695
    %v2392 = vpow.pop %v2391
    %v2393 = vmul.f32 %v2390, 1.442695
    %v2394 = vpow.pop %v2393
    %v2395 = vadd.f32 %v2392, 1.0
    %v2396 = vadd.f32 %v2394, 1.0
    %v2397 = vrcp.pop %v2395
    %v2398 = vmul.f32 1.0, %v2397
    %v2399 = vrcp.pop %v2396
    %v2400 = vmul.f32 1.0, %v2399
    %v2401 = vmul.f32 %v2384, %v2063
    %v2402 = vmul.f32 %v2386, %v2064
    %v2403 = vmul.f32 %v2372, %v2387
    %v2404 = vmul.f32 %v2374, %v2388
    %v2405 = vadd.f32 %v2401, %v2403
    %v2406 = vadd.f32 %v2402, %v2404
    %v2407 = vtanh.pop %v2405
    %v2408 = vtanh.pop %v2406
    %v2409 = vmul.f32 %v2398, %v2407
    %v2410 = vmul.f32 %v2400, %v2408
    %vm2411 = vcmp.eq.s32.totalorder %v1188, 2
    %vm2412 = vcmp.eq.s32.totalorder %v1189, 2
    %v2413 = vsel %vm2411, 1, 0
    %v2414 = vsel %vm2412, 1, 0
    %2415 = vset.pattern.permute.xlu0 0
    %2416 = vperm.xlu0 %2415, %v2413
    %v2417 = vpop.permute.xlu0 %2416
    %2418 = vset.pattern.permute.xlu0 0
    %2419 = vperm.xlu0 %2418, %v2414
    %v2420 = vpop.permute.xlu0 %2419
    %vm2421 = vcmp.eq.s32.totalorder %v2417, 1
    %vm2422 = vcmp.eq.s32.totalorder %v2420, 1
    %v2423 = vsel %vm2421, %v2409, %v2081
    %v2424 = vsel %vm2422, %v2410, %v2082
    %s2425 = scalar_lea.vmem [#allocation3], 160
    %v2426 = vld [vmem:[%s2425] sm:$0xff]
    %v2427 = vld [vmem:[%s2425 + $0x8] sm:$0xff]
    %v2428 = vld [vmem:[%s2425 + $0x10] sm:$0xff]
    %v2429 = vld [vmem:[%s2425 + $0x18] sm:$0xff]
    %v2430 = vunpack.c.l.bf16 %v2426
    %v2431 = vunpack.c.l.bf16 %v2427
    %v2432 = vunpack.c.l.bf16 %v2428
    %v2433 = vunpack.c.l.bf16 %v2429
    %v2434 = vunpack.c.h.bf16 %v2426
    %v2435 = vunpack.c.h.bf16 %v2427
    %v2436 = vunpack.c.h.bf16 %v2428
    %v2437 = vunpack.c.h.bf16 %v2429
    %v2438 = vpack.c.bf16 %v2252, %v2251
    %2439 = vmatprep.subr.bf16.mxu0 %v1692
    %2440 = vmatpush1.bf16.msra.mxu0 %v1691
    %2441 = vmatprep.subr.bf16.mxu0 %v1696
    %2442 = vmatpush1.bf16.msra.mxu0 %v1695
    %2443 = vmatprep.subr.bf16.mxu0 %v1700
    %2444 = vmatpush1.bf16.msra.mxu0 %v1699
    %2445 = vmatprep.subr.bf16.mxu0 %v1704
    %2446 = vmatpush1.bf16.msra.mxu0 %v1703
    %2447 = vmatprep.subr.bf16.mxu0 %v1708
    %2448 = vmatpush1.bf16.msra.mxu0 %v1707
    %2449 = vmatprep.subr.bf16.mxu0 %v1712
    %2450 = vmatpush1.bf16.msra.mxu0 %v1711
    %2451 = vmatprep.subr.bf16.mxu0 %v1716
    %2452 = vmatpush1.bf16.msra.mxu0 %v1715
    %2453 = vmatprep.subr.bf16.mxu0 %v1720
    %2454 = vmatpush1.bf16.msra.mxu0 %v1719
    %2455 = vmatprep.subr.bf16.mxu0 0
    %2456 = vmatpush1.bf16.msra.mxu0 0
    %2457 = vmatprep.subr.bf16.mxu0 0
    %2458 = vmatpush1.bf16.msra.mxu0 0
    %2459 = vmatprep.subr.bf16.mxu0 0
    %2460 = vmatpush1.bf16.msra.mxu0 0
    %2461 = vmatprep.subr.bf16.mxu0 0
    %2462 = vmatpush1.bf16.msra.mxu0 0
    %2463 = vmatprep.subr.bf16.mxu0 0
    %2464 = vmatpush1.bf16.msra.mxu0 0
    %2465 = vmatprep.subr.bf16.mxu0 0
    %2466 = vmatpush1.bf16.msra.mxu0 0
    %2467 = vmatprep.subr.bf16.mxu0 0
    %2468 = vmatpush1.bf16.msra.mxu0 0
    %2469 = vmatprep.subr.bf16.mxu0 0
    %2470 = vmatpush1.bf16.msra.mxu0 0
    %2471 = vmatprep.mubr.bf16.mxu0 0
    %2472 = vmatmul.mubr.bf16.gmra.mrb[0].mxu0 %v2438
    %v2473 = vpop.f32.mrb[0].mxu0
    %v2474 = vadd.f32 0.0, %v2473
    %v2475 = vpop.f32.mrb[0].mxu0
    %v2476 = vadd.f32 0.0, %v2475
    %v2477 = vpop.f32.mrb[0].mxu0
    %v2478 = vadd.f32 0.0, %v2477
    %v2479 = vpop.f32.mrb[0].mxu0
    %v2480 = vadd.f32 0.0, %v2479
    %2481 = vdwg.mxu0
    %2482 = vmatprep.subr.bf16.mxu0 %v1694
    %2483 = vmatpush1.bf16.msra.mxu0 %v1693
    %2484 = vmatprep.subr.bf16.mxu0 %v1698
    %2485 = vmatpush1.bf16.msra.mxu0 %v1697
    %2486 = vmatprep.subr.bf16.mxu0 %v1702
    %2487 = vmatpush1.bf16.msra.mxu0 %v1701
    %2488 = vmatprep.subr.bf16.mxu0 %v1706
    %2489 = vmatpush1.bf16.msra.mxu0 %v1705
    %2490 = vmatprep.subr.bf16.mxu0 %v1710
    %2491 = vmatpush1.bf16.msra.mxu0 %v1709
    %2492 = vmatprep.subr.bf16.mxu0 %v1714
    %2493 = vmatpush1.bf16.msra.mxu0 %v1713
    %2494 = vmatprep.subr.bf16.mxu0 %v1718
    %2495 = vmatpush1.bf16.msra.mxu0 %v1717
    %2496 = vmatprep.subr.bf16.mxu0 %v1722
    %2497 = vmatpush1.bf16.msra.mxu0 %v1721
    %2498 = vmatprep.subr.bf16.mxu0 0
    %2499 = vmatpush1.bf16.msra.mxu0 0
    %2500 = vmatprep.subr.bf16.mxu0 0
    %2501 = vmatpush1.bf16.msra.mxu0 0
    %2502 = vmatprep.subr.bf16.mxu0 0
    %2503 = vmatpush1.bf16.msra.mxu0 0
    %2504 = vmatprep.subr.bf16.mxu0 0
    %2505 = vmatpush1.bf16.msra.mxu0 0
    %2506 = vmatprep.subr.bf16.mxu0 0
    %2507 = vmatpush1.bf16.msra.mxu0 0
    %2508 = vmatprep.subr.bf16.mxu0 0
    %2509 = vmatpush1.bf16.msra.mxu0 0
    %2510 = vmatprep.subr.bf16.mxu0 0
    %2511 = vmatpush1.bf16.msra.mxu0 0
    %2512 = vmatprep.subr.bf16.mxu0 0
    %2513 = vmatpush1.bf16.msra.mxu0 0
    %2514 = vmatprep.mubr.bf16.mxu0 0
    %2515 = vmatmul.mubr.bf16.gmra.mrb[0].mxu0 %v2438
    %v2516 = vpop.f32.mrb[0].mxu0
    %v2517 = vadd.f32 0.0, %v2516
    %v2518 = vpop.f32.mrb[0].mxu0
    %v2519 = vadd.f32 0.0, %v2518
    %v2520 = vpop.f32.mrb[0].mxu0
    %v2521 = vadd.f32 0.0, %v2520
    %v2522 = vpop.f32.mrb[0].mxu0
    %v2523 = vadd.f32 0.0, %v2522
    %2524 = vdwg.mxu0
    %v2525 = vadd.f32 %v2430, %v2474
    %v2526 = vadd.f32 %v2431, %v2476
    %v2527 = vadd.f32 %v2432, %v2517
    %v2528 = vadd.f32 %v2433, %v2519
    %v2529 = vadd.f32 %v2434, %v2478
    %v2530 = vadd.f32 %v2435, %v2480
    %v2531 = vadd.f32 %v2436, %v2521
    %v2532 = vadd.f32 %v2437, %v2523
    %v2533 = vxor.u32 %v2525, 2147483648
    %v2534 = vxor.u32 %v2529, 2147483648
    %v2535 = vmul.f32 %v2533, 1.442695
    %v2536 = vpow.pop %v2535
    %v2537 = vmul.f32 %v2534, 1.442695
    %v2538 = vpow.pop %v2537
    %v2539 = vadd.f32 %v2536, 1.0
    %v2540 = vadd.f32 %v2538, 1.0
    %v2541 = vrcp.pop %v2539
    %v2542 = vmul.f32 1.0, %v2541
    %v2543 = vrcp.pop %v2540
    %v2544 = vmul.f32 1.0, %v2543
    %v2545 = vxor.u32 %v2526, 2147483648
    %v2546 = vxor.u32 %v2530, 2147483648
    %v2547 = vmul.f32 %v2545, 1.442695
    %v2548 = vpow.pop %v2547
    %v2549 = vmul.f32 %v2546, 1.442695
    %v2550 = vpow.pop %v2549
    %v2551 = vadd.f32 %v2548, 1.0
    %v2552 = vadd.f32 %v2550, 1.0
    %v2553 = vrcp.pop %v2551
    %v2554 = vmul.f32 1.0, %v2553
    %v2555 = vrcp.pop %v2552
    %v2556 = vmul.f32 1.0, %v2555
    %v2557 = vtanh.pop %v2527
    %v2558 = vtanh.pop %v2531
    %v2559 = vxor.u32 %v2528, 2147483648
    %v2560 = vxor.u32 %v2532, 2147483648
    %v2561 = vmul.f32 %v2559, 1.442695
    %v2562 = vpow.pop %v2561
    %v2563 = vmul.f32 %v2560, 1.442695
    %v2564 = vpow.pop %v2563
    %v2565 = vadd.f32 %v2562, 1.0
    %v2566 = vadd.f32 %v2564, 1.0
    %v2567 = vrcp.pop %v2565
    %v2568 = vmul.f32 1.0, %v2567
    %v2569 = vrcp.pop %v2566
    %v2570 = vmul.f32 1.0, %v2569
    %v2571 = vmul.f32 %v2554, %v2253
    %v2572 = vmul.f32 %v2556, %v2254
    %v2573 = vmul.f32 %v2542, %v2557
    %v2574 = vmul.f32 %v2544, %v2558
    %v2575 = vadd.f32 %v2571, %v2573
    %v2576 = vadd.f32 %v2572, %v2574
    %v2577 = vtanh.pop %v2575
    %v2578 = vtanh.pop %v2576
    %v2579 = vmul.f32 %v2568, %v2577
    %v2580 = vmul.f32 %v2570, %v2578
    %vm2581 = vcmp.gt.s32.totalorder %v1186, 5
    %vm2582 = vcmp.gt.s32.totalorder %v1187, 5
    %v2583 = vsel %vm2581, 1, 0
    %v2584 = vsel %vm2582, 1, 0
    %2585 = vset.pattern.permute.xlu0 0
    %2586 = vperm.xlu0 %2585, %v2583
    %v2587 = vpop.permute.xlu0 %2586
    %2588 = vset.pattern.permute.xlu0 0
    %2589 = vperm.xlu0 %2588, %v2584
    %v2590 = vpop.permute.xlu0 %2589
    %vm2591 = vcmp.eq.s32.totalorder %v2587, 1
    %vm2592 = vcmp.eq.s32.totalorder %v2590, 1
    %v2593 = vsel %vm2591, %v2579, %v2251
    %v2594 = vsel %vm2592, %v2580, %v2252
    %v2595 = vsel %vm2591, %v2575, %v2253
    %v2596 = vsel %vm2592, %v2576, %v2254
    %s2597 = scalar_lea.vmem [#allocation2], 96
    %v2598 = vld [vmem:[%s2597] sm:$0xff]
    %v2599 = vld [vmem:[%s2597 + $0x8] sm:$0xff]
    %v2600 = vld [vmem:[%s2597 + $0x10] sm:$0xff]
    %v2601 = vld [vmem:[%s2597 + $0x18] sm:$0xff]
    %v2602 = vunpack.c.l.bf16 %v2598
    %v2603 = vunpack.c.l.bf16 %v2599
    %v2604 = vunpack.c.l.bf16 %v2600
    %v2605 = vunpack.c.l.bf16 %v2601
    %v2606 = vunpack.c.h.bf16 %v2598
    %v2607 = vunpack.c.h.bf16 %v2599
    %v2608 = vunpack.c.h.bf16 %v2600
    %v2609 = vunpack.c.h.bf16 %v2601
    %v2610 = vpack.c.bf16 %v2410, %v2409
    %2611 = vmatprep.subr.bf16.mxu0 %v1331
    %2612 = vmatpush1.bf16.msra.mxu0 %v1330
    %2613 = vmatprep.subr.bf16.mxu0 %v1335
    %2614 = vmatpush1.bf16.msra.mxu0 %v1334
    %2615 = vmatprep.subr.bf16.mxu0 %v1339
    %2616 = vmatpush1.bf16.msra.mxu0 %v1338
    %2617 = vmatprep.subr.bf16.mxu0 %v1343
    %2618 = vmatpush1.bf16.msra.mxu0 %v1342
    %2619 = vmatprep.subr.bf16.mxu0 %v1347
    %2620 = vmatpush1.bf16.msra.mxu0 %v1346
    %2621 = vmatprep.subr.bf16.mxu0 %v1351
    %2622 = vmatpush1.bf16.msra.mxu0 %v1350
    %2623 = vmatprep.subr.bf16.mxu0 %v1355
    %2624 = vmatpush1.bf16.msra.mxu0 %v1354
    %2625 = vmatprep.subr.bf16.mxu0 %v1359
    %2626 = vmatpush1.bf16.msra.mxu0 %v1358
    %2627 = vmatprep.subr.bf16.mxu0 0
    %2628 = vmatpush1.bf16.msra.mxu0 0
    %2629 = vmatprep.subr.bf16.mxu0 0
    %2630 = vmatpush1.bf16.msra.mxu0 0
    %2631 = vmatprep.subr.bf16.mxu0 0
    %2632 = vmatpush1.bf16.msra.mxu0 0
    %2633 = vmatprep.subr.bf16.mxu0 0
    %2634 = vmatpush1.bf16.msra.mxu0 0
    %2635 = vmatprep.subr.bf16.mxu0 0
    %2636 = vmatpush1.bf16.msra.mxu0 0
    %2637 = vmatprep.subr.bf16.mxu0 0
    %2638 = vmatpush1.bf16.msra.mxu0 0
    %2639 = vmatprep.subr.bf16.mxu0 0
    %2640 = vmatpush1.bf16.msra.mxu0 0
    %2641 = vmatprep.subr.bf16.mxu0 0
    %2642 = vmatpush1.bf16.msra.mxu0 0
    %2643 = vmatprep.mubr.bf16.mxu0 0
    %2644 = vmatmul.mubr.bf16.gmra.mrb[0].mxu0 %v2610
    %v2645 = vpop.f32.mrb[0].mxu0
    %v2646 = vadd.f32 0.0, %v2645
    %v2647 = vpop.f32.mrb[0].mxu0
    %v2648 = vadd.f32 0.0, %v2647
    %v2649 = vpop.f32.mrb[0].mxu0
    %v2650 = vadd.f32 0.0, %v2649
    %v2651 = vpop.f32.mrb[0].mxu0
    %v2652 = vadd.f32 0.0, %v2651
    %2653 = vdwg.mxu0
    %2654 = vmatprep.subr.bf16.mxu0 %v1333
    %2655 = vmatpush1.bf16.msra.mxu0 %v1332
    %2656 = vmatprep.subr.bf16.mxu0 %v1337
    %2657 = vmatpush1.bf16.msra.mxu0 %v1336
    %2658 = vmatprep.subr.bf16.mxu0 %v1341
    %2659 = vmatpush1.bf16.msra.mxu0 %v1340
    %2660 = vmatprep.subr.bf16.mxu0 %v1345
    %2661 = vmatpush1.bf16.msra.mxu0 %v1344
    %2662 = vmatprep.subr.bf16.mxu0 %v1349
    %2663 = vmatpush1.bf16.msra.mxu0 %v1348
    %2664 = vmatprep.subr.bf16.mxu0 %v1353
    %2665 = vmatpush1.bf16.msra.mxu0 %v1352
    %2666 = vmatprep.subr.bf16.mxu0 %v1357
    %2667 = vmatpush1.bf16.msra.mxu0 %v1356
    %2668 = vmatprep.subr.bf16.mxu0 %v1361
    %2669 = vmatpush1.bf16.msra.mxu0 %v1360
    %2670 = vmatprep.subr.bf16.mxu0 0
    %2671 = vmatpush1.bf16.msra.mxu0 0
    %2672 = vmatprep.subr.bf16.mxu0 0
    %2673 = vmatpush1.bf16.msra.mxu0 0
    %2674 = vmatprep.subr.bf16.mxu0 0
    %2675 = vmatpush1.bf16.msra.mxu0 0
    %2676 = vmatprep.subr.bf16.mxu0 0
    %2677 = vmatpush1.bf16.msra.mxu0 0
    %2678 = vmatprep.subr.bf16.mxu0 0
    %2679 = vmatpush1.bf16.msra.mxu0 0
    %2680 = vmatprep.subr.bf16.mxu0 0
    %2681 = vmatpush1.bf16.msra.mxu0 0
    %2682 = vmatprep.subr.bf16.mxu0 0
    %2683 = vmatpush1.bf16.msra.mxu0 0
    %2684 = vmatprep.subr.bf16.mxu0 0
    %2685 = vmatpush1.bf16.msra.mxu0 0
    %2686 = vmatprep.mubr.bf16.mxu0 0
    %2687 = vmatmul.mubr.bf16.gmra.mrb[0].mxu0 %v2610
    %v2688 = vpop.f32.mrb[0].mxu0
    %v2689 = vadd.f32 0.0, %v2688
    %v2690 = vpop.f32.mrb[0].mxu0
    %v2691 = vadd.f32 0.0, %v2690
    %v2692 = vpop.f32.mrb[0].mxu0
    %v2693 = vadd.f32 0.0, %v2692
    %v2694 = vpop.f32.mrb[0].mxu0
    %v2695 = vadd.f32 0.0, %v2694
    %2696 = vdwg.mxu0
    %v2697 = vadd.f32 %v2602, %v2646
    %v2698 = vadd.f32 %v2603, %v2648
    %v2699 = vadd.f32 %v2604, %v2689
    %v2700 = vadd.f32 %v2605, %v2691
    %v2701 = vadd.f32 %v2606, %v2650
    %v2702 = vadd.f32 %v2607, %v2652
    %v2703 = vadd.f32 %v2608, %v2693
    %v2704 = vadd.f32 %v2609, %v2695
    %v2705 = vxor.u32 %v2697, 2147483648
    %v2706 = vxor.u32 %v2701, 2147483648
    %v2707 = vmul.f32 %v2705, 1.442695
    %v2708 = vpow.pop %v2707
    %v2709 = vmul.f32 %v2706, 1.442695
    %v2710 = vpow.pop %v2709
    %v2711 = vadd.f32 %v2708, 1.0
    %v2712 = vadd.f32 %v2710, 1.0
    %v2713 = vrcp.pop %v2711
    %v2714 = vmul.f32 1.0, %v2713
    %v2715 = vrcp.pop %v2712
    %v2716 = vmul.f32 1.0, %v2715
    %v2717 = vxor.u32 %v2698, 2147483648
    %v2718 = vxor.u32 %v2702, 2147483648
    %v2719 = vmul.f32 %v2717, 1.442695
    %v2720 = vpow.pop %v2719
    %v2721 = vmul.f32 %v2718, 1.442695
    %v2722 = vpow.pop %v2721
    %v2723 = vadd.f32 %v2720, 1.0
    %v2724 = vadd.f32 %v2722, 1.0
    %v2725 = vrcp.pop %v2723
    %v2726 = vmul.f32 1.0, %v2725
    %v2727 = vrcp.pop %v2724
    %v2728 = vmul.f32 1.0, %v2727
    %v2729 = vtanh.pop %v2699
    %v2730 = vtanh.pop %v2703
    %v2731 = vxor.u32 %v2700, 2147483648
    %v2732 = vxor.u32 %v2704, 2147483648
    %v2733 = vmul.f32 %v2731, 1.442695
    %v2734 = vpow.pop %v2733
    %v2735 = vmul.f32 %v2732, 1.442695
    %v2736 = vpow.pop %v2735
    %v2737 = vadd.f32 %v2734, 1.0
    %v2738 = vadd.f32 %v2736, 1.0
    %v2739 = vrcp.pop %v2737
    %v2740 = vmul.f32 1.0, %v2739
    %v2741 = vrcp.pop %v2738
    %v2742 = vmul.f32 1.0, %v2741
    %v2743 = vmul.f32 %v2726, %v2405
    %v2744 = vmul.f32 %v2728, %v2406
    %v2745 = vmul.f32 %v2714, %v2729
    %v2746 = vmul.f32 %v2716, %v2730
    %v2747 = vadd.f32 %v2743, %v2745
    %v2748 = vadd.f32 %v2744, %v2746
    %v2749 = vtanh.pop %v2747
    %v2750 = vtanh.pop %v2748
    %v2751 = vmul.f32 %v2740, %v2749
    %v2752 = vmul.f32 %v2742, %v2750
    %vm2753 = vcmp.eq.s32.totalorder %v1188, 3
    %vm2754 = vcmp.eq.s32.totalorder %v1189, 3
    %v2755 = vsel %vm2753, 1, 0
    %v2756 = vsel %vm2754, 1, 0
    %2757 = vset.pattern.permute.xlu0 0
    %2758 = vperm.xlu0 %2757, %v2755
    %v2759 = vpop.permute.xlu0 %2758
    %2760 = vset.pattern.permute.xlu0 0
    %2761 = vperm.xlu0 %2760, %v2756
    %v2762 = vpop.permute.xlu0 %2761
    %vm2763 = vcmp.eq.s32.totalorder %v2759, 1
    %vm2764 = vcmp.eq.s32.totalorder %v2762, 1
    %v2765 = vsel %vm2763, %v2751, %v2423
    %v2766 = vsel %vm2764, %v2752, %v2424
    %s2767 = scalar_lea.vmem [#allocation3], 128
    %v2768 = vld [vmem:[%s2767] sm:$0xff]
    %v2769 = vld [vmem:[%s2767 + $0x8] sm:$0xff]
    %v2770 = vld [vmem:[%s2767 + $0x10] sm:$0xff]
    %v2771 = vld [vmem:[%s2767 + $0x18] sm:$0xff]
    %v2772 = vunpack.c.l.bf16 %v2768
    %v2773 = vunpack.c.l.bf16 %v2769
    %v2774 = vunpack.c.l.bf16 %v2770
    %v2775 = vunpack.c.l.bf16 %v2771
    %v2776 = vunpack.c.h.bf16 %v2768
    %v2777 = vunpack.c.h.bf16 %v2769
    %v2778 = vunpack.c.h.bf16 %v2770
    %v2779 = vunpack.c.h.bf16 %v2771
    %v2780 = vpack.c.bf16 %v2594, %v2593
    %2781 = vmatprep.subr.bf16.mxu0 %v1692
    %2782 = vmatpush1.bf16.msra.mxu0 %v1691
    %2783 = vmatprep.subr.bf16.mxu0 %v1696
    %2784 = vmatpush1.bf16.msra.mxu0 %v1695
    %2785 = vmatprep.subr.bf16.mxu0 %v1700
    %2786 = vmatpush1.bf16.msra.mxu0 %v1699
    %2787 = vmatprep.subr.bf16.mxu0 %v1704
    %2788 = vmatpush1.bf16.msra.mxu0 %v1703
    %2789 = vmatprep.subr.bf16.mxu0 %v1708
    %2790 = vmatpush1.bf16.msra.mxu0 %v1707
    %2791 = vmatprep.subr.bf16.mxu0 %v1712
    %2792 = vmatpush1.bf16.msra.mxu0 %v1711
    %2793 = vmatprep.subr.bf16.mxu0 %v1716
    %2794 = vmatpush1.bf16.msra.mxu0 %v1715
    %2795 = vmatprep.subr.bf16.mxu0 %v1720
    %2796 = vmatpush1.bf16.msra.mxu0 %v1719
    %2797 = vmatprep.subr.bf16.mxu0 0
    %2798 = vmatpush1.bf16.msra.mxu0 0
    %2799 = vmatprep.subr.bf16.mxu0 0
    %2800 = vmatpush1.bf16.msra.mxu0 0
    %2801 = vmatprep.subr.bf16.mxu0 0
    %2802 = vmatpush1.bf16.msra.mxu0 0
    %2803 = vmatprep.subr.bf16.mxu0 0
    %2804 = vmatpush1.bf16.msra.mxu0 0
    %2805 = vmatprep.subr.bf16.mxu0 0
    %2806 = vmatpush1.bf16.msra.mxu0 0
    %2807 = vmatprep.subr.bf16.mxu0 0
    %2808 = vmatpush1.bf16.msra.mxu0 0
    %2809 = vmatprep.subr.bf16.mxu0 0
    %2810 = vmatpush1.bf16.msra.mxu0 0
    %2811 = vmatprep.subr.bf16.mxu0 0
    %2812 = vmatpush1.bf16.msra.mxu0 0
    %2813 = vmatprep.mubr.bf16.mxu0 0
    %2814 = vmatmul.mubr.bf16.gmra.mrb[0].mxu0 %v2780
    %v2815 = vpop.f32.mrb[0].mxu0
    %v2816 = vadd.f32 0.0, %v2815
    %v2817 = vpop.f32.mrb[0].mxu0
    %v2818 = vadd.f32 0.0, %v2817
    %v2819 = vpop.f32.mrb[0].mxu0
    %v2820 = vadd.f32 0.0, %v2819
    %v2821 = vpop.f32.mrb[0].mxu0
    %v2822 = vadd.f32 0.0, %v2821
    %2823 = vdwg.mxu0
    %2824 = vmatprep.subr.bf16.mxu0 %v1694
    %2825 = vmatpush1.bf16.msra.mxu0 %v1693
    %2826 = vmatprep.subr.bf16.mxu0 %v1698
    %2827 = vmatpush1.bf16.msra.mxu0 %v1697
    %2828 = vmatprep.subr.bf16.mxu0 %v1702
    %2829 = vmatpush1.bf16.msra.mxu0 %v1701
    %2830 = vmatprep.subr.bf16.mxu0 %v1706
    %2831 = vmatpush1.bf16.msra.mxu0 %v1705
    %2832 = vmatprep.subr.bf16.mxu0 %v1710
    %2833 = vmatpush1.bf16.msra.mxu0 %v1709
    %2834 = vmatprep.subr.bf16.mxu0 %v1714
    %2835 = vmatpush1.bf16.msra.mxu0 %v1713
    %2836 = vmatprep.subr.bf16.mxu0 %v1718
    %2837 = vmatpush1.bf16.msra.mxu0 %v1717
    %2838 = vmatprep.subr.bf16.mxu0 %v1722
    %2839 = vmatpush1.bf16.msra.mxu0 %v1721
    %2840 = vmatprep.subr.bf16.mxu0 0
    %2841 = vmatpush1.bf16.msra.mxu0 0
    %2842 = vmatprep.subr.bf16.mxu0 0
    %2843 = vmatpush1.bf16.msra.mxu0 0
    %2844 = vmatprep.subr.bf16.mxu0 0
    %2845 = vmatpush1.bf16.msra.mxu0 0
    %2846 = vmatprep.subr.bf16.mxu0 0
    %2847 = vmatpush1.bf16.msra.mxu0 0
    %2848 = vmatprep.subr.bf16.mxu0 0
    %2849 = vmatpush1.bf16.msra.mxu0 0
    %2850 = vmatprep.subr.bf16.mxu0 0
    %2851 = vmatpush1.bf16.msra.mxu0 0
    %2852 = vmatprep.subr.bf16.mxu0 0
    %2853 = vmatpush1.bf16.msra.mxu0 0
    %2854 = vmatprep.subr.bf16.mxu0 0
    %2855 = vmatpush1.bf16.msra.mxu0 0
    %2856 = vmatprep.mubr.bf16.mxu0 0
    %2857 = vmatmul.mubr.bf16.gmra.mrb[0].mxu0 %v2780
    %v2858 = vpop.f32.mrb[0].mxu0
    %v2859 = vadd.f32 0.0, %v2858
    %v2860 = vpop.f32.mrb[0].mxu0
    %v2861 = vadd.f32 0.0, %v2860
    %v2862 = vpop.f32.mrb[0].mxu0
    %v2863 = vadd.f32 0.0, %v2862
    %v2864 = vpop.f32.mrb[0].mxu0
    %v2865 = vadd.f32 0.0, %v2864
    %2866 = vdwg.mxu0
    %v2867 = vadd.f32 %v2772, %v2816
    %v2868 = vadd.f32 %v2773, %v2818
    %v2869 = vadd.f32 %v2774, %v2859
    %v2870 = vadd.f32 %v2775, %v2861
    %v2871 = vadd.f32 %v2776, %v2820
    %v2872 = vadd.f32 %v2777, %v2822
    %v2873 = vadd.f32 %v2778, %v2863
    %v2874 = vadd.f32 %v2779, %v2865
    %v2875 = vxor.u32 %v2867, 2147483648
    %v2876 = vxor.u32 %v2871, 2147483648
    %v2877 = vmul.f32 %v2875, 1.442695
    %v2878 = vpow.pop %v2877
    %v2879 = vmul.f32 %v2876, 1.442695
    %v2880 = vpow.pop %v2879
    %v2881 = vadd.f32 %v2878, 1.0
    %v2882 = vadd.f32 %v2880, 1.0
    %v2883 = vrcp.pop %v2881
    %v2884 = vmul.f32 1.0, %v2883
    %v2885 = vrcp.pop %v2882
    %v2886 = vmul.f32 1.0, %v2885
    %v2887 = vxor.u32 %v2868, 2147483648
    %v2888 = vxor.u32 %v2872, 2147483648
    %v2889 = vmul.f32 %v2887, 1.442695
    %v2890 = vpow.pop %v2889
    %v2891 = vmul.f32 %v2888, 1.442695
    %v2892 = vpow.pop %v2891
    %v2893 = vadd.f32 %v2890, 1.0
    %v2894 = vadd.f32 %v2892, 1.0
    %v2895 = vrcp.pop %v2893
    %v2896 = vmul.f32 1.0, %v2895
    %v2897 = vrcp.pop %v2894
    %v2898 = vmul.f32 1.0, %v2897
    %v2899 = vtanh.pop %v2869
    %v2900 = vtanh.pop %v2873
    %v2901 = vxor.u32 %v2870, 2147483648
    %v2902 = vxor.u32 %v2874, 2147483648
    %v2903 = vmul.f32 %v2901, 1.442695
    %v2904 = vpow.pop %v2903
    %v2905 = vmul.f32 %v2902, 1.442695
    %v2906 = vpow.pop %v2905
    %v2907 = vadd.f32 %v2904, 1.0
    %v2908 = vadd.f32 %v2906, 1.0
    %v2909 = vrcp.pop %v2907
    %v2910 = vmul.f32 1.0, %v2909
    %v2911 = vrcp.pop %v2908
    %v2912 = vmul.f32 1.0, %v2911
    %v2913 = vmul.f32 %v2896, %v2595
    %v2914 = vmul.f32 %v2898, %v2596
    %v2915 = vmul.f32 %v2884, %v2899
    %v2916 = vmul.f32 %v2886, %v2900
    %v2917 = vadd.f32 %v2913, %v2915
    %v2918 = vadd.f32 %v2914, %v2916
    %v2919 = vtanh.pop %v2917
    %v2920 = vtanh.pop %v2918
    %v2921 = vmul.f32 %v2910, %v2919
    %v2922 = vmul.f32 %v2912, %v2920
    %vm2923 = vcmp.gt.s32.totalorder %v1186, 4
    %vm2924 = vcmp.gt.s32.totalorder %v1187, 4
    %v2925 = vsel %vm2923, 1, 0
    %v2926 = vsel %vm2924, 1, 0
    %2927 = vset.pattern.permute.xlu0 0
    %2928 = vperm.xlu0 %2927, %v2925
    %v2929 = vpop.permute.xlu0 %2928
    %2930 = vset.pattern.permute.xlu0 0
    %2931 = vperm.xlu0 %2930, %v2926
    %v2932 = vpop.permute.xlu0 %2931
    %vm2933 = vcmp.eq.s32.totalorder %v2929, 1
    %vm2934 = vcmp.eq.s32.totalorder %v2932, 1
    %v2935 = vsel %vm2933, %v2921, %v2593
    %v2936 = vsel %vm2934, %v2922, %v2594
    %v2937 = vsel %vm2933, %v2917, %v2595
    %v2938 = vsel %vm2934, %v2918, %v2596
    %s2939 = scalar_lea.vmem [#allocation2], 128
    %v2940 = vld [vmem:[%s2939] sm:$0xff]
    %v2941 = vld [vmem:[%s2939 + $0x8] sm:$0xff]
    %v2942 = vld [vmem:[%s2939 + $0x10] sm:$0xff]
    %v2943 = vld [vmem:[%s2939 + $0x18] sm:$0xff]
    %v2944 = vunpack.c.l.bf16 %v2940
    %v2945 = vunpack.c.l.bf16 %v2941
    %v2946 = vunpack.c.l.bf16 %v2942
    %v2947 = vunpack.c.l.bf16 %v2943
    %v2948 = vunpack.c.h.bf16 %v2940
    %v2949 = vunpack.c.h.bf16 %v2941
    %v2950 = vunpack.c.h.bf16 %v2942
    %v2951 = vunpack.c.h.bf16 %v2943
    %v2952 = vpack.c.bf16 %v2752, %v2751
    %2953 = vmatprep.subr.bf16.mxu0 %v1331
    %2954 = vmatpush1.bf16.msra.mxu0 %v1330
    %2955 = vmatprep.subr.bf16.mxu0 %v1335
    %2956 = vmatpush1.bf16.msra.mxu0 %v1334
    %2957 = vmatprep.subr.bf16.mxu0 %v1339
    %2958 = vmatpush1.bf16.msra.mxu0 %v1338
    %2959 = vmatprep.subr.bf16.mxu0 %v1343
    %2960 = vmatpush1.bf16.msra.mxu0 %v1342
    %2961 = vmatprep.subr.bf16.mxu0 %v1347
    %2962 = vmatpush1.bf16.msra.mxu0 %v1346
    %2963 = vmatprep.subr.bf16.mxu0 %v1351
    %2964 = vmatpush1.bf16.msra.mxu0 %v1350
    %2965 = vmatprep.subr.bf16.mxu0 %v1355
    %2966 = vmatpush1.bf16.msra.mxu0 %v1354
    %2967 = vmatprep.subr.bf16.mxu0 %v1359
    %2968 = vmatpush1.bf16.msra.mxu0 %v1358
    %2969 = vmatprep.subr.bf16.mxu0 0
    %2970 = vmatpush1.bf16.msra.mxu0 0
    %2971 = vmatprep.subr.bf16.mxu0 0
    %2972 = vmatpush1.bf16.msra.mxu0 0
    %2973 = vmatprep.subr.bf16.mxu0 0
    %2974 = vmatpush1.bf16.msra.mxu0 0
    %2975 = vmatprep.subr.bf16.mxu0 0
    %2976 = vmatpush1.bf16.msra.mxu0 0
    %2977 = vmatprep.subr.bf16.mxu0 0
    %2978 = vmatpush1.bf16.msra.mxu0 0
    %2979 = vmatprep.subr.bf16.mxu0 0
    %2980 = vmatpush1.bf16.msra.mxu0 0
    %2981 = vmatprep.subr.bf16.mxu0 0
    %2982 = vmatpush1.bf16.msra.mxu0 0
    %2983 = vmatprep.subr.bf16.mxu0 0
    %2984 = vmatpush1.bf16.msra.mxu0 0
    %2985 = vmatprep.mubr.bf16.mxu0 0
    %2986 = vmatmul.mubr.bf16.gmra.mrb[0].mxu0 %v2952
    %v2987 = vpop.f32.mrb[0].mxu0
    %v2988 = vadd.f32 0.0, %v2987
    %v2989 = vpop.f32.mrb[0].mxu0
    %v2990 = vadd.f32 0.0, %v2989
    %v2991 = vpop.f32.mrb[0].mxu0
    %v2992 = vadd.f32 0.0, %v2991
    %v2993 = vpop.f32.mrb[0].mxu0
    %v2994 = vadd.f32 0.0, %v2993
    %2995 = vdwg.mxu0
    %2996 = vmatprep.subr.bf16.mxu0 %v1333
    %2997 = vmatpush1.bf16.msra.mxu0 %v1332
    %2998 = vmatprep.subr.bf16.mxu0 %v1337
    %2999 = vmatpush1.bf16.msra.mxu0 %v1336
    %3000 = vmatprep.subr.bf16.mxu0 %v1341
    %3001 = vmatpush1.bf16.msra.mxu0 %v1340
    %3002 = vmatprep.subr.bf16.mxu0 %v1345
    %3003 = vmatpush1.bf16.msra.mxu0 %v1344
    %3004 = vmatprep.subr.bf16.mxu0 %v1349
    %3005 = vmatpush1.bf16.msra.mxu0 %v1348
    %3006 = vmatprep.subr.bf16.mxu0 %v1353
    %3007 = vmatpush1.bf16.msra.mxu0 %v1352
    %3008 = vmatprep.subr.bf16.mxu0 %v1357
    %3009 = vmatpush1.bf16.msra.mxu0 %v1356
    %3010 = vmatprep.subr.bf16.mxu0 %v1361
    %3011 = vmatpush1.bf16.msra.mxu0 %v1360
    %3012 = vmatprep.subr.bf16.mxu0 0
    %3013 = vmatpush1.bf16.msra.mxu0 0
    %3014 = vmatprep.subr.bf16.mxu0 0
    %3015 = vmatpush1.bf16.msra.mxu0 0
    %3016 = vmatprep.subr.bf16.mxu0 0
    %3017 = vmatpush1.bf16.msra.mxu0 0
    %3018 = vmatprep.subr.bf16.mxu0 0
    %3019 = vmatpush1.bf16.msra.mxu0 0
    %3020 = vmatprep.subr.bf16.mxu0 0
    %3021 = vmatpush1.bf16.msra.mxu0 0
    %3022 = vmatprep.subr.bf16.mxu0 0
    %3023 = vmatpush1.bf16.msra.mxu0 0
    %3024 = vmatprep.subr.bf16.mxu0 0
    %3025 = vmatpush1.bf16.msra.mxu0 0
    %3026 = vmatprep.subr.bf16.mxu0 0
    %3027 = vmatpush1.bf16.msra.mxu0 0
    %3028 = vmatprep.mubr.bf16.mxu0 0
    %3029 = vmatmul.mubr.bf16.gmra.mrb[0].mxu0 %v2952
    %v3030 = vpop.f32.mrb[0].mxu0
    %v3031 = vadd.f32 0.0, %v3030
    %v3032 = vpop.f32.mrb[0].mxu0
    %v3033 = vadd.f32 0.0, %v3032
    %v3034 = vpop.f32.mrb[0].mxu0
    %v3035 = vadd.f32 0.0, %v3034
    %v3036 = vpop.f32.mrb[0].mxu0
    %v3037 = vadd.f32 0.0, %v3036
    %3038 = vdwg.mxu0
    %v3039 = vadd.f32 %v2944, %v2988
    %v3040 = vadd.f32 %v2945, %v2990
    %v3041 = vadd.f32 %v2946, %v3031
    %v3042 = vadd.f32 %v2947, %v3033
    %v3043 = vadd.f32 %v2948, %v2992
    %v3044 = vadd.f32 %v2949, %v2994
    %v3045 = vadd.f32 %v2950, %v3035
    %v3046 = vadd.f32 %v2951, %v3037
    %v3047 = vxor.u32 %v3039, 2147483648
    %v3048 = vxor.u32 %v3043, 2147483648
    %v3049 = vmul.f32 %v3047, 1.442695
    %v3050 = vpow.pop %v3049
    %v3051 = vmul.f32 %v3048, 1.442695
    %v3052 = vpow.pop %v3051
    %v3053 = vadd.f32 %v3050, 1.0
    %v3054 = vadd.f32 %v3052, 1.0
    %v3055 = vrcp.pop %v3053
    %v3056 = vmul.f32 1.0, %v3055
    %v3057 = vrcp.pop %v3054
    %v3058 = vmul.f32 1.0, %v3057
    %v3059 = vxor.u32 %v3040, 2147483648
    %v3060 = vxor.u32 %v3044, 2147483648
    %v3061 = vmul.f32 %v3059, 1.442695
    %v3062 = vpow.pop %v3061
    %v3063 = vmul.f32 %v3060, 1.442695
    %v3064 = vpow.pop %v3063
    %v3065 = vadd.f32 %v3062, 1.0
    %v3066 = vadd.f32 %v3064, 1.0
    %v3067 = vrcp.pop %v3065
    %v3068 = vmul.f32 1.0, %v3067
    %v3069 = vrcp.pop %v3066
    %v3070 = vmul.f32 1.0, %v3069
    %v3071 = vtanh.pop %v3041
    %v3072 = vtanh.pop %v3045
    %v3073 = vxor.u32 %v3042, 2147483648
    %v3074 = vxor.u32 %v3046, 2147483648
    %v3075 = vmul.f32 %v3073, 1.442695
    %v3076 = vpow.pop %v3075
    %v3077 = vmul.f32 %v3074, 1.442695
    %v3078 = vpow.pop %v3077
    %v3079 = vadd.f32 %v3076, 1.0
    %v3080 = vadd.f32 %v3078, 1.0
    %v3081 = vrcp.pop %v3079
    %v3082 = vmul.f32 1.0, %v3081
    %v3083 = vrcp.pop %v3080
    %v3084 = vmul.f32 1.0, %v3083
    %v3085 = vmul.f32 %v3068, %v2747
    %v3086 = vmul.f32 %v3070, %v2748
    %v3087 = vmul.f32 %v3056, %v3071
    %v3088 = vmul.f32 %v3058, %v3072
    %v3089 = vadd.f32 %v3085, %v3087
    %v3090 = vadd.f32 %v3086, %v3088
    %v3091 = vtanh.pop %v3089
    %v3092 = vtanh.pop %v3090
    %v3093 = vmul.f32 %v3082, %v3091
    %v3094 = vmul.f32 %v3084, %v3092
    %vm3095 = vcmp.eq.s32.totalorder %v1188, 4
    %vm3096 = vcmp.eq.s32.totalorder %v1189, 4
    %v3097 = vsel %vm3095, 1, 0
    %v3098 = vsel %vm3096, 1, 0
    %3099 = vset.pattern.permute.xlu0 0
    %3100 = vperm.xlu0 %3099, %v3097
    %v3101 = vpop.permute.xlu0 %3100
    %3102 = vset.pattern.permute.xlu0 0
    %3103 = vperm.xlu0 %3102, %v3098
    %v3104 = vpop.permute.xlu0 %3103
    %vm3105 = vcmp.eq.s32.totalorder %v3101, 1
    %vm3106 = vcmp.eq.s32.totalorder %v3104, 1
    %v3107 = vsel %vm3105, %v3093, %v2765
    %v3108 = vsel %vm3106, %v3094, %v2766
    %s3109 = scalar_lea.vmem [#allocation3], 96
    %v3110 = vld [vmem:[%s3109] sm:$0xff]
    %v3111 = vld [vmem:[%s3109 + $0x8] sm:$0xff]
    %v3112 = vld [vmem:[%s3109 + $0x10] sm:$0xff]
    %v3113 = vld [vmem:[%s3109 + $0x18] sm:$0xff]
    %v3114 = vunpack.c.l.bf16 %v3110
    %v3115 = vunpack.c.l.bf16 %v3111
    %v3116 = vunpack.c.l.bf16 %v3112
    %v3117 = vunpack.c.l.bf16 %v3113
    %v3118 = vunpack.c.h.bf16 %v3110
    %v3119 = vunpack.c.h.bf16 %v3111
    %v3120 = vunpack.c.h.bf16 %v3112
    %v3121 = vunpack.c.h.bf16 %v3113
    %v3122 = vpack.c.bf16 %v2936, %v2935
    %3123 = vmatprep.subr.bf16.mxu0 %v1692
    %3124 = vmatpush1.bf16.msra.mxu0 %v1691
    %3125 = vmatprep.subr.bf16.mxu0 %v1696
    %3126 = vmatpush1.bf16.msra.mxu0 %v1695
    %3127 = vmatprep.subr.bf16.mxu0 %v1700
    %3128 = vmatpush1.bf16.msra.mxu0 %v1699
    %3129 = vmatprep.subr.bf16.mxu0 %v1704
    %3130 = vmatpush1.bf16.msra.mxu0 %v1703
    %3131 = vmatprep.subr.bf16.mxu0 %v1708
    %3132 = vmatpush1.bf16.msra.mxu0 %v1707
    %3133 = vmatprep.subr.bf16.mxu0 %v1712
    %3134 = vmatpush1.bf16.msra.mxu0 %v1711
    %3135 = vmatprep.subr.bf16.mxu0 %v1716
    %3136 = vmatpush1.bf16.msra.mxu0 %v1715
    %3137 = vmatprep.subr.bf16.mxu0 %v1720
    %3138 = vmatpush1.bf16.msra.mxu0 %v1719
    %3139 = vmatprep.subr.bf16.mxu0 0
    %3140 = vmatpush1.bf16.msra.mxu0 0
    %3141 = vmatprep.subr.bf16.mxu0 0
    %3142 = vmatpush1.bf16.msra.mxu0 0
    %3143 = vmatprep.subr.bf16.mxu0 0
    %3144 = vmatpush1.bf16.msra.mxu0 0
    %3145 = vmatprep.subr.bf16.mxu0 0
    %3146 = vmatpush1.bf16.msra.mxu0 0
    %3147 = vmatprep.subr.bf16.mxu0 0
    %3148 = vmatpush1.bf16.msra.mxu0 0
    %3149 = vmatprep.subr.bf16.mxu0 0
    %3150 = vmatpush1.bf16.msra.mxu0 0
    %3151 = vmatprep.subr.bf16.mxu0 0
    %3152 = vmatpush1.bf16.msra.mxu0 0
    %3153 = vmatprep.subr.bf16.mxu0 0
    %3154 = vmatpush1.bf16.msra.mxu0 0
    %3155 = vmatprep.mubr.bf16.mxu0 0
    %3156 = vmatmul.mubr.bf16.gmra.mrb[0].mxu0 %v3122
    %v3157 = vpop.f32.mrb[0].mxu0
    %v3158 = vadd.f32 0.0, %v3157
    %v3159 = vpop.f32.mrb[0].mxu0
    %v3160 = vadd.f32 0.0, %v3159
    %v3161 = vpop.f32.mrb[0].mxu0
    %v3162 = vadd.f32 0.0, %v3161
    %v3163 = vpop.f32.mrb[0].mxu0
    %v3164 = vadd.f32 0.0, %v3163
    %3165 = vdwg.mxu0
    %3166 = vmatprep.subr.bf16.mxu0 %v1694
    %3167 = vmatpush1.bf16.msra.mxu0 %v1693
    %3168 = vmatprep.subr.bf16.mxu0 %v1698
    %3169 = vmatpush1.bf16.msra.mxu0 %v1697
    %3170 = vmatprep.subr.bf16.mxu0 %v1702
    %3171 = vmatpush1.bf16.msra.mxu0 %v1701
    %3172 = vmatprep.subr.bf16.mxu0 %v1706
    %3173 = vmatpush1.bf16.msra.mxu0 %v1705
    %3174 = vmatprep.subr.bf16.mxu0 %v1710
    %3175 = vmatpush1.bf16.msra.mxu0 %v1709
    %3176 = vmatprep.subr.bf16.mxu0 %v1714
    %3177 = vmatpush1.bf16.msra.mxu0 %v1713
    %3178 = vmatprep.subr.bf16.mxu0 %v1718
    %3179 = vmatpush1.bf16.msra.mxu0 %v1717
    %3180 = vmatprep.subr.bf16.mxu0 %v1722
    %3181 = vmatpush1.bf16.msra.mxu0 %v1721
    %3182 = vmatprep.subr.bf16.mxu0 0
    %3183 = vmatpush1.bf16.msra.mxu0 0
    %3184 = vmatprep.subr.bf16.mxu0 0
    %3185 = vmatpush1.bf16.msra.mxu0 0
    %3186 = vmatprep.subr.bf16.mxu0 0
    %3187 = vmatpush1.bf16.msra.mxu0 0
    %3188 = vmatprep.subr.bf16.mxu0 0
    %3189 = vmatpush1.bf16.msra.mxu0 0
    %3190 = vmatprep.subr.bf16.mxu0 0
    %3191 = vmatpush1.bf16.msra.mxu0 0
    %3192 = vmatprep.subr.bf16.mxu0 0
    %3193 = vmatpush1.bf16.msra.mxu0 0
    %3194 = vmatprep.subr.bf16.mxu0 0
    %3195 = vmatpush1.bf16.msra.mxu0 0
    %3196 = vmatprep.subr.bf16.mxu0 0
    %3197 = vmatpush1.bf16.msra.mxu0 0
    %3198 = vmatprep.mubr.bf16.mxu0 0
    %3199 = vmatmul.mubr.bf16.gmra.mrb[0].mxu0 %v3122
    %v3200 = vpop.f32.mrb[0].mxu0
    %v3201 = vadd.f32 0.0, %v3200
    %v3202 = vpop.f32.mrb[0].mxu0
    %v3203 = vadd.f32 0.0, %v3202
    %v3204 = vpop.f32.mrb[0].mxu0
    %v3205 = vadd.f32 0.0, %v3204
    %v3206 = vpop.f32.mrb[0].mxu0
    %v3207 = vadd.f32 0.0, %v3206
    %3208 = vdwg.mxu0
    %v3209 = vadd.f32 %v3114, %v3158
    %v3210 = vadd.f32 %v3115, %v3160
    %v3211 = vadd.f32 %v3116, %v3201
    %v3212 = vadd.f32 %v3117, %v3203
    %v3213 = vadd.f32 %v3118, %v3162
    %v3214 = vadd.f32 %v3119, %v3164
    %v3215 = vadd.f32 %v3120, %v3205
    %v3216 = vadd.f32 %v3121, %v3207
    %v3217 = vxor.u32 %v3209, 2147483648
    %v3218 = vxor.u32 %v3213, 2147483648
    %v3219 = vmul.f32 %v3217, 1.442695
    %v3220 = vpow.pop %v3219
    %v3221 = vmul.f32 %v3218, 1.442695
    %v3222 = vpow.pop %v3221
    %v3223 = vadd.f32 %v3220, 1.0
    %v3224 = vadd.f32 %v3222, 1.0
    %v3225 = vrcp.pop %v3223
    %v3226 = vmul.f32 1.0, %v3225
    %v3227 = vrcp.pop %v3224
    %v3228 = vmul.f32 1.0, %v3227
    %v3229 = vxor.u32 %v3210, 2147483648
    %v3230 = vxor.u32 %v3214, 2147483648
    %v3231 = vmul.f32 %v3229, 1.442695
    %v3232 = vpow.pop %v3231
    %v3233 = vmul.f32 %v3230, 1.442695
    %v3234 = vpow.pop %v3233
    %v3235 = vadd.f32 %v3232, 1.0
    %v3236 = vadd.f32 %v3234, 1.0
    %v3237 = vrcp.pop %v3235
    %v3238 = vmul.f32 1.0, %v3237
    %v3239 = vrcp.pop %v3236
    %v3240 = vmul.f32 1.0, %v3239
    %v3241 = vtanh.pop %v3211
    %v3242 = vtanh.pop %v3215
    %v3243 = vxor.u32 %v3212, 2147483648
    %v3244 = vxor.u32 %v3216, 2147483648
    %v3245 = vmul.f32 %v3243, 1.442695
    %v3246 = vpow.pop %v3245
    %v3247 = vmul.f32 %v3244, 1.442695
    %v3248 = vpow.pop %v3247
    %v3249 = vadd.f32 %v3246, 1.0
    %v3250 = vadd.f32 %v3248, 1.0
    %v3251 = vrcp.pop %v3249
    %v3252 = vmul.f32 1.0, %v3251
    %v3253 = vrcp.pop %v3250
    %v3254 = vmul.f32 1.0, %v3253
    %v3255 = vmul.f32 %v3238, %v2937
    %v3256 = vmul.f32 %v3240, %v2938
    %v3257 = vmul.f32 %v3226, %v3241
    %v3258 = vmul.f32 %v3228, %v3242
    %v3259 = vadd.f32 %v3255, %v3257
    %v3260 = vadd.f32 %v3256, %v3258
    %v3261 = vtanh.pop %v3259
    %v3262 = vtanh.pop %v3260
    %v3263 = vmul.f32 %v3252, %v3261
    %v3264 = vmul.f32 %v3254, %v3262
    %vm3265 = vcmp.gt.s32.totalorder %v1186, 3
    %vm3266 = vcmp.gt.s32.totalorder %v1187, 3
    %v3267 = vsel %vm3265, 1, 0
    %v3268 = vsel %vm3266, 1, 0
    %3269 = vset.pattern.permute.xlu0 0
    %3270 = vperm.xlu0 %3269, %v3267
    %v3271 = vpop.permute.xlu0 %3270
    %3272 = vset.pattern.permute.xlu0 0
    %3273 = vperm.xlu0 %3272, %v3268
    %v3274 = vpop.permute.xlu0 %3273
    %vm3275 = vcmp.eq.s32.totalorder %v3271, 1
    %vm3276 = vcmp.eq.s32.totalorder %v3274, 1
    %v3277 = vsel %vm3275, %v3263, %v2935
    %v3278 = vsel %vm3276, %v3264, %v2936
    %v3279 = vsel %vm3275, %v3259, %v2937
    %v3280 = vsel %vm3276, %v3260, %v2938
    %s3281 = scalar_lea.vmem [#allocation2], 160
    %v3282 = vld [vmem:[%s3281] sm:$0xff]
    %v3283 = vld [vmem:[%s3281 + $0x8] sm:$0xff]
    %v3284 = vld [vmem:[%s3281 + $0x10] sm:$0xff]
    %v3285 = vld [vmem:[%s3281 + $0x18] sm:$0xff]
    %v3286 = vunpack.c.l.bf16 %v3282
    %v3287 = vunpack.c.l.bf16 %v3283
    %v3288 = vunpack.c.l.bf16 %v3284
    %v3289 = vunpack.c.l.bf16 %v3285
    %v3290 = vunpack.c.h.bf16 %v3282
    %v3291 = vunpack.c.h.bf16 %v3283
    %v3292 = vunpack.c.h.bf16 %v3284
    %v3293 = vunpack.c.h.bf16 %v3285
    %v3294 = vpack.c.bf16 %v3094, %v3093
    %3295 = vmatprep.subr.bf16.mxu0 %v1331
    %3296 = vmatpush1.bf16.msra.mxu0 %v1330
    %3297 = vmatprep.subr.bf16.mxu0 %v1335
    %3298 = vmatpush1.bf16.msra.mxu0 %v1334
    %3299 = vmatprep.subr.bf16.mxu0 %v1339
    %3300 = vmatpush1.bf16.msra.mxu0 %v1338
    %3301 = vmatprep.subr.bf16.mxu0 %v1343
    %3302 = vmatpush1.bf16.msra.mxu0 %v1342
    %3303 = vmatprep.subr.bf16.mxu0 %v1347
    %3304 = vmatpush1.bf16.msra.mxu0 %v1346
    %3305 = vmatprep.subr.bf16.mxu0 %v1351
    %3306 = vmatpush1.bf16.msra.mxu0 %v1350
    %3307 = vmatprep.subr.bf16.mxu0 %v1355
    %3308 = vmatpush1.bf16.msra.mxu0 %v1354
    %3309 = vmatprep.subr.bf16.mxu0 %v1359
    %3310 = vmatpush1.bf16.msra.mxu0 %v1358
    %3311 = vmatprep.subr.bf16.mxu0 0
    %3312 = vmatpush1.bf16.msra.mxu0 0
    %3313 = vmatprep.subr.bf16.mxu0 0
    %3314 = vmatpush1.bf16.msra.mxu0 0
    %3315 = vmatprep.subr.bf16.mxu0 0
    %3316 = vmatpush1.bf16.msra.mxu0 0
    %3317 = vmatprep.subr.bf16.mxu0 0
    %3318 = vmatpush1.bf16.msra.mxu0 0
    %3319 = vmatprep.subr.bf16.mxu0 0
    %3320 = vmatpush1.bf16.msra.mxu0 0
    %3321 = vmatprep.subr.bf16.mxu0 0
    %3322 = vmatpush1.bf16.msra.mxu0 0
    %3323 = vmatprep.subr.bf16.mxu0 0
    %3324 = vmatpush1.bf16.msra.mxu0 0
    %3325 = vmatprep.subr.bf16.mxu0 0
    %3326 = vmatpush1.bf16.msra.mxu0 0
    %3327 = vmatprep.mubr.bf16.mxu0 0
    %3328 = vmatmul.mubr.bf16.gmra.mrb[0].mxu0 %v3294
    %v3329 = vpop.f32.mrb[0].mxu0
    %v3330 = vadd.f32 0.0, %v3329
    %v3331 = vpop.f32.mrb[0].mxu0
    %v3332 = vadd.f32 0.0, %v3331
    %v3333 = vpop.f32.mrb[0].mxu0
    %v3334 = vadd.f32 0.0, %v3333
    %v3335 = vpop.f32.mrb[0].mxu0
    %v3336 = vadd.f32 0.0, %v3335
    %3337 = vdwg.mxu0
    %3338 = vmatprep.subr.bf16.mxu0 %v1333
    %3339 = vmatpush1.bf16.msra.mxu0 %v1332
    %3340 = vmatprep.subr.bf16.mxu0 %v1337
    %3341 = vmatpush1.bf16.msra.mxu0 %v1336
    %3342 = vmatprep.subr.bf16.mxu0 %v1341
    %3343 = vmatpush1.bf16.msra.mxu0 %v1340
    %3344 = vmatprep.subr.bf16.mxu0 %v1345
    %3345 = vmatpush1.bf16.msra.mxu0 %v1344
    %3346 = vmatprep.subr.bf16.mxu0 %v1349
    %3347 = vmatpush1.bf16.msra.mxu0 %v1348
    %3348 = vmatprep.subr.bf16.mxu0 %v1353
    %3349 = vmatpush1.bf16.msra.mxu0 %v1352
    %3350 = vmatprep.subr.bf16.mxu0 %v1357
    %3351 = vmatpush1.bf16.msra.mxu0 %v1356
    %3352 = vmatprep.subr.bf16.mxu0 %v1361
    %3353 = vmatpush1.bf16.msra.mxu0 %v1360
    %3354 = vmatprep.subr.bf16.mxu0 0
    %3355 = vmatpush1.bf16.msra.mxu0 0
    %3356 = vmatprep.subr.bf16.mxu0 0
    %3357 = vmatpush1.bf16.msra.mxu0 0
    %3358 = vmatprep.subr.bf16.mxu0 0
    %3359 = vmatpush1.bf16.msra.mxu0 0
    %3360 = vmatprep.subr.bf16.mxu0 0
    %3361 = vmatpush1.bf16.msra.mxu0 0
    %3362 = vmatprep.subr.bf16.mxu0 0
    %3363 = vmatpush1.bf16.msra.mxu0 0
    %3364 = vmatprep.subr.bf16.mxu0 0
    %3365 = vmatpush1.bf16.msra.mxu0 0
    %3366 = vmatprep.subr.bf16.mxu0 0
    %3367 = vmatpush1.bf16.msra.mxu0 0
    %3368 = vmatprep.subr.bf16.mxu0 0
    %3369 = vmatpush1.bf16.msra.mxu0 0
    %3370 = vmatprep.mubr.bf16.mxu0 0
    %3371 = vmatmul.mubr.bf16.gmra.mrb[0].mxu0 %v3294
    %v3372 = vpop.f32.mrb[0].mxu0
    %v3373 = vadd.f32 0.0, %v3372
    %v3374 = vpop.f32.mrb[0].mxu0
    %v3375 = vadd.f32 0.0, %v3374
    %v3376 = vpop.f32.mrb[0].mxu0
    %v3377 = vadd.f32 0.0, %v3376
    %v3378 = vpop.f32.mrb[0].mxu0
    %v3379 = vadd.f32 0.0, %v3378
    %3380 = vdwg.mxu0
    %v3381 = vadd.f32 %v3286, %v3330
    %v3382 = vadd.f32 %v3287, %v3332
    %v3383 = vadd.f32 %v3288, %v3373
    %v3384 = vadd.f32 %v3289, %v3375
    %v3385 = vadd.f32 %v3290, %v3334
    %v3386 = vadd.f32 %v3291, %v3336
    %v3387 = vadd.f32 %v3292, %v3377
    %v3388 = vadd.f32 %v3293, %v3379
    %v3389 = vxor.u32 %v3381, 2147483648
    %v3390 = vxor.u32 %v3385, 2147483648
    %v3391 = vmul.f32 %v3389, 1.442695
    %v3392 = vpow.pop %v3391
    %v3393 = vmul.f32 %v3390, 1.442695
    %v3394 = vpow.pop %v3393
    %v3395 = vadd.f32 %v3392, 1.0
    %v3396 = vadd.f32 %v3394, 1.0
    %v3397 = vrcp.pop %v3395
    %v3398 = vmul.f32 1.0, %v3397
    %v3399 = vrcp.pop %v3396
    %v3400 = vmul.f32 1.0, %v3399
    %v3401 = vxor.u32 %v3382, 2147483648
    %v3402 = vxor.u32 %v3386, 2147483648
    %v3403 = vmul.f32 %v3401, 1.442695
    %v3404 = vpow.pop %v3403
    %v3405 = vmul.f32 %v3402, 1.442695
    %v3406 = vpow.pop %v3405
    %v3407 = vadd.f32 %v3404, 1.0
    %v3408 = vadd.f32 %v3406, 1.0
    %v3409 = vrcp.pop %v3407
    %v3410 = vmul.f32 1.0, %v3409
    %v3411 = vrcp.pop %v3408
    %v3412 = vmul.f32 1.0, %v3411
    %v3413 = vtanh.pop %v3383
    %v3414 = vtanh.pop %v3387
    %v3415 = vxor.u32 %v3384, 2147483648
    %v3416 = vxor.u32 %v3388, 2147483648
    %v3417 = vmul.f32 %v3415, 1.442695
    %v3418 = vpow.pop %v3417
    %v3419 = vmul.f32 %v3416, 1.442695
    %v3420 = vpow.pop %v3419
    %v3421 = vadd.f32 %v3418, 1.0
    %v3422 = vadd.f32 %v3420, 1.0
    %v3423 = vrcp.pop %v3421
    %v3424 = vmul.f32 1.0, %v3423
    %v3425 = vrcp.pop %v3422
    %v3426 = vmul.f32 1.0, %v3425
    %v3427 = vmul.f32 %v3410, %v3089
    %v3428 = vmul.f32 %v3412, %v3090
    %v3429 = vmul.f32 %v3398, %v3413
    %v3430 = vmul.f32 %v3400, %v3414
    %v3431 = vadd.f32 %v3427, %v3429
    %v3432 = vadd.f32 %v3428, %v3430
    %v3433 = vtanh.pop %v3431
    %v3434 = vtanh.pop %v3432
    %v3435 = vmul.f32 %v3424, %v3433
    %v3436 = vmul.f32 %v3426, %v3434
    %vm3437 = vcmp.eq.s32.totalorder %v1188, 5
    %vm3438 = vcmp.eq.s32.totalorder %v1189, 5
    %v3439 = vsel %vm3437, 1, 0
    %v3440 = vsel %vm3438, 1, 0
    %3441 = vset.pattern.permute.xlu0 0
    %3442 = vperm.xlu0 %3441, %v3439
    %v3443 = vpop.permute.xlu0 %3442
    %3444 = vset.pattern.permute.xlu0 0
    %3445 = vperm.xlu0 %3444, %v3440
    %v3446 = vpop.permute.xlu0 %3445
    %vm3447 = vcmp.eq.s32.totalorder %v3443, 1
    %vm3448 = vcmp.eq.s32.totalorder %v3446, 1
    %v3449 = vsel %vm3447, %v3435, %v3107
    %v3450 = vsel %vm3448, %v3436, %v3108
    %s3451 = scalar_lea.vmem [#allocation3], 64
    %v3452 = vld [vmem:[%s3451] sm:$0xff]
    %v3453 = vld [vmem:[%s3451 + $0x8] sm:$0xff]
    %v3454 = vld [vmem:[%s3451 + $0x10] sm:$0xff]
    %v3455 = vld [vmem:[%s3451 + $0x18] sm:$0xff]
    %v3456 = vunpack.c.l.bf16 %v3452
    %v3457 = vunpack.c.l.bf16 %v3453
    %v3458 = vunpack.c.l.bf16 %v3454
    %v3459 = vunpack.c.l.bf16 %v3455
    %v3460 = vunpack.c.h.bf16 %v3452
    %v3461 = vunpack.c.h.bf16 %v3453
    %v3462 = vunpack.c.h.bf16 %v3454
    %v3463 = vunpack.c.h.bf16 %v3455
    %v3464 = vpack.c.bf16 %v3278, %v3277
    %3465 = vmatprep.subr.bf16.mxu0 %v1692
    %3466 = vmatpush1.bf16.msra.mxu0 %v1691
    %3467 = vmatprep.subr.bf16.mxu0 %v1696
    %3468 = vmatpush1.bf16.msra.mxu0 %v1695
    %3469 = vmatprep.subr.bf16.mxu0 %v1700
    %3470 = vmatpush1.bf16.msra.mxu0 %v1699
    %3471 = vmatprep.subr.bf16.mxu0 %v1704
    %3472 = vmatpush1.bf16.msra.mxu0 %v1703
    %3473 = vmatprep.subr.bf16.mxu0 %v1708
    %3474 = vmatpush1.bf16.msra.mxu0 %v1707
    %3475 = vmatprep.subr.bf16.mxu0 %v1712
    %3476 = vmatpush1.bf16.msra.mxu0 %v1711
    %3477 = vmatprep.subr.bf16.mxu0 %v1716
    %3478 = vmatpush1.bf16.msra.mxu0 %v1715
    %3479 = vmatprep.subr.bf16.mxu0 %v1720
    %3480 = vmatpush1.bf16.msra.mxu0 %v1719
    %3481 = vmatprep.subr.bf16.mxu0 0
    %3482 = vmatpush1.bf16.msra.mxu0 0
    %3483 = vmatprep.subr.bf16.mxu0 0
    %3484 = vmatpush1.bf16.msra.mxu0 0
    %3485 = vmatprep.subr.bf16.mxu0 0
    %3486 = vmatpush1.bf16.msra.mxu0 0
    %3487 = vmatprep.subr.bf16.mxu0 0
    %3488 = vmatpush1.bf16.msra.mxu0 0
    %3489 = vmatprep.subr.bf16.mxu0 0
    %3490 = vmatpush1.bf16.msra.mxu0 0
    %3491 = vmatprep.subr.bf16.mxu0 0
    %3492 = vmatpush1.bf16.msra.mxu0 0
    %3493 = vmatprep.subr.bf16.mxu0 0
    %3494 = vmatpush1.bf16.msra.mxu0 0
    %3495 = vmatprep.subr.bf16.mxu0 0
    %3496 = vmatpush1.bf16.msra.mxu0 0
    %3497 = vmatprep.mubr.bf16.mxu0 0
    %3498 = vmatmul.mubr.bf16.gmra.mrb[0].mxu0 %v3464
    %v3499 = vpop.f32.mrb[0].mxu0
    %v3500 = vadd.f32 0.0, %v3499
    %v3501 = vpop.f32.mrb[0].mxu0
    %v3502 = vadd.f32 0.0, %v3501
    %v3503 = vpop.f32.mrb[0].mxu0
    %v3504 = vadd.f32 0.0, %v3503
    %v3505 = vpop.f32.mrb[0].mxu0
    %v3506 = vadd.f32 0.0, %v3505
    %3507 = vdwg.mxu0
    %3508 = vmatprep.subr.bf16.mxu0 %v1694
    %3509 = vmatpush1.bf16.msra.mxu0 %v1693
    %3510 = vmatprep.subr.bf16.mxu0 %v1698
    %3511 = vmatpush1.bf16.msra.mxu0 %v1697
    %3512 = vmatprep.subr.bf16.mxu0 %v1702
    %3513 = vmatpush1.bf16.msra.mxu0 %v1701
    %3514 = vmatprep.subr.bf16.mxu0 %v1706
    %3515 = vmatpush1.bf16.msra.mxu0 %v1705
    %3516 = vmatprep.subr.bf16.mxu0 %v1710
    %3517 = vmatpush1.bf16.msra.mxu0 %v1709
    %3518 = vmatprep.subr.bf16.mxu0 %v1714
    %3519 = vmatpush1.bf16.msra.mxu0 %v1713
    %3520 = vmatprep.subr.bf16.mxu0 %v1718
    %3521 = vmatpush1.bf16.msra.mxu0 %v1717
    %3522 = vmatprep.subr.bf16.mxu0 %v1722
    %3523 = vmatpush1.bf16.msra.mxu0 %v1721
    %3524 = vmatprep.subr.bf16.mxu0 0
    %3525 = vmatpush1.bf16.msra.mxu0 0
    %3526 = vmatprep.subr.bf16.mxu0 0
    %3527 = vmatpush1.bf16.msra.mxu0 0
    %3528 = vmatprep.subr.bf16.mxu0 0
    %3529 = vmatpush1.bf16.msra.mxu0 0
    %3530 = vmatprep.subr.bf16.mxu0 0
    %3531 = vmatpush1.bf16.msra.mxu0 0
    %3532 = vmatprep.subr.bf16.mxu0 0
    %3533 = vmatpush1.bf16.msra.mxu0 0
    %3534 = vmatprep.subr.bf16.mxu0 0
    %3535 = vmatpush1.bf16.msra.mxu0 0
    %3536 = vmatprep.subr.bf16.mxu0 0
    %3537 = vmatpush1.bf16.msra.mxu0 0
    %3538 = vmatprep.subr.bf16.mxu0 0
    %3539 = vmatpush1.bf16.msra.mxu0 0
    %3540 = vmatprep.mubr.bf16.mxu0 0
    %3541 = vmatmul.mubr.bf16.gmra.mrb[0].mxu0 %v3464
    %v3542 = vpop.f32.mrb[0].mxu0
    %v3543 = vadd.f32 0.0, %v3542
    %v3544 = vpop.f32.mrb[0].mxu0
    %v3545 = vadd.f32 0.0, %v3544
    %v3546 = vpop.f32.mrb[0].mxu0
    %v3547 = vadd.f32 0.0, %v3546
    %v3548 = vpop.f32.mrb[0].mxu0
    %v3549 = vadd.f32 0.0, %v3548
    %3550 = vdwg.mxu0
    %v3551 = vadd.f32 %v3456, %v3500
    %v3552 = vadd.f32 %v3457, %v3502
    %v3553 = vadd.f32 %v3458, %v3543
    %v3554 = vadd.f32 %v3459, %v3545
    %v3555 = vadd.f32 %v3460, %v3504
    %v3556 = vadd.f32 %v3461, %v3506
    %v3557 = vadd.f32 %v3462, %v3547
    %v3558 = vadd.f32 %v3463, %v3549
    %v3559 = vxor.u32 %v3551, 2147483648
    %v3560 = vxor.u32 %v3555, 2147483648
    %v3561 = vmul.f32 %v3559, 1.442695
    %v3562 = vpow.pop %v3561
    %v3563 = vmul.f32 %v3560, 1.442695
    %v3564 = vpow.pop %v3563
    %v3565 = vadd.f32 %v3562, 1.0
    %v3566 = vadd.f32 %v3564, 1.0
    %v3567 = vrcp.pop %v3565
    %v3568 = vmul.f32 1.0, %v3567
    %v3569 = vrcp.pop %v3566
    %v3570 = vmul.f32 1.0, %v3569
    %v3571 = vxor.u32 %v3552, 2147483648
    %v3572 = vxor.u32 %v3556, 2147483648
    %v3573 = vmul.f32 %v3571, 1.442695
    %v3574 = vpow.pop %v3573
    %v3575 = vmul.f32 %v3572, 1.442695
    %v3576 = vpow.pop %v3575
    %v3577 = vadd.f32 %v3574, 1.0
    %v3578 = vadd.f32 %v3576, 1.0
    %v3579 = vrcp.pop %v3577
    %v3580 = vmul.f32 1.0, %v3579
    %v3581 = vrcp.pop %v3578
    %v3582 = vmul.f32 1.0, %v3581
    %v3583 = vtanh.pop %v3553
    %v3584 = vtanh.pop %v3557
    %v3585 = vxor.u32 %v3554, 2147483648
    %v3586 = vxor.u32 %v3558, 2147483648
    %v3587 = vmul.f32 %v3585, 1.442695
    %v3588 = vpow.pop %v3587
    %v3589 = vmul.f32 %v3586, 1.442695
    %v3590 = vpow.pop %v3589
    %v3591 = vadd.f32 %v3588, 1.0
    %v3592 = vadd.f32 %v3590, 1.0
    %v3593 = vrcp.pop %v3591
    %v3594 = vmul.f32 1.0, %v3593
    %v3595 = vrcp.pop %v3592
    %v3596 = vmul.f32 1.0, %v3595
    %v3597 = vmul.f32 %v3580, %v3279
    %v3598 = vmul.f32 %v3582, %v3280
    %v3599 = vmul.f32 %v3568, %v3583
    %v3600 = vmul.f32 %v3570, %v3584
    %v3601 = vadd.f32 %v3597, %v3599
    %v3602 = vadd.f32 %v3598, %v3600
    %v3603 = vtanh.pop %v3601
    %v3604 = vtanh.pop %v3602
    %v3605 = vmul.f32 %v3594, %v3603
    %v3606 = vmul.f32 %v3596, %v3604
    %vm3607 = vcmp.gt.s32.totalorder %v1186, 2
    %vm3608 = vcmp.gt.s32.totalorder %v1187, 2
    %v3609 = vsel %vm3607, 1, 0
    %v3610 = vsel %vm3608, 1, 0
    %3611 = vset.pattern.permute.xlu0 0
    %3612 = vperm.xlu0 %3611, %v3609
    %v3613 = vpop.permute.xlu0 %3612
    %3614 = vset.pattern.permute.xlu0 0
    %3615 = vperm.xlu0 %3614, %v3610
    %v3616 = vpop.permute.xlu0 %3615
    %vm3617 = vcmp.eq.s32.totalorder %v3613, 1
    %vm3618 = vcmp.eq.s32.totalorder %v3616, 1
    %v3619 = vsel %vm3617, %v3605, %v3277
    %v3620 = vsel %vm3618, %v3606, %v3278
    %v3621 = vsel %vm3617, %v3601, %v3279
    %v3622 = vsel %vm3618, %v3602, %v3280
    %s3623 = scalar_lea.vmem [#allocation2], 192
    %v3624 = vld [vmem:[%s3623] sm:$0xff]
    %v3625 = vld [vmem:[%s3623 + $0x8] sm:$0xff]
    %v3626 = vld [vmem:[%s3623 + $0x10] sm:$0xff]
    %v3627 = vld [vmem:[%s3623 + $0x18] sm:$0xff]
    %v3628 = vunpack.c.l.bf16 %v3624
    %v3629 = vunpack.c.l.bf16 %v3625
    %v3630 = vunpack.c.l.bf16 %v3626
    %v3631 = vunpack.c.l.bf16 %v3627
    %v3632 = vunpack.c.h.bf16 %v3624
    %v3633 = vunpack.c.h.bf16 %v3625
    %v3634 = vunpack.c.h.bf16 %v3626
    %v3635 = vunpack.c.h.bf16 %v3627
    %v3636 = vpack.c.bf16 %v3436, %v3435
    %3637 = vmatprep.subr.bf16.mxu0 %v1331
    %3638 = vmatpush1.bf16.msra.mxu0 %v1330
    %3639 = vmatprep.subr.bf16.mxu0 %v1335
    %3640 = vmatpush1.bf16.msra.mxu0 %v1334
    %3641 = vmatprep.subr.bf16.mxu0 %v1339
    %3642 = vmatpush1.bf16.msra.mxu0 %v1338
    %3643 = vmatprep.subr.bf16.mxu0 %v1343
    %3644 = vmatpush1.bf16.msra.mxu0 %v1342
    %3645 = vmatprep.subr.bf16.mxu0 %v1347
    %3646 = vmatpush1.bf16.msra.mxu0 %v1346
    %3647 = vmatprep.subr.bf16.mxu0 %v1351
    %3648 = vmatpush1.bf16.msra.mxu0 %v1350
    %3649 = vmatprep.subr.bf16.mxu0 %v1355
    %3650 = vmatpush1.bf16.msra.mxu0 %v1354
    %3651 = vmatprep.subr.bf16.mxu0 %v1359
    %3652 = vmatpush1.bf16.msra.mxu0 %v1358
    %3653 = vmatprep.subr.bf16.mxu0 0
    %3654 = vmatpush1.bf16.msra.mxu0 0
    %3655 = vmatprep.subr.bf16.mxu0 0
    %3656 = vmatpush1.bf16.msra.mxu0 0
    %3657 = vmatprep.subr.bf16.mxu0 0
    %3658 = vmatpush1.bf16.msra.mxu0 0
    %3659 = vmatprep.subr.bf16.mxu0 0
    %3660 = vmatpush1.bf16.msra.mxu0 0
    %3661 = vmatprep.subr.bf16.mxu0 0
    %3662 = vmatpush1.bf16.msra.mxu0 0
    %3663 = vmatprep.subr.bf16.mxu0 0
    %3664 = vmatpush1.bf16.msra.mxu0 0
    %3665 = vmatprep.subr.bf16.mxu0 0
    %3666 = vmatpush1.bf16.msra.mxu0 0
    %3667 = vmatprep.subr.bf16.mxu0 0
    %3668 = vmatpush1.bf16.msra.mxu0 0
    %3669 = vmatprep.mubr.bf16.mxu0 0
    %3670 = vmatmul.mubr.bf16.gmra.mrb[0].mxu0 %v3636
    %v3671 = vpop.f32.mrb[0].mxu0
    %v3672 = vadd.f32 0.0, %v3671
    %v3673 = vpop.f32.mrb[0].mxu0
    %v3674 = vadd.f32 0.0, %v3673
    %v3675 = vpop.f32.mrb[0].mxu0
    %v3676 = vadd.f32 0.0, %v3675
    %v3677 = vpop.f32.mrb[0].mxu0
    %v3678 = vadd.f32 0.0, %v3677
    %3679 = vdwg.mxu0
    %3680 = vmatprep.subr.bf16.mxu0 %v1333
    %3681 = vmatpush1.bf16.msra.mxu0 %v1332
    %3682 = vmatprep.subr.bf16.mxu0 %v1337
    %3683 = vmatpush1.bf16.msra.mxu0 %v1336
    %3684 = vmatprep.subr.bf16.mxu0 %v1341
    %3685 = vmatpush1.bf16.msra.mxu0 %v1340
    %3686 = vmatprep.subr.bf16.mxu0 %v1345
    %3687 = vmatpush1.bf16.msra.mxu0 %v1344
    %3688 = vmatprep.subr.bf16.mxu0 %v1349
    %3689 = vmatpush1.bf16.msra.mxu0 %v1348
    %3690 = vmatprep.subr.bf16.mxu0 %v1353
    %3691 = vmatpush1.bf16.msra.mxu0 %v1352
    %3692 = vmatprep.subr.bf16.mxu0 %v1357
    %3693 = vmatpush1.bf16.msra.mxu0 %v1356
    %3694 = vmatprep.subr.bf16.mxu0 %v1361
    %3695 = vmatpush1.bf16.msra.mxu0 %v1360
    %3696 = vmatprep.subr.bf16.mxu0 0
    %3697 = vmatpush1.bf16.msra.mxu0 0
    %3698 = vmatprep.subr.bf16.mxu0 0
    %3699 = vmatpush1.bf16.msra.mxu0 0
    %3700 = vmatprep.subr.bf16.mxu0 0
    %3701 = vmatpush1.bf16.msra.mxu0 0
    %3702 = vmatprep.subr.bf16.mxu0 0
    %3703 = vmatpush1.bf16.msra.mxu0 0
    %3704 = vmatprep.subr.bf16.mxu0 0
    %3705 = vmatpush1.bf16.msra.mxu0 0
    %3706 = vmatprep.subr.bf16.mxu0 0
    %3707 = vmatpush1.bf16.msra.mxu0 0
    %3708 = vmatprep.subr.bf16.mxu0 0
    %3709 = vmatpush1.bf16.msra.mxu0 0
    %3710 = vmatprep.subr.bf16.mxu0 0
    %3711 = vmatpush1.bf16.msra.mxu0 0
    %3712 = vmatprep.mubr.bf16.mxu0 0
    %3713 = vmatmul.mubr.bf16.gmra.mrb[0].mxu0 %v3636
    %v3714 = vpop.f32.mrb[0].mxu0
    %v3715 = vadd.f32 0.0, %v3714
    %v3716 = vpop.f32.mrb[0].mxu0
    %v3717 = vadd.f32 0.0, %v3716
    %v3718 = vpop.f32.mrb[0].mxu0
    %v3719 = vadd.f32 0.0, %v3718
    %v3720 = vpop.f32.mrb[0].mxu0
    %v3721 = vadd.f32 0.0, %v3720
    %3722 = vdwg.mxu0
    %v3723 = vadd.f32 %v3628, %v3672
    %v3724 = vadd.f32 %v3629, %v3674
    %v3725 = vadd.f32 %v3630, %v3715
    %v3726 = vadd.f32 %v3631, %v3717
    %v3727 = vadd.f32 %v3632, %v3676
    %v3728 = vadd.f32 %v3633, %v3678
    %v3729 = vadd.f32 %v3634, %v3719
    %v3730 = vadd.f32 %v3635, %v3721
    %v3731 = vxor.u32 %v3723, 2147483648
    %v3732 = vxor.u32 %v3727, 2147483648
    %v3733 = vmul.f32 %v3731, 1.442695
    %v3734 = vpow.pop %v3733
    %v3735 = vmul.f32 %v3732, 1.442695
    %v3736 = vpow.pop %v3735
    %v3737 = vadd.f32 %v3734, 1.0
    %v3738 = vadd.f32 %v3736, 1.0
    %v3739 = vrcp.pop %v3737
    %v3740 = vmul.f32 1.0, %v3739
    %v3741 = vrcp.pop %v3738
    %v3742 = vmul.f32 1.0, %v3741
    %v3743 = vxor.u32 %v3724, 2147483648
    %v3744 = vxor.u32 %v3728, 2147483648
    %v3745 = vmul.f32 %v3743, 1.442695
    %v3746 = vpow.pop %v3745
    %v3747 = vmul.f32 %v3744, 1.442695
    %v3748 = vpow.pop %v3747
    %v3749 = vadd.f32 %v3746, 1.0
    %v3750 = vadd.f32 %v3748, 1.0
    %v3751 = vrcp.pop %v3749
    %v3752 = vmul.f32 1.0, %v3751
    %v3753 = vrcp.pop %v3750
    %v3754 = vmul.f32 1.0, %v3753
    %v3755 = vtanh.pop %v3725
    %v3756 = vtanh.pop %v3729
    %v3757 = vxor.u32 %v3726, 2147483648
    %v3758 = vxor.u32 %v3730, 2147483648
    %v3759 = vmul.f32 %v3757, 1.442695
    %v3760 = vpow.pop %v3759
    %v3761 = vmul.f32 %v3758, 1.442695
    %v3762 = vpow.pop %v3761
    %v3763 = vadd.f32 %v3760, 1.0
    %v3764 = vadd.f32 %v3762, 1.0
    %v3765 = vrcp.pop %v3763
    %v3766 = vmul.f32 1.0, %v3765
    %v3767 = vrcp.pop %v3764
    %v3768 = vmul.f32 1.0, %v3767
    %v3769 = vmul.f32 %v3752, %v3431
    %v3770 = vmul.f32 %v3754, %v3432
    %v3771 = vmul.f32 %v3740, %v3755
    %v3772 = vmul.f32 %v3742, %v3756
    %v3773 = vadd.f32 %v3769, %v3771
    %v3774 = vadd.f32 %v3770, %v3772
    %v3775 = vtanh.pop %v3773
    %v3776 = vtanh.pop %v3774
    %v3777 = vmul.f32 %v3766, %v3775
    %v3778 = vmul.f32 %v3768, %v3776
    %vm3779 = vcmp.eq.s32.totalorder %v1188, 6
    %vm3780 = vcmp.eq.s32.totalorder %v1189, 6
    %v3781 = vsel %vm3779, 1, 0
    %v3782 = vsel %vm3780, 1, 0
    %3783 = vset.pattern.permute.xlu0 0
    %3784 = vperm.xlu0 %3783, %v3781
    %v3785 = vpop.permute.xlu0 %3784
    %3786 = vset.pattern.permute.xlu0 0
    %3787 = vperm.xlu0 %3786, %v3782
    %v3788 = vpop.permute.xlu0 %3787
    %vm3789 = vcmp.eq.s32.totalorder %v3785, 1
    %vm3790 = vcmp.eq.s32.totalorder %v3788, 1
    %v3791 = vsel %vm3789, %v3777, %v3449
    %v3792 = vsel %vm3790, %v3778, %v3450
    %s3793 = scalar_lea.vmem [#allocation3], 32
    %v3794 = vld [vmem:[%s3793] sm:$0xff]
    %v3795 = vld [vmem:[%s3793 + $0x8] sm:$0xff]
    %v3796 = vld [vmem:[%s3793 + $0x10] sm:$0xff]
    %v3797 = vld [vmem:[%s3793 + $0x18] sm:$0xff]
    %v3798 = vunpack.c.l.bf16 %v3794
    %v3799 = vunpack.c.l.bf16 %v3795
    %v3800 = vunpack.c.l.bf16 %v3796
    %v3801 = vunpack.c.l.bf16 %v3797
    %v3802 = vunpack.c.h.bf16 %v3794
    %v3803 = vunpack.c.h.bf16 %v3795
    %v3804 = vunpack.c.h.bf16 %v3796
    %v3805 = vunpack.c.h.bf16 %v3797
    %v3806 = vpack.c.bf16 %v3620, %v3619
    %3807 = vmatprep.subr.bf16.mxu0 %v1692
    %3808 = vmatpush1.bf16.msra.mxu0 %v1691
    %3809 = vmatprep.subr.bf16.mxu0 %v1696
    %3810 = vmatpush1.bf16.msra.mxu0 %v1695
    %3811 = vmatprep.subr.bf16.mxu0 %v1700
    %3812 = vmatpush1.bf16.msra.mxu0 %v1699
    %3813 = vmatprep.subr.bf16.mxu0 %v1704
    %3814 = vmatpush1.bf16.msra.mxu0 %v1703
    %3815 = vmatprep.subr.bf16.mxu0 %v1708
    %3816 = vmatpush1.bf16.msra.mxu0 %v1707
    %3817 = vmatprep.subr.bf16.mxu0 %v1712
    %3818 = vmatpush1.bf16.msra.mxu0 %v1711
    %3819 = vmatprep.subr.bf16.mxu0 %v1716
    %3820 = vmatpush1.bf16.msra.mxu0 %v1715
    %3821 = vmatprep.subr.bf16.mxu0 %v1720
    %3822 = vmatpush1.bf16.msra.mxu0 %v1719
    %3823 = vmatprep.subr.bf16.mxu0 0
    %3824 = vmatpush1.bf16.msra.mxu0 0
    %3825 = vmatprep.subr.bf16.mxu0 0
    %3826 = vmatpush1.bf16.msra.mxu0 0
    %3827 = vmatprep.subr.bf16.mxu0 0
    %3828 = vmatpush1.bf16.msra.mxu0 0
    %3829 = vmatprep.subr.bf16.mxu0 0
    %3830 = vmatpush1.bf16.msra.mxu0 0
    %3831 = vmatprep.subr.bf16.mxu0 0
    %3832 = vmatpush1.bf16.msra.mxu0 0
    %3833 = vmatprep.subr.bf16.mxu0 0
    %3834 = vmatpush1.bf16.msra.mxu0 0
    %3835 = vmatprep.subr.bf16.mxu0 0
    %3836 = vmatpush1.bf16.msra.mxu0 0
    %3837 = vmatprep.subr.bf16.mxu0 0
    %3838 = vmatpush1.bf16.msra.mxu0 0
    %3839 = vmatprep.mubr.bf16.mxu0 0
    %3840 = vmatmul.mubr.bf16.gmra.mrb[0].mxu0 %v3806
    %v3841 = vpop.f32.mrb[0].mxu0
    %v3842 = vadd.f32 0.0, %v3841
    %v3843 = vpop.f32.mrb[0].mxu0
    %v3844 = vadd.f32 0.0, %v3843
    %v3845 = vpop.f32.mrb[0].mxu0
    %v3846 = vadd.f32 0.0, %v3845
    %v3847 = vpop.f32.mrb[0].mxu0
    %v3848 = vadd.f32 0.0, %v3847
    %3849 = vdwg.mxu0
    %3850 = vmatprep.subr.bf16.mxu0 %v1694
    %3851 = vmatpush1.bf16.msra.mxu0 %v1693
    %3852 = vmatprep.subr.bf16.mxu0 %v1698
    %3853 = vmatpush1.bf16.msra.mxu0 %v1697
    %3854 = vmatprep.subr.bf16.mxu0 %v1702
    %3855 = vmatpush1.bf16.msra.mxu0 %v1701
    %3856 = vmatprep.subr.bf16.mxu0 %v1706
    %3857 = vmatpush1.bf16.msra.mxu0 %v1705
    %3858 = vmatprep.subr.bf16.mxu0 %v1710
    %3859 = vmatpush1.bf16.msra.mxu0 %v1709
    %3860 = vmatprep.subr.bf16.mxu0 %v1714
    %3861 = vmatpush1.bf16.msra.mxu0 %v1713
    %3862 = vmatprep.subr.bf16.mxu0 %v1718
    %3863 = vmatpush1.bf16.msra.mxu0 %v1717
    %3864 = vmatprep.subr.bf16.mxu0 %v1722
    %3865 = vmatpush1.bf16.msra.mxu0 %v1721
    %3866 = vmatprep.subr.bf16.mxu0 0
    %3867 = vmatpush1.bf16.msra.mxu0 0
    %3868 = vmatprep.subr.bf16.mxu0 0
    %3869 = vmatpush1.bf16.msra.mxu0 0
    %3870 = vmatprep.subr.bf16.mxu0 0
    %3871 = vmatpush1.bf16.msra.mxu0 0
    %3872 = vmatprep.subr.bf16.mxu0 0
    %3873 = vmatpush1.bf16.msra.mxu0 0
    %3874 = vmatprep.subr.bf16.mxu0 0
    %3875 = vmatpush1.bf16.msra.mxu0 0
    %3876 = vmatprep.subr.bf16.mxu0 0
    %3877 = vmatpush1.bf16.msra.mxu0 0
    %3878 = vmatprep.subr.bf16.mxu0 0
    %3879 = vmatpush1.bf16.msra.mxu0 0
    %3880 = vmatprep.subr.bf16.mxu0 0
    %3881 = vmatpush1.bf16.msra.mxu0 0
    %3882 = vmatprep.mubr.bf16.mxu0 0
    %3883 = vmatmul.mubr.bf16.gmra.mrb[0].mxu0 %v3806
    %v3884 = vpop.f32.mrb[0].mxu0
    %v3885 = vadd.f32 0.0, %v3884
    %v3886 = vpop.f32.mrb[0].mxu0
    %v3887 = vadd.f32 0.0, %v3886
    %v3888 = vpop.f32.mrb[0].mxu0
    %v3889 = vadd.f32 0.0, %v3888
    %v3890 = vpop.f32.mrb[0].mxu0
    %v3891 = vadd.f32 0.0, %v3890
    %3892 = vdwg.mxu0
    %v3893 = vadd.f32 %v3798, %v3842
    %v3894 = vadd.f32 %v3799, %v3844
    %v3895 = vadd.f32 %v3800, %v3885
    %v3896 = vadd.f32 %v3801, %v3887
    %v3897 = vadd.f32 %v3802, %v3846
    %v3898 = vadd.f32 %v3803, %v3848
    %v3899 = vadd.f32 %v3804, %v3889
    %v3900 = vadd.f32 %v3805, %v3891
    %v3901 = vxor.u32 %v3893, 2147483648
    %v3902 = vxor.u32 %v3897, 2147483648
    %v3903 = vmul.f32 %v3901, 1.442695
    %v3904 = vpow.pop %v3903
    %v3905 = vmul.f32 %v3902, 1.442695
    %v3906 = vpow.pop %v3905
    %v3907 = vadd.f32 %v3904, 1.0
    %v3908 = vadd.f32 %v3906, 1.0
    %v3909 = vrcp.pop %v3907
    %v3910 = vmul.f32 1.0, %v3909
    %v3911 = vrcp.pop %v3908
    %v3912 = vmul.f32 1.0, %v3911
    %v3913 = vxor.u32 %v3894, 2147483648
    %v3914 = vxor.u32 %v3898, 2147483648
    %v3915 = vmul.f32 %v3913, 1.442695
    %v3916 = vpow.pop %v3915
    %v3917 = vmul.f32 %v3914, 1.442695
    %v3918 = vpow.pop %v3917
    %v3919 = vadd.f32 %v3916, 1.0
    %v3920 = vadd.f32 %v3918, 1.0
    %v3921 = vrcp.pop %v3919
    %v3922 = vmul.f32 1.0, %v3921
    %v3923 = vrcp.pop %v3920
    %v3924 = vmul.f32 1.0, %v3923
    %v3925 = vtanh.pop %v3895
    %v3926 = vtanh.pop %v3899
    %v3927 = vxor.u32 %v3896, 2147483648
    %v3928 = vxor.u32 %v3900, 2147483648
    %v3929 = vmul.f32 %v3927, 1.442695
    %v3930 = vpow.pop %v3929
    %v3931 = vmul.f32 %v3928, 1.442695
    %v3932 = vpow.pop %v3931
    %v3933 = vadd.f32 %v3930, 1.0
    %v3934 = vadd.f32 %v3932, 1.0
    %v3935 = vrcp.pop %v3933
    %v3936 = vmul.f32 1.0, %v3935
    %v3937 = vrcp.pop %v3934
    %v3938 = vmul.f32 1.0, %v3937
    %v3939 = vmul.f32 %v3922, %v3621
    %v3940 = vmul.f32 %v3924, %v3622
    %v3941 = vmul.f32 %v3910, %v3925
    %v3942 = vmul.f32 %v3912, %v3926
    %v3943 = vadd.f32 %v3939, %v3941
    %v3944 = vadd.f32 %v3940, %v3942
    %v3945 = vtanh.pop %v3943
    %v3946 = vtanh.pop %v3944
    %v3947 = vmul.f32 %v3936, %v3945
    %v3948 = vmul.f32 %v3938, %v3946
    %vm3949 = vcmp.gt.s32.totalorder %v1186, 1
    %vm3950 = vcmp.gt.s32.totalorder %v1187, 1
    %v3951 = vsel %vm3949, 1, 0
    %v3952 = vsel %vm3950, 1, 0
    %3953 = vset.pattern.permute.xlu0 0
    %3954 = vperm.xlu0 %3953, %v3951
    %v3955 = vpop.permute.xlu0 %3954
    %3956 = vset.pattern.permute.xlu0 0
    %3957 = vperm.xlu0 %3956, %v3952
    %v3958 = vpop.permute.xlu0 %3957
    %vm3959 = vcmp.eq.s32.totalorder %v3955, 1
    %vm3960 = vcmp.eq.s32.totalorder %v3958, 1
    %v3961 = vsel %vm3959, %v3947, %v3619
    %v3962 = vsel %vm3960, %v3948, %v3620
    %v3963 = vsel %vm3959, %v3943, %v3621
    %v3964 = vsel %vm3960, %v3944, %v3622
    %s3965 = scalar_lea.vmem [#allocation2], 224
    %v3966 = vld [vmem:[%s3965] sm:$0xff]
    %v3967 = vld [vmem:[%s3965 + $0x8] sm:$0xff]
    %v3968 = vld [vmem:[%s3965 + $0x10] sm:$0xff]
    %v3969 = vld [vmem:[%s3965 + $0x18] sm:$0xff]
    %v3970 = vunpack.c.l.bf16 %v3966
    %v3971 = vunpack.c.l.bf16 %v3967
    %v3972 = vunpack.c.l.bf16 %v3968
    %v3973 = vunpack.c.l.bf16 %v3969
    %v3974 = vunpack.c.h.bf16 %v3966
    %v3975 = vunpack.c.h.bf16 %v3967
    %v3976 = vunpack.c.h.bf16 %v3968
    %v3977 = vunpack.c.h.bf16 %v3969
    %v3978 = vpack.c.bf16 %v3778, %v3777
    %3979 = vmatprep.subr.bf16.mxu0 %v1331
    %3980 = vmatpush1.bf16.msra.mxu0 %v1330
    %3981 = vmatprep.subr.bf16.mxu0 %v1335
    %3982 = vmatpush1.bf16.msra.mxu0 %v1334
    %3983 = vmatprep.subr.bf16.mxu0 %v1339
    %3984 = vmatpush1.bf16.msra.mxu0 %v1338
    %3985 = vmatprep.subr.bf16.mxu0 %v1343
    %3986 = vmatpush1.bf16.msra.mxu0 %v1342
    %3987 = vmatprep.subr.bf16.mxu0 %v1347
    %3988 = vmatpush1.bf16.msra.mxu0 %v1346
    %3989 = vmatprep.subr.bf16.mxu0 %v1351
    %3990 = vmatpush1.bf16.msra.mxu0 %v1350
    %3991 = vmatprep.subr.bf16.mxu0 %v1355
    %3992 = vmatpush1.bf16.msra.mxu0 %v1354
    %3993 = vmatprep.subr.bf16.mxu0 %v1359
    %3994 = vmatpush1.bf16.msra.mxu0 %v1358
    %3995 = vmatprep.subr.bf16.mxu0 0
    %3996 = vmatpush1.bf16.msra.mxu0 0
    %3997 = vmatprep.subr.bf16.mxu0 0
    %3998 = vmatpush1.bf16.msra.mxu0 0
    %3999 = vmatprep.subr.bf16.mxu0 0
    %4000 = vmatpush1.bf16.msra.mxu0 0
    %4001 = vmatprep.subr.bf16.mxu0 0
    %4002 = vmatpush1.bf16.msra.mxu0 0
    %4003 = vmatprep.subr.bf16.mxu0 0
    %4004 = vmatpush1.bf16.msra.mxu0 0
    %4005 = vmatprep.subr.bf16.mxu0 0
    %4006 = vmatpush1.bf16.msra.mxu0 0
    %4007 = vmatprep.subr.bf16.mxu0 0
    %4008 = vmatpush1.bf16.msra.mxu0 0
    %4009 = vmatprep.subr.bf16.mxu0 0
    %4010 = vmatpush1.bf16.msra.mxu0 0
    %4011 = vmatprep.mubr.bf16.mxu0 0
    %4012 = vmatmul.mubr.bf16.gmra.mrb[0].mxu0 %v3978
    %v4013 = vpop.f32.mrb[0].mxu0
    %v4014 = vadd.f32 0.0, %v4013
    %v4015 = vpop.f32.mrb[0].mxu0
    %v4016 = vadd.f32 0.0, %v4015
    %v4017 = vpop.f32.mrb[0].mxu0
    %v4018 = vadd.f32 0.0, %v4017
    %v4019 = vpop.f32.mrb[0].mxu0
    %v4020 = vadd.f32 0.0, %v4019
    %4021 = vdwg.mxu0
    %4022 = vmatprep.subr.bf16.mxu0 %v1333
    %4023 = vmatpush1.bf16.msra.mxu0 %v1332
    %4024 = vmatprep.subr.bf16.mxu0 %v1337
    %4025 = vmatpush1.bf16.msra.mxu0 %v1336
    %4026 = vmatprep.subr.bf16.mxu0 %v1341
    %4027 = vmatpush1.bf16.msra.mxu0 %v1340
    %4028 = vmatprep.subr.bf16.mxu0 %v1345
    %4029 = vmatpush1.bf16.msra.mxu0 %v1344
    %4030 = vmatprep.subr.bf16.mxu0 %v1349
    %4031 = vmatpush1.bf16.msra.mxu0 %v1348
    %4032 = vmatprep.subr.bf16.mxu0 %v1353
    %4033 = vmatpush1.bf16.msra.mxu0 %v1352
    %4034 = vmatprep.subr.bf16.mxu0 %v1357
    %4035 = vmatpush1.bf16.msra.mxu0 %v1356
    %4036 = vmatprep.subr.bf16.mxu0 %v1361
    %4037 = vmatpush1.bf16.msra.mxu0 %v1360
    %4038 = vmatprep.subr.bf16.mxu0 0
    %4039 = vmatpush1.bf16.msra.mxu0 0
    %4040 = vmatprep.subr.bf16.mxu0 0
    %4041 = vmatpush1.bf16.msra.mxu0 0
    %4042 = vmatprep.subr.bf16.mxu0 0
    %4043 = vmatpush1.bf16.msra.mxu0 0
    %4044 = vmatprep.subr.bf16.mxu0 0
    %4045 = vmatpush1.bf16.msra.mxu0 0
    %4046 = vmatprep.subr.bf16.mxu0 0
    %4047 = vmatpush1.bf16.msra.mxu0 0
    %4048 = vmatprep.subr.bf16.mxu0 0
    %4049 = vmatpush1.bf16.msra.mxu0 0
    %4050 = vmatprep.subr.bf16.mxu0 0
    %4051 = vmatpush1.bf16.msra.mxu0 0
    %4052 = vmatprep.subr.bf16.mxu0 0
    %4053 = vmatpush1.bf16.msra.mxu0 0
    %4054 = vmatprep.mubr.bf16.mxu0 0
    %4055 = vmatmul.mubr.bf16.gmra.mrb[0].mxu0 %v3978
    %v4056 = vpop.f32.mrb[0].mxu0
    %v4057 = vadd.f32 0.0, %v4056
    %v4058 = vpop.f32.mrb[0].mxu0
    %v4059 = vadd.f32 0.0, %v4058
    %v4060 = vpop.f32.mrb[0].mxu0
    %v4061 = vadd.f32 0.0, %v4060
    %v4062 = vpop.f32.mrb[0].mxu0
    %v4063 = vadd.f32 0.0, %v4062
    %4064 = vdwg.mxu0
    %v4065 = vadd.f32 %v3970, %v4014
    %v4066 = vadd.f32 %v3971, %v4016
    %v4067 = vadd.f32 %v3972, %v4057
    %v4068 = vadd.f32 %v3973, %v4059
    %v4069 = vadd.f32 %v3974, %v4018
    %v4070 = vadd.f32 %v3975, %v4020
    %v4071 = vadd.f32 %v3976, %v4061
    %v4072 = vadd.f32 %v3977, %v4063
    %v4073 = vxor.u32 %v4065, 2147483648
    %v4074 = vxor.u32 %v4069, 2147483648
    %v4075 = vmul.f32 %v4073, 1.442695
    %v4076 = vpow.pop %v4075
    %v4077 = vmul.f32 %v4074, 1.442695
    %v4078 = vpow.pop %v4077
    %v4079 = vadd.f32 %v4076, 1.0
    %v4080 = vadd.f32 %v4078, 1.0
    %v4081 = vrcp.pop %v4079
    %v4082 = vmul.f32 1.0, %v4081
    %v4083 = vrcp.pop %v4080
    %v4084 = vmul.f32 1.0, %v4083
    %v4085 = vxor.u32 %v4066, 2147483648
    %v4086 = vxor.u32 %v4070, 2147483648
    %v4087 = vmul.f32 %v4085, 1.442695
    %v4088 = vpow.pop %v4087
    %v4089 = vmul.f32 %v4086, 1.442695
    %v4090 = vpow.pop %v4089
    %v4091 = vadd.f32 %v4088, 1.0
    %v4092 = vadd.f32 %v4090, 1.0
    %v4093 = vrcp.pop %v4091
    %v4094 = vmul.f32 1.0, %v4093
    %v4095 = vrcp.pop %v4092
    %v4096 = vmul.f32 1.0, %v4095
    %v4097 = vtanh.pop %v4067
    %v4098 = vtanh.pop %v4071
    %v4099 = vxor.u32 %v4068, 2147483648
    %v4100 = vxor.u32 %v4072, 2147483648
    %v4101 = vmul.f32 %v4099, 1.442695
    %v4102 = vpow.pop %v4101
    %v4103 = vmul.f32 %v4100, 1.442695
    %v4104 = vpow.pop %v4103
    %v4105 = vadd.f32 %v4102, 1.0
    %v4106 = vadd.f32 %v4104, 1.0
    %v4107 = vrcp.pop %v4105
    %v4108 = vmul.f32 1.0, %v4107
    %v4109 = vrcp.pop %v4106
    %v4110 = vmul.f32 1.0, %v4109
    %v4111 = vmul.f32 %v4094, %v3773
    %v4112 = vmul.f32 %v4096, %v3774
    %v4113 = vmul.f32 %v4082, %v4097
    %v4114 = vmul.f32 %v4084, %v4098
    %v4115 = vadd.f32 %v4111, %v4113
    %v4116 = vadd.f32 %v4112, %v4114
    %v4117 = vtanh.pop %v4115
    %v4118 = vtanh.pop %v4116
    %v4119 = vmul.f32 %v4108, %v4117
    %v4120 = vmul.f32 %v4110, %v4118
    %vm4121 = vcmp.eq.s32.totalorder %v1188, 7
    %vm4122 = vcmp.eq.s32.totalorder %v1189, 7
    %v4123 = vsel %vm4121, 1, 0
    %v4124 = vsel %vm4122, 1, 0
    %4125 = vset.pattern.permute.xlu0 0
    %4126 = vperm.xlu0 %4125, %v4123
    %v4127 = vpop.permute.xlu0 %4126
    %4128 = vset.pattern.permute.xlu0 0
    %4129 = vperm.xlu0 %4128, %v4124
    %v4130 = vpop.permute.xlu0 %4129
    %vm4131 = vcmp.eq.s32.totalorder %v4127, 1
    %vm4132 = vcmp.eq.s32.totalorder %v4130, 1
    %v4133 = vsel %vm4131, %v4119, %v3791
    %v4134 = vsel %vm4132, %v4120, %v3792
    %v4135 = vld [vmem:[#allocation3] sm:$0xff]
    %v4136 = vld [vmem:[#allocation3 + $0x8] sm:$0xff]
    %v4137 = vld [vmem:[#allocation3 + $0x10] sm:$0xff]
    %v4138 = vld [vmem:[#allocation3 + $0x18] sm:$0xff]
    %v4139 = vunpack.c.l.bf16 %v4135
    %v4140 = vunpack.c.l.bf16 %v4136
    %v4141 = vunpack.c.l.bf16 %v4137
    %v4142 = vunpack.c.l.bf16 %v4138
    %v4143 = vunpack.c.h.bf16 %v4135
    %v4144 = vunpack.c.h.bf16 %v4136
    %v4145 = vunpack.c.h.bf16 %v4137
    %v4146 = vunpack.c.h.bf16 %v4138
    %v4147 = vpack.c.bf16 %v3962, %v3961
    %4148 = vmatprep.subr.bf16.mxu0 %v1692
    %4149 = vmatpush1.bf16.msra.mxu0 %v1691
    %4150 = vmatprep.subr.bf16.mxu0 %v1696
    %4151 = vmatpush1.bf16.msra.mxu0 %v1695
    %4152 = vmatprep.subr.bf16.mxu0 %v1700
    %4153 = vmatpush1.bf16.msra.mxu0 %v1699
    %4154 = vmatprep.subr.bf16.mxu0 %v1704
    %4155 = vmatpush1.bf16.msra.mxu0 %v1703
    %4156 = vmatprep.subr.bf16.mxu0 %v1708
    %4157 = vmatpush1.bf16.msra.mxu0 %v1707
    %4158 = vmatprep.subr.bf16.mxu0 %v1712
    %4159 = vmatpush1.bf16.msra.mxu0 %v1711
    %4160 = vmatprep.subr.bf16.mxu0 %v1716
    %4161 = vmatpush1.bf16.msra.mxu0 %v1715
    %4162 = vmatprep.subr.bf16.mxu0 %v1720
    %4163 = vmatpush1.bf16.msra.mxu0 %v1719
    %4164 = vmatprep.subr.bf16.mxu0 0
    %4165 = vmatpush1.bf16.msra.mxu0 0
    %4166 = vmatprep.subr.bf16.mxu0 0
    %4167 = vmatpush1.bf16.msra.mxu0 0
    %4168 = vmatprep.subr.bf16.mxu0 0
    %4169 = vmatpush1.bf16.msra.mxu0 0
    %4170 = vmatprep.subr.bf16.mxu0 0
    %4171 = vmatpush1.bf16.msra.mxu0 0
    %4172 = vmatprep.subr.bf16.mxu0 0
    %4173 = vmatpush1.bf16.msra.mxu0 0
    %4174 = vmatprep.subr.bf16.mxu0 0
    %4175 = vmatpush1.bf16.msra.mxu0 0
    %4176 = vmatprep.subr.bf16.mxu0 0
    %4177 = vmatpush1.bf16.msra.mxu0 0
    %4178 = vmatprep.subr.bf16.mxu0 0
    %4179 = vmatpush1.bf16.msra.mxu0 0
    %4180 = vmatprep.mubr.bf16.mxu0 0
    %4181 = vmatmul.mubr.bf16.gmra.mrb[0].mxu0 %v4147
    %v4182 = vpop.f32.mrb[0].mxu0
    %v4183 = vadd.f32 0.0, %v4182
    %v4184 = vpop.f32.mrb[0].mxu0
    %v4185 = vadd.f32 0.0, %v4184
    %v4186 = vpop.f32.mrb[0].mxu0
    %v4187 = vadd.f32 0.0, %v4186
    %v4188 = vpop.f32.mrb[0].mxu0
    %v4189 = vadd.f32 0.0, %v4188
    %4190 = vdwg.mxu0
    %4191 = vmatprep.subr.bf16.mxu0 %v1694
    %4192 = vmatpush1.bf16.msra.mxu0 %v1693
    %4193 = vmatprep.subr.bf16.mxu0 %v1698
    %4194 = vmatpush1.bf16.msra.mxu0 %v1697
    %4195 = vmatprep.subr.bf16.mxu0 %v1702
    %4196 = vmatpush1.bf16.msra.mxu0 %v1701
    %4197 = vmatprep.subr.bf16.mxu0 %v1706
    %4198 = vmatpush1.bf16.msra.mxu0 %v1705
    %4199 = vmatprep.subr.bf16.mxu0 %v1710
    %4200 = vmatpush1.bf16.msra.mxu0 %v1709
    %4201 = vmatprep.subr.bf16.mxu0 %v1714
    %4202 = vmatpush1.bf16.msra.mxu0 %v1713
    %4203 = vmatprep.subr.bf16.mxu0 %v1718
    %4204 = vmatpush1.bf16.msra.mxu0 %v1717
    %4205 = vmatprep.subr.bf16.mxu0 %v1722
    %4206 = vmatpush1.bf16.msra.mxu0 %v1721
    %4207 = vmatprep.subr.bf16.mxu0 0
    %4208 = vmatpush1.bf16.msra.mxu0 0
    %4209 = vmatprep.subr.bf16.mxu0 0
    %4210 = vmatpush1.bf16.msra.mxu0 0
    %4211 = vmatprep.subr.bf16.mxu0 0
    %4212 = vmatpush1.bf16.msra.mxu0 0
    %4213 = vmatprep.subr.bf16.mxu0 0
    %4214 = vmatpush1.bf16.msra.mxu0 0
    %4215 = vmatprep.subr.bf16.mxu0 0
    %4216 = vmatpush1.bf16.msra.mxu0 0
    %4217 = vmatprep.subr.bf16.mxu0 0
    %4218 = vmatpush1.bf16.msra.mxu0 0
    %4219 = vmatprep.subr.bf16.mxu0 0
    %4220 = vmatpush1.bf16.msra.mxu0 0
    %4221 = vmatprep.subr.bf16.mxu0 0
    %4222 = vmatpush1.bf16.msra.mxu0 0
    %4223 = vmatprep.mubr.bf16.mxu0 0
    %4224 = vmatmul.mubr.bf16.gmra.mrb[0].mxu0 %v4147
    %v4225 = vpop.f32.mrb[0].mxu0
    %v4226 = vadd.f32 0.0, %v4225
    %v4227 = vpop.f32.mrb[0].mxu0
    %v4228 = vadd.f32 0.0, %v4227
    %v4229 = vpop.f32.mrb[0].mxu0
    %v4230 = vadd.f32 0.0, %v4229
    %v4231 = vpop.f32.mrb[0].mxu0
    %v4232 = vadd.f32 0.0, %v4231
    %4233 = vdwg.mxu0
    %v4234 = vadd.f32 %v4139, %v4183
    %v4235 = vadd.f32 %v4140, %v4185
    %v4236 = vadd.f32 %v4141, %v4226
    %v4237 = vadd.f32 %v4142, %v4228
    %v4238 = vadd.f32 %v4143, %v4187
    %v4239 = vadd.f32 %v4144, %v4189
    %v4240 = vadd.f32 %v4145, %v4230
    %v4241 = vadd.f32 %v4146, %v4232
    %v4242 = vxor.u32 %v4234, 2147483648
    %v4243 = vxor.u32 %v4238, 2147483648
    %v4244 = vmul.f32 %v4242, 1.442695
    %v4245 = vpow.pop %v4244
    %v4246 = vmul.f32 %v4243, 1.442695
    %v4247 = vpow.pop %v4246
    %v4248 = vadd.f32 %v4245, 1.0
    %v4249 = vadd.f32 %v4247, 1.0
    %v4250 = vrcp.pop %v4248
    %v4251 = vmul.f32 1.0, %v4250
    %v4252 = vrcp.pop %v4249
    %v4253 = vmul.f32 1.0, %v4252
    %v4254 = vxor.u32 %v4235, 2147483648
    %v4255 = vxor.u32 %v4239, 2147483648
    %v4256 = vmul.f32 %v4254, 1.442695
    %v4257 = vpow.pop %v4256
    %v4258 = vmul.f32 %v4255, 1.442695
    %v4259 = vpow.pop %v4258
    %v4260 = vadd.f32 %v4257, 1.0
    %v4261 = vadd.f32 %v4259, 1.0
    %v4262 = vrcp.pop %v4260
    %v4263 = vmul.f32 1.0, %v4262
    %v4264 = vrcp.pop %v4261
    %v4265 = vmul.f32 1.0, %v4264
    %v4266 = vtanh.pop %v4236
    %v4267 = vtanh.pop %v4240
    %v4268 = vxor.u32 %v4237, 2147483648
    %v4269 = vxor.u32 %v4241, 2147483648
    %v4270 = vmul.f32 %v4268, 1.442695
    %v4271 = vpow.pop %v4270
    %v4272 = vmul.f32 %v4269, 1.442695
    %v4273 = vpow.pop %v4272
    %v4274 = vadd.f32 %v4271, 1.0
    %v4275 = vadd.f32 %v4273, 1.0
    %v4276 = vrcp.pop %v4274
    %v4277 = vmul.f32 1.0, %v4276
    %v4278 = vrcp.pop %v4275
    %v4279 = vmul.f32 1.0, %v4278
    %v4280 = vmul.f32 %v4263, %v3963
    %v4281 = vmul.f32 %v4265, %v3964
    %v4282 = vmul.f32 %v4251, %v4266
    %v4283 = vmul.f32 %v4253, %v4267
    %v4284 = vadd.f32 %v4280, %v4282
    %v4285 = vadd.f32 %v4281, %v4283
    %v4286 = vtanh.pop %v4284
    %v4287 = vtanh.pop %v4285
    %v4288 = vmul.f32 %v4277, %v4286
    %v4289 = vmul.f32 %v4279, %v4287
    %vm4290 = vcmp.gt.s32.totalorder %v1186, 0
    %vm4291 = vcmp.gt.s32.totalorder %v1187, 0
    %v4292 = vsel %vm4290, 1, 0
    %v4293 = vsel %vm4291, 1, 0
    %4294 = vset.pattern.permute.xlu0 0
    %4295 = vperm.xlu0 %4294, %v4292
    %v4296 = vpop.permute.xlu0 %4295
    %4297 = vset.pattern.permute.xlu0 0
    %4298 = vperm.xlu0 %4297, %v4293
    %v4299 = vpop.permute.xlu0 %4298
    %vm4300 = vcmp.eq.s32.totalorder %v4296, 1
    %vm4301 = vcmp.eq.s32.totalorder %v4299, 1
    %v4302 = vsel %vm4300, %v4288, %v3961
    %v4303 = vsel %vm4301, %v4289, %v3962
    %v4304 = vpack.c.bf16 %v4134, %v4133
    %v4305 = vld [vmem:[#allocation12] sm:$0xf]
    %v4306 = vld [vmem:[#allocation12 + $0x4] sm:$0xf]
    %v4307 = vld [vmem:[#allocation12 + $0x8] sm:$0xf]
    %v4308 = vld [vmem:[#allocation12 + $0xc] sm:$0xf]
    %v4309 = vld [vmem:[#allocation12 + $0x10] sm:$0xf]
    %v4310 = vld [vmem:[#allocation12 + $0x14] sm:$0xf]
    %v4311 = vld [vmem:[#allocation12 + $0x18] sm:$0xf]
    %v4312 = vld [vmem:[#allocation12 + $0x1c] sm:$0xf]
    %v4313 = vld [vmem:[#allocation12 + $0x20] sm:$0xf]
    %v4314 = vld [vmem:[#allocation12 + $0x24] sm:$0xf]
    %v4315 = vld [vmem:[#allocation12 + $0x28] sm:$0xf]
    %v4316 = vld [vmem:[#allocation12 + $0x2c] sm:$0xf]
    %v4317 = vld [vmem:[#allocation12 + $0x30] sm:$0xf]
    %v4318 = vld [vmem:[#allocation12 + $0x34] sm:$0xf]
    %v4319 = vld [vmem:[#allocation12 + $0x38] sm:$0xf]
    %v4320 = vld [vmem:[#allocation12 + $0x3c] sm:$0xf]
    %v4321 = vpack.c.bf16 %v4303, %v4302
    %v4322 = vld [vmem:[#allocation13] sm:$0xf]
    %v4323 = vld [vmem:[#allocation13 + $0x4] sm:$0xf]
    %v4324 = vld [vmem:[#allocation13 + $0x8] sm:$0xf]
    %v4325 = vld [vmem:[#allocation13 + $0xc] sm:$0xf]
    %v4326 = vld [vmem:[#allocation13 + $0x10] sm:$0xf]
    %v4327 = vld [vmem:[#allocation13 + $0x14] sm:$0xf]
    %v4328 = vld [vmem:[#allocation13 + $0x18] sm:$0xf]
    %v4329 = vld [vmem:[#allocation13 + $0x1c] sm:$0xf]
    %v4330 = vld [vmem:[#allocation13 + $0x20] sm:$0xf]
    %v4331 = vld [vmem:[#allocation13 + $0x24] sm:$0xf]
    %v4332 = vld [vmem:[#allocation13 + $0x28] sm:$0xf]
    %v4333 = vld [vmem:[#allocation13 + $0x2c] sm:$0xf]
    %v4334 = vld [vmem:[#allocation13 + $0x30] sm:$0xf]
    %v4335 = vld [vmem:[#allocation13 + $0x34] sm:$0xf]
    %v4336 = vld [vmem:[#allocation13 + $0x38] sm:$0xf]
    %v4337 = vld [vmem:[#allocation13 + $0x3c] sm:$0xf]
    %v4354 = vunpack.c.l.b16 %v4322
    %v4355 = vunpack.c.l.b16 %v4323
    %v4356 = vunpack.c.l.b16 %v4324
    %v4357 = vunpack.c.l.b16 %v4325
    %v4358 = vunpack.c.l.b16 %v4326
    %v4359 = vunpack.c.l.b16 %v4327
    %v4360 = vunpack.c.l.b16 %v4328
    %v4361 = vunpack.c.l.b16 %v4329
    %v4362 = vunpack.c.l.b16 %v4330
    %v4363 = vunpack.c.l.b16 %v4331
    %v4364 = vunpack.c.l.b16 %v4332
    %v4365 = vunpack.c.l.b16 %v4333
    %v4366 = vunpack.c.l.b16 %v4334
    %v4367 = vunpack.c.l.b16 %v4335
    %v4368 = vunpack.c.l.b16 %v4336
    %v4369 = vunpack.c.l.b16 %v4337
    %v4370 = vpack.c.b16 %v4355, %v4354
    %v4371 = vpack.c.b16 %v4357, %v4356
    %v4372 = vpack.c.b16 %v4359, %v4358
    %v4373 = vpack.c.b16 %v4361, %v4360
    %v4374 = vpack.c.b16 %v4363, %v4362
    %v4375 = vpack.c.b16 %v4365, %v4364
    %v4376 = vpack.c.b16 %v4367, %v4366
    %v4377 = vpack.c.b16 %v4369, %v4368
    %4386 = vmatprep.subr.bf16.mxu0 0
    %4387 = vmatpush1.bf16.msra.mxu0 %v4370
    %4388 = vmatprep.subr.bf16.mxu0 0
    %4389 = vmatpush1.bf16.msra.mxu0 %v4371
    %4390 = vmatprep.subr.bf16.mxu0 0
    %4391 = vmatpush1.bf16.msra.mxu0 %v4372
    %4392 = vmatprep.subr.bf16.mxu0 0
    %4393 = vmatpush1.bf16.msra.mxu0 %v4373
    %4394 = vmatprep.subr.bf16.mxu0 0
    %4395 = vmatpush1.bf16.msra.mxu0 %v4374
    %4396 = vmatprep.subr.bf16.mxu0 0
    %4397 = vmatpush1.bf16.msra.mxu0 %v4375
    %4398 = vmatprep.subr.bf16.mxu0 0
    %4399 = vmatpush1.bf16.msra.mxu0 %v4376
    %4400 = vmatprep.subr.bf16.mxu0 0
    %4401 = vmatpush1.bf16.msra.mxu0 %v4377
    %4402 = vmatprep.subr.bf16.mxu0 0
    %4403 = vmatpush1.bf16.msra.mxu0 0
    %4404 = vmatprep.subr.bf16.mxu0 0
    %4405 = vmatpush1.bf16.msra.mxu0 0
    %4406 = vmatprep.subr.bf16.mxu0 0
    %4407 = vmatpush1.bf16.msra.mxu0 0
    %4408 = vmatprep.subr.bf16.mxu0 0
    %4409 = vmatpush1.bf16.msra.mxu0 0
    %4410 = vmatprep.subr.bf16.mxu0 0
    %4411 = vmatpush1.bf16.msra.mxu0 0
    %4412 = vmatprep.subr.bf16.mxu0 0
    %4413 = vmatpush1.bf16.msra.mxu0 0
    %4414 = vmatprep.subr.bf16.mxu0 0
    %4415 = vmatpush1.bf16.msra.mxu0 0
    %4416 = vmatprep.subr.bf16.mxu0 0
    %4417 = vmatpush1.bf16.msra.mxu0 0
    %4418 = vmatprep.mubr.bf16.mxu0 0
    %4419 = vmatmul.mubr.bf16.gmra.mrb[0].mxu0 %v4321
    %v4420 = vpop.f32.mrb[0].mxu0
    %v4421 = vadd.f32 0.0, %v4420
    %v4422 = vpop.f32.mrb[0].mxu0
    %v4423 = vpop.f32.mrb[0].mxu0
    %v4424 = vadd.f32 0.0, %v4423
    %v4425 = vpop.f32.mrb[0].mxu0
    %4426 = vdwg.mxu0
    %v4443 = vunpack.c.l.b16 %v4305
    %v4444 = vunpack.c.l.b16 %v4306
    %v4445 = vunpack.c.l.b16 %v4307
    %v4446 = vunpack.c.l.b16 %v4308
    %v4447 = vunpack.c.l.b16 %v4309
    %v4448 = vunpack.c.l.b16 %v4310
    %v4449 = vunpack.c.l.b16 %v4311
    %v4450 = vunpack.c.l.b16 %v4312
    %v4451 = vunpack.c.l.b16 %v4313
    %v4452 = vunpack.c.l.b16 %v4314
    %v4453 = vunpack.c.l.b16 %v4315
    %v4454 = vunpack.c.l.b16 %v4316
    %v4455 = vunpack.c.l.b16 %v4317
    %v4456 = vunpack.c.l.b16 %v4318
    %v4457 = vunpack.c.l.b16 %v4319
    %v4458 = vunpack.c.l.b16 %v4320
    %v4459 = vpack.c.b16 %v4444, %v4443
    %v4460 = vpack.c.b16 %v4446, %v4445
    %v4461 = vpack.c.b16 %v4448, %v4447
    %v4462 = vpack.c.b16 %v4450, %v4449
    %v4463 = vpack.c.b16 %v4452, %v4451
    %v4464 = vpack.c.b16 %v4454, %v4453
    %v4465 = vpack.c.b16 %v4456, %v4455
    %v4466 = vpack.c.b16 %v4458, %v4457
    %4475 = vmatprep.subr.bf16.mxu0 0
    %4476 = vmatpush1.bf16.msra.mxu0 %v4459
    %4477 = vmatprep.subr.bf16.mxu0 0
    %4478 = vmatpush1.bf16.msra.mxu0 %v4460
    %4479 = vmatprep.subr.bf16.mxu0 0
    %4480 = vmatpush1.bf16.msra.mxu0 %v4461
    %4481 = vmatprep.subr.bf16.mxu0 0
    %4482 = vmatpush1.bf16.msra.mxu0 %v4462
    %4483 = vmatprep.subr.bf16.mxu0 0
    %4484 = vmatpush1.bf16.msra.mxu0 %v4463
    %4485 = vmatprep.subr.bf16.mxu0 0
    %4486 = vmatpush1.bf16.msra.mxu0 %v4464
    %4487 = vmatprep.subr.bf16.mxu0 0
    %4488 = vmatpush1.bf16.msra.mxu0 %v4465
    %4489 = vmatprep.subr.bf16.mxu0 0
    %4490 = vmatpush1.bf16.msra.mxu0 %v4466
    %4491 = vmatprep.subr.bf16.mxu0 0
    %4492 = vmatpush1.bf16.msra.mxu0 0
    %4493 = vmatprep.subr.bf16.mxu0 0
    %4494 = vmatpush1.bf16.msra.mxu0 0
    %4495 = vmatprep.subr.bf16.mxu0 0
    %4496 = vmatpush1.bf16.msra.mxu0 0
    %4497 = vmatprep.subr.bf16.mxu0 0
    %4498 = vmatpush1.bf16.msra.mxu0 0
    %4499 = vmatprep.subr.bf16.mxu0 0
    %4500 = vmatpush1.bf16.msra.mxu0 0
    %4501 = vmatprep.subr.bf16.mxu0 0
    %4502 = vmatpush1.bf16.msra.mxu0 0
    %4503 = vmatprep.subr.bf16.mxu0 0
    %4504 = vmatpush1.bf16.msra.mxu0 0
    %4505 = vmatprep.subr.bf16.mxu0 0
    %4506 = vmatpush1.bf16.msra.mxu0 0
    %4507 = vmatprep.mubr.bf16.mxu0 0
    %4508 = vmatmul.mubr.bf16.gmra.mrb[0].mxu0 %v4304
    %v4509 = vpop.f32.mrb[0].mxu0
    %v4510 = vadd.f32 %v4421, %v4509
    %v4511 = vpop.f32.mrb[0].mxu0
    %v4512 = vpop.f32.mrb[0].mxu0
    %v4513 = vadd.f32 %v4424, %v4512
    %v4514 = vpop.f32.mrb[0].mxu0
    %4515 = vdwg.mxu0
    %v4516 = vld [vmem:[%s8] sm:$0x1]
    %v4518 = vlaneseq
    %v4519 = vshrl.u32 %v4518, 7
    %v4520 = vsub.s32 0, %v4519
    %v4521 = vrot.slane %v4516, %v4520
    %v4523 = vadd.f32 %v4510, %v4521
    %v4524 = vadd.f32 %v4513, %v4521
    %4525 = vst [vmem:[#allocation15] sm:$0xff] %v4523
    %4526 = vst [vmem:[#allocation15 + $0x8] sm:$0xff] %v4524
    // Predicated region
    $region62: #{tpu_custom_call.1} parent=1 // pred_check
      _
    $region63: #{tpu_custom_call.1} parent=1 // pred_check_branch
      %4528 = sbr.rel (0) target = $region65
    $region64: #{tpu_custom_call.1} parent=1 // pred_region
      %s4530 = ssub.s32 256, 256
      %4531 = vsyncadd [#allocation6], %s4530
      %s4532 = sshll.u32 [#allocation15], 4
      %s4533 = int_to_ptr.vmem [resolvable:$true] %s4532
      %4538 = dma.vmem_to_hbm [thread:$0]  %s4533, 256, %s9, [#allocation6], 128, 128, 8
    $region65: #{tpu_custom_call.1} parent=1 // pred_fallthru
      _
    // Predicated region
    $region66: #{tpu_custom_call.1} parent=1 // pred_check
      _
    $region67: #{tpu_custom_call.1} parent=1 // pred_check_branch
      %4540 = sbr.rel (0) target = $region69
    $region68: #{tpu_custom_call.1} parent=1 // pred_region
      %4541 = dma.done [#allocation6], 256
    $region69: #{tpu_custom_call.1} parent=1 // pred_fallthru
      _
    %4542 = vsyncpa [#allocation5], 1
    %4543 = vsyncpa [#allocation8], 1
    %4544 = vsyncpa [#allocation11], 1
    %4545 = vsyncpa [#allocation14], 1
    %4546 = vsyncpa [#allocation6], 1

</llo_original>
